<compile_context>
chip_gen: v6e
topology: v6e:2x2x1
jax: 0.10.0
libtpu: 0.0.40
codegen_flags: <defaults>
</compile_context>

<pallas_src>
import functools

import jax
import jax.numpy as jnp
from jax.experimental import pallas as pl
from jax.experimental.pallas import tpu as pltpu


def _round_up(v, m):
    return (v + m - 1) // m * m


# --------------------------------------------------------------------------
# Kernel 1: per row-tile i, accumulate (A_hat @ X) over K, then finalize
#           HW2 = ReLU(AX @ W1 + b1) @ W2   (emitted as bf16)
# --------------------------------------------------------------------------
def _layer1_kernel(a_ref, x_ref, w1_ref, b1_ref, w2_ref, hw2_ref, acc_ref):
    k = pl.program_id(1)
    tk = a_ref.shape[1]

    @pl.when(k == 0)
    def _():
        acc_ref[...] = jnp.zeros_like(acc_ref)

    # X is VMEM-resident (constant block index); slice the K chunk in-kernel.
    kk = pl.multiple_of(k * tk, tk)
    x_blk = x_ref[pl.ds(kk, tk), :]                               # (tk, F) bf16
    acc_ref[...] += jnp.dot(a_ref[...], x_blk,
                            preferred_element_type=jnp.float32)   # (tm, F) f32

    @pl.when(k == pl.num_programs(1) - 1)
    def _():
        ax = acc_ref[...]                                                     # (tm, F)
        h = jnp.dot(ax, w1_ref[...],
                    preferred_element_type=jnp.float32) + b1_ref[...]         # (tm, HID)
        h = jnp.maximum(h, 0.0)                                               # ReLU
        # TODO(synk): dropout(p=0.5) is identity in eval mode; a training-mode path
        # would use pltpu.prng_seed / pltpu.prng_random_bits here.
        hw2_ref[...] = jnp.dot(h, w2_ref[...],
                               preferred_element_type=jnp.float32
                               ).astype(hw2_ref.dtype)                        # (tm, C) bf16


# --------------------------------------------------------------------------
# Kernel 2: per row-tile i, accumulate (A_hat @ HW2) over K, then finalize
#           out = log_softmax(acc + b2, axis=1)
# --------------------------------------------------------------------------
def _layer2_kernel(a_ref, hw2_ref, b2_ref, out_ref, acc_ref):
    k = pl.program_id(1)
    tk = a_ref.shape[1]

    @pl.when(k == 0)
    def _():
        acc_ref[...] = jnp.zeros_like(acc_ref)

    kk = pl.multiple_of(k * tk, tk)
    hw2_blk = hw2_ref[pl.ds(kk, tk), :]                           # (tk, C) bf16, no per-step cast
    acc_ref[...] += jnp.dot(a_ref[...], hw2_blk,
                            preferred_element_type=jnp.float32)   # (tm, C) f32

    @pl.when(k == pl.num_programs(1) - 1)
    def _():
        z = acc_ref[...] + b2_ref[...]                            # (tm, C)
        m = jnp.max(z, axis=1, keepdims=True)
        s = z - m
        lse = jnp.log(jnp.sum(jnp.exp(s), axis=1, keepdims=True))
        out_ref[...] = s - lse


def _build_norm_adj_padded(edge_index, num_nodes, rows_pad, cols_pad, dtype):
    """D^{-1/2}(A + I)D^{-1/2}, built directly at padded shape in the stream dtype.

    Single fused scatter into a zero-padded array: no separate O(N^2) cast/pad pass.
    Padded rows AND columns are exactly zero (layer-2 correctness relies on zero
    padded columns of A nullifying the nonzero padded rows of HW2).
    """
    src = edge_index[0]
    dst = edge_index[1]
    loop = jnp.arange(num_nodes, dtype=edge_index.dtype)
    src = jnp.concatenate([src, loop])
    dst = jnp.concatenate([dst, loop])
    deg = jnp.zeros((num_nodes,), jnp.float32).at[dst].add(1.0)   # in-degree incl. self loop
    dinv = jax.lax.rsqrt(deg)                                     # deg >= 1 (self loop)
    vals = (dinv[dst] * dinv[src]).astype(dtype)
    return jnp.zeros((rows_pad, cols_pad), dtype).at[dst, src].add(vals)


def gcn_forward(x, edge_index, w1, b1, w2, b2, *, tm=256, tk=4096,
                vmem_limit_bytes=48 * 1024 * 1024):
    """Eval-mode forward of GCNCustom. x: [N, F], edge_index: [2, E] (src, dst)."""
    n, f = x.shape
    hid = w1.shape[1]
    c = w2.shape[1]

    # Row tile: multiple of 8 sublanes, kept <= 512 so the epilogue's (tm, HID)/(tm, C)
    # f32 intermediates stay inside the vreg file. K tile: multiple of 128 lanes; this
    # is the axis to grow (on v5e/v6e, tk up to 8192 is fine with 128 MiB VMEM).
    tm = min(tm, _round_up(n, 8))
    tk = min(tk, _round_up(n, 128))
    assert tm % 8 == 0 and tk % 128 == 0 and tm <= 512

    # Independent per-axis padding: < tm extra rows, < tk extra cols (no lcm blowup).
    rows_pad = _round_up(n, tm)
    cols_pad = _round_up(n, tk)
    grid = (rows_pad // tm, cols_pad // tk)

    # A_hat built once, already padded and in the (bf16) stream dtype.
    a_p = _build_norm_adj_padded(edge_index, n, rows_pad, cols_pad, jnp.bfloat16)
    # TODO(synk): fp8 (v7x) / int8+scale (v5e/v6e) A_hat stream; block-sparse K-axis
    # via PrefetchScalarGridSpec for real (sparse) graphs.

    x_p = jnp.pad(x.astype(jnp.bfloat16), ((0, cols_pad - n), (0, 0)))
    w1 = w1.astype(jnp.float32)
    w2 = w2.astype(jnp.float32)
    b1 = jnp.reshape(b1, (1, hid)).astype(jnp.float32)
    b2 = jnp.reshape(b2, (1, c)).astype(jnp.float32)

    cparams = pltpu.CompilerParams(
        dimension_semantics=("parallel", "arbitrary"),
        vmem_limit_bytes=vmem_limit_bytes)

    a_bytes = rows_pad * cols_pad * 2   # bf16 A_hat stream dominates both kernels

    # ---- layer 1: HW2 = ReLU((A @ X) @ W1 + b1) @ W2, emitted as bf16 ----
    cost1 = pl.CostEstimate(
        flops=2 * rows_pad * cols_pad * f + 2 * rows_pad * f * hid + 2 * rows_pad * hid * c,
        transcendentals=0,
        bytes_accessed=a_bytes + cols_pad * f * 2 + rows_pad * c * 2)
    hw2 = pl.pallas_call(
        _layer1_kernel,
        out_shape=jax.ShapeDtypeStruct((rows_pad, c), jnp.bfloat16),
        grid=grid,
        in_specs=[
            pl.BlockSpec((tm, tk), lambda i, k: (i, k)),        # A_hat row/K tile (the stream)
            pl.BlockSpec((cols_pad, f), lambda i, k: (0, 0)),   # X: VMEM-resident full block
            pl.BlockSpec((f, hid), lambda i, k: (0, 0)),        # W1 resident
            pl.BlockSpec((1, hid), lambda i, k: (0, 0)),        # b1
            pl.BlockSpec((hid, c), lambda i, k: (0, 0)),        # W2
        ],
        out_specs=pl.BlockSpec((tm, c), lambda i, k: (i, 0)),
        scratch_shapes=[pltpu.VMEM((tm, f), jnp.float32)],
        compiler_params=cparams,
        cost_estimate=cost1,
    )(a_p, x_p, w1, b1, w2)

    # Kernel 2 consumes HW2 along A's column axis: match its length to cols_pad.
    # (Cheap O(N*C) fixup; padded A columns are zero so extra HW2 rows never matter.)
    if cols_pad > rows_pad:
        hw2 = jnp.pad(hw2, ((0, cols_pad - rows_pad), (0, 0)))
    elif cols_pad < rows_pad:
        hw2 = hw2[:cols_pad]

    # ---- layer 2: out = log_softmax(A @ HW2 + b2, axis=1) ----
    cost2 = pl.CostEstimate(
        flops=2 * rows_pad * cols_pad * c,
        transcendentals=rows_pad * c,
        bytes_accessed=a_bytes + cols_pad * c * 2 + rows_pad * c * 4)
    out_p = pl.pallas_call(
        _layer2_kernel,
        out_shape=jax.ShapeDtypeStruct((rows_pad, c), jnp.float32),
        grid=grid,
        in_specs=[
            pl.BlockSpec((tm, tk), lambda i, k: (i, k)),        # A_hat row/K tile (the stream)
            pl.BlockSpec((cols_pad, c), lambda i, k: (0, 0)),   # HW2: VMEM-resident (bf16)
            pl.BlockSpec((1, c), lambda i, k: (0, 0)),          # b2
        ],
        out_specs=pl.BlockSpec((tm, c), lambda i, k: (i, 0)),
        scratch_shapes=[pltpu.VMEM((tm, c), jnp.float32)],
        compiler_params=cparams,
        cost_estimate=cost2,
    )(a_p, hw2, b2)

    return out_p[:n]


if __name__ == "__main__":
    # Small synthetic graph consistent with the module's forward
    # (num_features=8, hidden_channels=16, num_classes=4).
    N = 512           # number of nodes
    F_IN = 8          # num_features
    HID = 16          # hidden_channels
    C = 4             # num_classes
    E = 2048          # number of edges

    key = jax.random.PRNGKey(0)
    k_x, k_e1, k_e2, k_w1, k_b1, k_w2, k_b2 = jax.random.split(key, 7)

    x = jax.random.normal(k_x, (N, F_IN), jnp.float32)
    edge_index = jnp.stack(
        [
            jax.random.randint(k_e1, (E,), 0, N),
            jax.random.randint(k_e2, (E,), 0, N),
        ],
        axis=0,
    ).astype(jnp.int32)

    # Linear-style parameters: W [in, out], b [out].
    w1 = jax.random.normal(k_w1, (F_IN, HID), jnp.float32) * (1.0 / jnp.sqrt(F_IN))
    b1 = jax.random.normal(k_b1, (HID,), jnp.float32) * 0.01
    w2 = jax.random.normal(k_w2, (HID, C), jnp.float32) * (1.0 / jnp.sqrt(HID))
    b2 = jax.random.normal(k_b2, (C,), jnp.float32) * 0.01

    # Use the (generation-safe) large-tile defaults; they clamp to the graph size.
    fwd = jax.jit(lambda x_, ei_: gcn_forward(x_, ei_, w1, b1, w2, b2))
    out = jax.block_until_ready(fwd(x, edge_index))

    # Plain-XLA f32 reference (same normalization / reassociation).
    a_hat_f32 = _build_norm_adj_padded(edge_index, N, N, N, jnp.float32)
    h_ref = jnp.maximum((a_hat_f32 @ x) @ w1 + b1, 0.0)
    z_ref = a_hat_f32 @ (h_ref @ w2) + b2
    ref = jax.nn.log_softmax(z_ref, axis=1)

    assert out.shape == (N, C)
    assert jnp.allclose(jnp.sum(jnp.exp(out), axis=1), 1.0, atol=1e-4)
    max_err = jnp.max(jnp.abs(out - ref))
    assert max_err < 5e-2, f"max abs error vs f32 reference: {max_err}"

    print("KERNEL_OK")
</pallas_src>

<mosaic_0001>
module attributes {stable_mosaic.version = 11 : i64} {
  func.func private @main(%arg0: i32) attributes {dimension_semantics = [#tpu.dimension_semantics<core_parallel>], iteration_bounds = array<i64: 2>, tpu.core_type = #tpu.core_type<sc_scalar_subcore>, window_params = []} {
    return
  }
}

module attributes {stable_mosaic.version = 11 : i64} {
  func.func private @main(%arg0: i32) attributes {dimension_semantics = [#tpu.dimension_semantics<core_parallel>], iteration_bounds = array<i64: 2>, tpu.core_type = #tpu.core_type<sc_scalar_subcore>, window_params = []} {
    return
  }
}

module attributes {stable_mosaic.version = 11 : i64} {
  func.func @_layer1_kernel(%arg0: i32, %arg1: i32, %arg2: memref<256x512xbf16, #tpu.memory_space<vmem>>, %arg3: memref<512x8xbf16, #tpu.memory_space<vmem>>, %arg4: memref<8x16xf32, #tpu.memory_space<vmem>>, %arg5: memref<1x16xf32, #tpu.memory_space<vmem>>, %arg6: memref<16x4xf32, #tpu.memory_space<vmem>>, %arg7: memref<256x4xbf16, #tpu.memory_space<vmem>>, %arg8: memref<256x8xf32, #tpu.memory_space<vmem>>) attributes {dimension_semantics = [#tpu.dimension_semantics<parallel>, #tpu.dimension_semantics<arbitrary>], iteration_bounds = array<i64: 2, 1>, scalar_prefetch = 0 : i64, scratch_operands = 1 : i64, tpu.core_type = #tpu.core_type<tc>, window_params = [{transform_indices = @transform_0, window_bounds = array<i64: 256, 512>}, {pipeline_mode = #tpu.pipeline_mode<synchronous>, transform_indices = @transform_1, window_bounds = array<i64: 512, 8>}, {pipeline_mode = #tpu.pipeline_mode<synchronous>, transform_indices = @transform_2, window_bounds = array<i64: 8, 16>}, {pipeline_mode = #tpu.pipeline_mode<synchronous>, transform_indices = @transform_3, window_bounds = array<i64: 1, 16>}, {pipeline_mode = #tpu.pipeline_mode<synchronous>, transform_indices = @transform_4, window_bounds = array<i64: 16, 4>}, {transform_indices = @transform_5, window_bounds = array<i64: 256, 4>}]} {
    %c0_i32 = arith.constant 0 : i32
    %0 = arith.cmpi eq, %arg1, %c0_i32 : i32
    %1 = arith.extui %0 : i1 to i32
    %c0_i32_0 = arith.constant 0 : i32
    %2 = arith.cmpi ne, %1, %c0_i32_0 : i32
    scf.if %2 {
      %cst_9 = arith.constant 0.000000e+00 : f32
      %15 = vector.broadcast %cst_9 : f32 to vector<256x8xf32>
      %c0_10 = arith.constant 0 : index
      %c0_11 = arith.constant 0 : index
      %16 = vector.load %arg8[%c0_10, %c0_11] : memref<256x8xf32, #tpu.memory_space<vmem>>, vector<256x8xf32>
      tpu.vector_store %arg8[%c0_10, %c0_11], %15 {strides = array<i32>} : memref<256x8xf32, #tpu.memory_space<vmem>>, vector<256x8xf32>,
    } else {
    }
    %c512_i32 = arith.constant 512 : i32
    %3 = arith.muli %arg1, %c512_i32 : i32
    %4 = tpu.assume_multiple %3, 512 : i32
    %5 = arith.index_cast %4 : i32 to index
    %c0 = arith.constant 0 : index
    %6 = vector.load %arg3[%5, %c0] : memref<512x8xbf16, #tpu.memory_space<vmem>>, vector<512x8xbf16>
    %c0_1 = arith.constant 0 : index
    %c0_2 = arith.constant 0 : index
    %7 = vector.load %arg8[%c0_1, %c0_2] : memref<256x8xf32, #tpu.memory_space<vmem>>, vector<256x8xf32>
    %c0_3 = arith.constant 0 : index
    %c0_4 = arith.constant 0 : index
    %8 = vector.load %arg2[%c0_3, %c0_4] : memref<256x512xbf16, #tpu.memory_space<vmem>>, vector<256x512xbf16>
    %cst = arith.constant dense<0.000000e+00> : vector<256x8xf32>
    %9 = tpu.matmul %8, %6, %cst {dimension_numbers = #tpu.dot_dimension_numbers<[1], [0], [0], [1], [0, 0, 1, 1], [], []>} : vector<256x512xbf16>, vector<512x8xbf16>, vector<256x8xf32> -> vector<256x8xf32>
    %10 = arith.addf %7, %9 : vector<256x8xf32>
    %c0_5 = arith.constant 0 : index
    %c0_6 = arith.constant 0 : index
    %11 = vector.load %arg8[%c0_5, %c0_6] : memref<256x8xf32, #tpu.memory_space<vmem>>, vector<256x8xf32>
    tpu.vector_store %arg8[%c0_5, %c0_6], %10 {strides = array<i32>} : memref<256x8xf32, #tpu.memory_space<vmem>>, vector<256x8xf32>,
    %c0_i32_7 = arith.constant 0 : i32
    %12 = arith.cmpi eq, %arg1, %c0_i32_7 : i32
    %13 = arith.extui %12 : i1 to i32
    %c0_i32_8 = arith.constant 0 : i32
    %14 = arith.cmpi ne, %13, %c0_i32_8 : i32
    scf.if %14 {
      %c0_9 = arith.constant 0 : index
      %c0_10 = arith.constant 0 : index
      %15 = vector.load %arg8[%c0_9, %c0_10] : memref<256x8xf32, #tpu.memory_space<vmem>>, vector<256x8xf32>
      %c0_11 = arith.constant 0 : index
      %c0_12 = arith.constant 0 : index
      %16 = vector.load %arg4[%c0_11, %c0_12] : memref<8x16xf32, #tpu.memory_space<vmem>>, vector<8x16xf32>
      %cst_13 = arith.constant dense<0.000000e+00> : vector<256x16xf32>
      %17 = tpu.matmul %15, %16, %cst_13 {dimension_numbers = #tpu.dot_dimension_numbers<[1], [0], [0], [1], [0, 0, 1, 1], [], []>} : vector<256x8xf32>, vector<8x16xf32>, vector<256x16xf32> -> vector<256x16xf32>
      %c0_14 = arith.constant 0 : index
      %c0_15 = arith.constant 0 : index
      %18 = vector.load %arg5[%c0_14, %c0_15] : memref<1x16xf32, #tpu.memory_space<vmem>>, vector<1x16xf32>
      %19 = vector.broadcast %18 : vector<1x16xf32> to vector<256x16xf32>
      %20 = arith.addf %17, %19 : vector<256x16xf32>
      %cst_16 = arith.constant 0.000000e+00 : f32
      %21 = vector.broadcast %cst_16 : f32 to vector<256x16xf32>
      %22 = arith.maximumf %20, %21 : vector<256x16xf32>
      %c0_17 = arith.constant 0 : index
      %c0_18 = arith.constant 0 : index
      %23 = vector.load %arg6[%c0_17, %c0_18] : memref<16x4xf32, #tpu.memory_space<vmem>>, vector<16x4xf32>
      %cst_19 = arith.constant dense<0.000000e+00> : vector<256x4xf32>
      %24 = tpu.matmul %22, %23, %cst_19 {dimension_numbers = #tpu.dot_dimension_numbers<[1], [0], [0], [1], [0, 0, 1, 1], [], []>} : vector<256x16xf32>, vector<16x4xf32>, vector<256x4xf32> -> vector<256x4xf32>
      %25 = arith.truncf %24 : vector<256x4xf32> to vector<256x4xbf16>
      %c0_20 = arith.constant 0 : index
      %c0_21 = arith.constant 0 : index
      %26 = vector.load %arg7[%c0_20, %c0_21] : memref<256x4xbf16, #tpu.memory_space<vmem>>, vector<256x4xbf16>
      tpu.vector_store %arg7[%c0_20, %c0_21], %25 {strides = array<i32>} : memref<256x4xbf16, #tpu.memory_space<vmem>>, vector<256x4xbf16>,
    } else {
    }
    return
  }
  func.func @transform_0(%arg0: i32, %arg1: i32) -> (i32, i32) {
    %c0_i32 = arith.constant 0 : i32
    return %arg0, %arg1 : i32, i32
  }
  func.func @transform_1(%arg0: i32, %arg1: i32) -> (i32, i32) {
    %c0_i32 = arith.constant 0 : i32
    %c0_i32_0 = arith.constant 0 : i32
    %c0_i32_1 = arith.constant 0 : i32
    return %c0_i32, %c0_i32_0 : i32, i32
  }
  func.func @transform_2(%arg0: i32, %arg1: i32) -> (i32, i32) {
    %c0_i32 = arith.constant 0 : i32
    %c0_i32_0 = arith.constant 0 : i32
    %c0_i32_1 = arith.constant 0 : i32
    return %c0_i32, %c0_i32_0 : i32, i32
  }
  func.func @transform_3(%arg0: i32, %arg1: i32) -> (i32, i32) {
    %c0_i32 = arith.constant 0 : i32
    %c0_i32_0 = arith.constant 0 : i32
    %c0_i32_1 = arith.constant 0 : i32
    return %c0_i32, %c0_i32_0 : i32, i32
  }
  func.func @transform_4(%arg0: i32, %arg1: i32) -> (i32, i32) {
    %c0_i32 = arith.constant 0 : i32
    %c0_i32_0 = arith.constant 0 : i32
    %c0_i32_1 = arith.constant 0 : i32
    return %c0_i32, %c0_i32_0 : i32, i32
  }
  func.func @transform_5(%arg0: i32, %arg1: i32) -> (i32, i32) {
    %c0_i32 = arith.constant 0 : i32
    %c0_i32_0 = arith.constant 0 : i32
    return %arg0, %c0_i32 : i32, i32
  }
}

module attributes {stable_mosaic.version = 11 : i64} {
  func.func @_layer2_kernel(%arg0: i32, %arg1: i32, %arg2: memref<256x512xbf16, #tpu.memory_space<vmem>>, %arg3: memref<512x4xbf16, #tpu.memory_space<vmem>>, %arg4: memref<1x4xf32, #tpu.memory_space<vmem>>, %arg5: memref<256x4xf32, #tpu.memory_space<vmem>>, %arg6: memref<256x4xf32, #tpu.memory_space<vmem>>) attributes {dimension_semantics = [#tpu.dimension_semantics<parallel>, #tpu.dimension_semantics<arbitrary>], iteration_bounds = array<i64: 2, 1>, scalar_prefetch = 0 : i64, scratch_operands = 1 : i64, tpu.core_type = #tpu.core_type<tc>, window_params = [{transform_indices = @transform_0, window_bounds = array<i64: 256, 512>}, {pipeline_mode = #tpu.pipeline_mode<synchronous>, transform_indices = @transform_1, window_bounds = array<i64: 512, 4>}, {pipeline_mode = #tpu.pipeline_mode<synchronous>, transform_indices = @transform_2, window_bounds = array<i64: 1, 4>}, {transform_indices = @transform_3, window_bounds = array<i64: 256, 4>}]} {
    %c0_i32 = arith.constant 0 : i32
    %0 = arith.cmpi eq, %arg1, %c0_i32 : i32
    %1 = arith.extui %0 : i1 to i32
    %c0_i32_0 = arith.constant 0 : i32
    %2 = arith.cmpi ne, %1, %c0_i32_0 : i32
    scf.if %2 {
      %cst_9 = arith.constant 0.000000e+00 : f32
      %15 = vector.broadcast %cst_9 : f32 to vector<256x4xf32>
      %c0_10 = arith.constant 0 : index
      %c0_11 = arith.constant 0 : index
      %16 = vector.load %arg6[%c0_10, %c0_11] : memref<256x4xf32, #tpu.memory_space<vmem>>, vector<256x4xf32>
      tpu.vector_store %arg6[%c0_10, %c0_11], %15 {strides = array<i32>} : memref<256x4xf32, #tpu.memory_space<vmem>>, vector<256x4xf32>,
    } else {
    }
    %c512_i32 = arith.constant 512 : i32
    %3 = arith.muli %arg1, %c512_i32 : i32
    %4 = tpu.assume_multiple %3, 512 : i32
    %5 = arith.index_cast %4 : i32 to index
    %c0 = arith.constant 0 : index
    %6 = vector.load %arg3[%5, %c0] : memref<512x4xbf16, #tpu.memory_space<vmem>>, vector<512x4xbf16>
    %c0_1 = arith.constant 0 : index
    %c0_2 = arith.constant 0 : index
    %7 = vector.load %arg6[%c0_1, %c0_2] : memref<256x4xf32, #tpu.memory_space<vmem>>, vector<256x4xf32>
    %c0_3 = arith.constant 0 : index
    %c0_4 = arith.constant 0 : index
    %8 = vector.load %arg2[%c0_3, %c0_4] : memref<256x512xbf16, #tpu.memory_space<vmem>>, vector<256x512xbf16>
    %cst = arith.constant dense<0.000000e+00> : vector<256x4xf32>
    %9 = tpu.matmul %8, %6, %cst {dimension_numbers = #tpu.dot_dimension_numbers<[1], [0], [0], [1], [0, 0, 1, 1], [], []>} : vector<256x512xbf16>, vector<512x4xbf16>, vector<256x4xf32> -> vector<256x4xf32>
    %10 = arith.addf %7, %9 : vector<256x4xf32>
    %c0_5 = arith.constant 0 : index
    %c0_6 = arith.constant 0 : index
    %11 = vector.load %arg6[%c0_5, %c0_6] : memref<256x4xf32, #tpu.memory_space<vmem>>, vector<256x4xf32>
    tpu.vector_store %arg6[%c0_5, %c0_6], %10 {strides = array<i32>} : memref<256x4xf32, #tpu.memory_space<vmem>>, vector<256x4xf32>,
    %c0_i32_7 = arith.constant 0 : i32
    %12 = arith.cmpi eq, %arg1, %c0_i32_7 : i32
    %13 = arith.extui %12 : i1 to i32
    %c0_i32_8 = arith.constant 0 : i32
    %14 = arith.cmpi ne, %13, %c0_i32_8 : i32
    scf.if %14 {
      %c0_9 = arith.constant 0 : index
      %c0_10 = arith.constant 0 : index
      %15 = vector.load %arg6[%c0_9, %c0_10] : memref<256x4xf32, #tpu.memory_space<vmem>>, vector<256x4xf32>
      %c0_11 = arith.constant 0 : index
      %c0_12 = arith.constant 0 : index
      %16 = vector.load %arg4[%c0_11, %c0_12] : memref<1x4xf32, #tpu.memory_space<vmem>>, vector<1x4xf32>
      %17 = vector.broadcast %16 : vector<1x4xf32> to vector<256x4xf32>
      %18 = arith.addf %15, %17 : vector<256x4xf32>
      %cst_13 = arith.constant dense<0xFF800000> : vector<256xf32>
      %19 = vector.multi_reduction <maximumf>, %18, %cst_13 [1] : vector<256x4xf32> to vector<256xf32>
      %20 = vector.shape_cast %19 : vector<256xf32> to vector<256x1xf32>
      %21 = vector.broadcast %20 : vector<256x1xf32> to vector<256x4xf32>
      %22 = arith.subf %18, %21 : vector<256x4xf32>
      %23 = math.exp %22 : vector<256x4xf32>
      %cst_14 = arith.constant dense<0.000000e+00> : vector<256xf32>
      %24 = vector.multi_reduction <add>, %23, %cst_14 [1] : vector<256x4xf32> to vector<256xf32>
      %25 = vector.shape_cast %24 : vector<256xf32> to vector<256x1xf32>
      %26 = math.log %25 : vector<256x1xf32>
      %27 = vector.broadcast %26 : vector<256x1xf32> to vector<256x4xf32>
      %28 = arith.subf %22, %27 : vector<256x4xf32>
      %c0_15 = arith.constant 0 : index
      %c0_16 = arith.constant 0 : index
      %29 = vector.load %arg5[%c0_15, %c0_16] : memref<256x4xf32, #tpu.memory_space<vmem>>, vector<256x4xf32>
      tpu.vector_store %arg5[%c0_15, %c0_16], %28 {strides = array<i32>} : memref<256x4xf32, #tpu.memory_space<vmem>>, vector<256x4xf32>,
    } else {
    }
    return
  }
  func.func @transform_0(%arg0: i32, %arg1: i32) -> (i32, i32) {
    %c0_i32 = arith.constant 0 : i32
    return %arg0, %arg1 : i32, i32
  }
  func.func @transform_1(%arg0: i32, %arg1: i32) -> (i32, i32) {
    %c0_i32 = arith.constant 0 : i32
    %c0_i32_0 = arith.constant 0 : i32
    %c0_i32_1 = arith.constant 0 : i32
    return %c0_i32, %c0_i32_0 : i32, i32
  }
  func.func @transform_2(%arg0: i32, %arg1: i32) -> (i32, i32) {
    %c0_i32 = arith.constant 0 : i32
    %c0_i32_0 = arith.constant 0 : i32
    %c0_i32_1 = arith.constant 0 : i32
    return %c0_i32, %c0_i32_0 : i32, i32
  }
  func.func @transform_3(%arg0: i32, %arg1: i32) -> (i32, i32) {
    %c0_i32 = arith.constant 0 : i32
    %c0_i32_0 = arith.constant 0 : i32
    return %arg0, %c0_i32 : i32, i32
  }
}

</mosaic_0001>

<llo_original>
// kernel: _lambda_.2
$region0: #{_lambda_.2}
  #allocation0 [shape = 'u32[]', space=smem, size = 0x4, offset = 0x4, fixed_abs, tag = 'smem constant byte address 0x4 - core index']
  #allocation1 [shape = 'u32[144,128]{1,0:T(1,128)}', space=vmem, size = 0x12000, scoped, tag = 'internal scratch']
  #allocation2 [shape = 'f32[256,8]{1,0:T(8,128)}', space=vmem, size = 0x20000, scoped, tag = 'scratch operand']
  %s0 = inlined_call_operand.vmem [shape: bf16[512,512], index: 0, kind: input, shape index: {}]
  %s1 = inlined_call_operand.vmem [shape: bf16[512,8], index: 1, kind: input, shape index: {}]
  %s2 = inlined_call_operand.vmem [shape: f32[8,16], index: 2, kind: input, shape index: {}]
  %s3 = inlined_call_operand.vmem [shape: f32[1,16], index: 3, kind: input, shape index: {}]
  %s4 = inlined_call_operand.vmem [shape: f32[16,4], index: 4, kind: input, shape index: {}]
  %s5 = inlined_call_operand.vmem [shape: bf16[512,4], index: 5, kind: output, shape index: {}]
  %s6 = sld [smem:[#allocation0]]
  $region61: #{_lambda_.2} parent=0
    _
  %s8 = ssub.s32 1, %s6
  %s9 = scalar_select 0, %s8, %s6
  loop: start=0, step=1, limit=4
  $region2: #{_lambda_.2} parent=0 // loop_pre_header
    _
  $region3: #{_lambda_.2} parent=0 // loop_header
    %s11 = sphi 0, %s15
    %p12 = scmp.ge.s32.totalorder %s11, 4
    %s18 = sphi 0, %s30
    %s19 = sphi 0, %s26
    %s20 = sphi 0, %s18
    %s21 = sphi 0, %s19
    %s22 = sphi 0, %s20
    %s23 = sphi 0, %s21
    %s35 = sphi 0, %s37
    %s38 = sphi 0, %s35
    %s39 = sphi 0, %s38
    %s55 = sphi 0, %s39
    %s59 = sphi 0, %s59
    %s61 = sphi 0, %s59
    %s62 = sphi 0, %s61
    %s76 = sphi 0, %s62
    %s80 = sphi 0, %s80
    %s82 = sphi 0, %s80
    %s83 = sphi 0, %s82
    %s97 = sphi 0, %s83
    %s101 = sphi 0, %s101
    %s103 = sphi 0, %s101
    %s104 = sphi 0, %s103
    %s118 = sphi 0, %s104
    %s122 = sphi 0, %s122
    %s124 = sphi 0, %s122
    %s125 = sphi 0, %s124
    %s139 = sphi 0, %s125
    %s145 = sphi 0, %s147
    %s148 = sphi 0, %s145
    %s149 = sphi 0, %s148
    %s165 = sphi 0, %s149
  $region4: #{_lambda_.2} parent=0 // loop_header_branch
    %14 = sbr.rel (%p12) target = $region8
  $region5: #{_lambda_.2} parent=0 // loop_body
    %s16 = ssub.s32 %s11, 1
    %s17 = ssub.s32 %s11, 2
    %s24 = sadd.s32 1, %s19
    %p25 = scmp.ge.s32.totalorder %s24, 1
    %s26 = scalar_select %p25, 0, %s24
    %s27 = sadd.s32 1, %s18
    %s28 = scalar_select %p25, %s27, %s18
    %p29 = scmp.ge.s32.totalorder %s28, 2
    %s30 = scalar_select %p29, 0, %s28
    %s31 = ssub.s32 %s18, %s30
    %s32 = ssub.s32 %s19, %s26
    %s33 = sor.u32 %s31, %s32
    %p34 = scmp.eq.s32.totalorder %s33, 0
    %s36 = sadd.s32 %s35, 1
    %s37 = scalar_select %p34, %s35, %s36
    %p40 = pneg %p34
    %p41 = scmp.eq.s32.totalorder %s11, 1
    %p42 = por %p40, %p41
    %p43 = scmp.ne.s32.totalorder %s35, %s38
    %p44 = scmp.eq.s32.totalorder %s11, 0
    %p45 = por %p43, %p44
    %p46 = scmp.ne.s32.totalorder %s35, %s38
    %p47 = scmp.eq.s32.totalorder %s16, 1
    %p48 = por %p46, %p47
    %p49 = scmp.ne.s32.totalorder %s38, %s39
    %p50 = scmp.eq.s32.totalorder %s16, 0
    %p51 = por %p49, %p50
    %p52 = scmp.ne.s32.totalorder %s38, %s39
    %p53 = scmp.eq.s32.totalorder %s17, 1
    %p54 = por %p52, %p53
    %p56 = scmp.ne.s32.totalorder %s39, %s55
    %p57 = scmp.eq.s32.totalorder %s17, 0
    %p58 = por %p56, %p57
    %s60 = sadd.s32 %s59, 1
    %p63 = scmp.eq.s32.totalorder %s11, 1
    %p64 = scmp.ne.s32.totalorder %s59, %s61
    %p65 = scmp.eq.s32.totalorder %s11, 0
    %p66 = por %p64, %p65
    %p67 = scmp.ne.s32.totalorder %s59, %s61
    %p68 = scmp.eq.s32.totalorder %s16, 1
    %p69 = por %p67, %p68
    %p70 = scmp.ne.s32.totalorder %s61, %s62
    %p71 = scmp.eq.s32.totalorder %s16, 0
    %p72 = por %p70, %p71
    %p73 = scmp.ne.s32.totalorder %s61, %s62
    %p74 = scmp.eq.s32.totalorder %s17, 1
    %p75 = por %p73, %p74
    %p77 = scmp.ne.s32.totalorder %s62, %s76
    %p78 = scmp.eq.s32.totalorder %s17, 0
    %p79 = por %p77, %p78
    %s81 = sadd.s32 %s80, 1
    %p84 = scmp.eq.s32.totalorder %s11, 1
    %p85 = scmp.ne.s32.totalorder %s80, %s82
    %p86 = scmp.eq.s32.totalorder %s11, 0
    %p87 = por %p85, %p86
    %p88 = scmp.ne.s32.totalorder %s80, %s82
    %p89 = scmp.eq.s32.totalorder %s16, 1
    %p90 = por %p88, %p89
    %p91 = scmp.ne.s32.totalorder %s82, %s83
    %p92 = scmp.eq.s32.totalorder %s16, 0
    %p93 = por %p91, %p92
    %p94 = scmp.ne.s32.totalorder %s82, %s83
    %p95 = scmp.eq.s32.totalorder %s17, 1
    %p96 = por %p94, %p95
    %p98 = scmp.ne.s32.totalorder %s83, %s97
    %p99 = scmp.eq.s32.totalorder %s17, 0
    %p100 = por %p98, %p99
    %s102 = sadd.s32 %s101, 1
    %p105 = scmp.eq.s32.totalorder %s11, 1
    %p106 = scmp.ne.s32.totalorder %s101, %s103
    %p107 = scmp.eq.s32.totalorder %s11, 0
    %p108 = por %p106, %p107
    %p109 = scmp.ne.s32.totalorder %s101, %s103
    %p110 = scmp.eq.s32.totalorder %s16, 1
    %p111 = por %p109, %p110
    %p112 = scmp.ne.s32.totalorder %s103, %s104
    %p113 = scmp.eq.s32.totalorder %s16, 0
    %p114 = por %p112, %p113
    %p115 = scmp.ne.s32.totalorder %s103, %s104
    %p116 = scmp.eq.s32.totalorder %s17, 1
    %p117 = por %p115, %p116
    %p119 = scmp.ne.s32.totalorder %s104, %s118
    %p120 = scmp.eq.s32.totalorder %s17, 0
    %p121 = por %p119, %p120
    %s123 = sadd.s32 %s122, 1
    %p126 = scmp.eq.s32.totalorder %s11, 1
    %p127 = scmp.ne.s32.totalorder %s122, %s124
    %p128 = scmp.eq.s32.totalorder %s11, 0
    %p129 = por %p127, %p128
    %p130 = scmp.ne.s32.totalorder %s122, %s124
    %p131 = scmp.eq.s32.totalorder %s16, 1
    %p132 = por %p130, %p131
    %p133 = scmp.ne.s32.totalorder %s124, %s125
    %p134 = scmp.eq.s32.totalorder %s16, 0
    %p135 = por %p133, %p134
    %p136 = scmp.ne.s32.totalorder %s124, %s125
    %p137 = scmp.eq.s32.totalorder %s17, 1
    %p138 = por %p136, %p137
    %p140 = scmp.ne.s32.totalorder %s125, %s139
    %p141 = scmp.eq.s32.totalorder %s17, 0
    %p142 = por %p140, %p141
    %s143 = ssub.s32 %s18, %s30
    %p144 = scmp.eq.s32.totalorder %s143, 0
    %s146 = sadd.s32 %s145, 1
    %s147 = scalar_select %p144, %s145, %s146
    %p150 = pneg %p144
    %p151 = scmp.eq.s32.totalorder %s11, 1
    %p152 = por %p150, %p151
    %p153 = scmp.ne.s32.totalorder %s145, %s148
    %p154 = scmp.eq.s32.totalorder %s11, 0
    %p155 = por %p153, %p154
    %p156 = scmp.ne.s32.totalorder %s145, %s148
    %p157 = scmp.eq.s32.totalorder %s16, 1
    %p158 = por %p156, %p157
    %p159 = scmp.ne.s32.totalorder %s148, %s149
    %p160 = scmp.eq.s32.totalorder %s16, 0
    %p161 = por %p159, %p160
    %p162 = scmp.ne.s32.totalorder %s148, %s149
    %p163 = scmp.eq.s32.totalorder %s17, 1
    %p164 = por %p162, %p163
    %p166 = scmp.ne.s32.totalorder %s149, %s165
    %p167 = scmp.eq.s32.totalorder %s17, 0
    %p168 = por %p166, %p167
    %p169 = scmp.le.s32.totalorder 1, %s11
    %p170 = scmp.lt.s32.totalorder %s11, 3
    %p171 = pnand %p169, %p170
    %p172 = pneg %p171
    // Predicated region
    $region9: #{_lambda_.2} parent=5 // pred_check
      _
    $region10: #{_lambda_.2} parent=5 // pred_check_branch
      %174 = sbr.rel (%p171) target = $region12
    $region11: #{_lambda_.2} parent=5 // pred_region
      %s175 = ssub.s32 %s11, 1
      // Predicated region
      $region13: #{_lambda_.2} parent=11 // pred_check
        %p176 = pneg %p72
      $region14: #{_lambda_.2} parent=11 // pred_check_branch
        %178 = sbr.rel (%p176) target = $region16
      $region15: #{_lambda_.2} parent=11 // pred_region
        _
      $region16: #{_lambda_.2} parent=11 // pred_fallthru
        _
      // Predicated region
      $region17: #{_lambda_.2} parent=11 // pred_check
        %p179 = pneg %p93
      $region18: #{_lambda_.2} parent=11 // pred_check_branch
        %181 = sbr.rel (%p179) target = $region20
      $region19: #{_lambda_.2} parent=11 // pred_region
        _
      $region20: #{_lambda_.2} parent=11 // pred_fallthru
        _
      // Predicated region
      $region21: #{_lambda_.2} parent=11 // pred_check
        %p182 = pneg %p114
      $region22: #{_lambda_.2} parent=11 // pred_check_branch
        %184 = sbr.rel (%p182) target = $region24
      $region23: #{_lambda_.2} parent=11 // pred_region
        _
      $region24: #{_lambda_.2} parent=11 // pred_fallthru
        _
      // Predicated region
      $region25: #{_lambda_.2} parent=11 // pred_check
        %p185 = pneg %p135
      $region26: #{_lambda_.2} parent=11 // pred_check_branch
        %187 = sbr.rel (%p185) target = $region28
      $region27: #{_lambda_.2} parent=11 // pred_region
        _
      $region28: #{_lambda_.2} parent=11 // pred_fallthru
        _
    $region12: #{_lambda_.2} parent=5 // pred_fallthru
      _
    %p188 = scmp.lt.s32.totalorder %s11, 2
    // Predicated region
    $region29: #{_lambda_.2} parent=5 // pred_check
      %p189 = pneg %p188
    $region30: #{_lambda_.2} parent=5 // pred_check_branch
      %191 = sbr.rel (%p189) target = $region32
    $region31: #{_lambda_.2} parent=5 // pred_region
      // Predicated region
      $region33: #{_lambda_.2} parent=31 // pred_check
        %p192 = pneg %p45
      $region34: #{_lambda_.2} parent=31 // pred_check_branch
        %194 = sbr.rel (%p192) target = $region36
      $region35: #{_lambda_.2} parent=31 // pred_region
        %s195 = smul.u32 32, %s18
        %s196 = smul.u32 4, %s19
        %p197 = scmp.lt.s32.totalorder %s195, 63
        %s198 = scalar_select %p197, %s195, 63
        %p199 = scmp.lt.s32.totalorder %s196, 3
        %s200 = scalar_select %p199, %s196, 3
        %s201 = smul.addr %s198, 4
        %s202 = sadd.s32 %s200, %s201
        %s203 = smul.addr %s202, 4
        %s204 = scalar_lea.vmem %s0, %s203
        %s205 = smul.u32 32, %s18
        %s206 = smul.u32 4, %s19
      $region36: #{_lambda_.2} parent=31 // pred_fallthru
        _
    $region32: #{_lambda_.2} parent=5 // pred_fallthru
      _
    %p207 = scmp.le.s32.totalorder 1, %s11
    %p208 = scmp.lt.s32.totalorder %s11, 3
    %p209 = pnand %p207, %p208
    %p210 = pneg %p209
    // Predicated region
    $region37: #{_lambda_.2} parent=5 // pred_check
      _
    $region38: #{_lambda_.2} parent=5 // pred_check_branch
      %212 = sbr.rel (%p209) target = $region40
    $region39: #{_lambda_.2} parent=5 // pred_region
      %s213 = ssub.s32 %s11, 1
      %s214 = smul.u32 32, %s20
      %s215 = smul.u32 4, %s21
      %p216 = scmp.lt.s32.totalorder %s214, 63
      %s217 = scalar_select %p216, %s214, 63
      %p218 = scmp.lt.s32.totalorder %s215, 3
      %s219 = scalar_select %p218, %s215, 3
      %s220 = smul.addr %s217, 4
      %s221 = sadd.s32 %s219, %s220
      %s222 = smul.addr %s221, 4
      %s223 = scalar_lea.vmem %s0, %s222
      %p224 = pneg %p51
      %p225 = pneg %p48
      %p226 = pneg %p72
      %p227 = pneg %p69
      %p228 = pneg %p93
      %p229 = pneg %p90
      %p230 = pneg %p114
      %p231 = pneg %p111
      %p232 = pneg %p135
      %p233 = pneg %p132
      %p234 = pneg %p161
      %p235 = pneg %p158
      %s236 = smul.u32 32, %s20
      %p237 = scmp.lt.s32.totalorder %s236, 63
      %s238 = scalar_select %p237, %s236, 63
      %s239 = smul.addr %s238, 4
      %s240 = scalar_lea.vmem %s5, %s239
      %s241 = smul.u32 32, %s20
      %s242 = smul.u32 4, %s21
      %p243 = scmp.lt.s32.totalorder %s241, 63
      %s244 = scalar_select %p243, %s241, 63
      %p245 = scmp.lt.s32.totalorder %s242, 3
      %s246 = scalar_select %p245, %s242, 3
      %s247 = smul.addr %s244, 4
      %s248 = sadd.s32 %s246, %s247
      %s249 = smul.addr %s248, 4
      %s250 = scalar_lea.vmem %s0, %s249
      %s251 = smul.u32 32, %s20
      %s252 = smul.u32 4, %s21
      %s253 = smul.u32 32, %s20
      %p254 = scmp.lt.s32.totalorder %s253, 63
      %s255 = scalar_select %p254, %s253, 63
      %s256 = smul.addr %s255, 4
      %s257 = scalar_lea.vmem %s5, %s256
      %s258 = smul.u32 32, %s20
      %p260 = scmp.eq.s32.totalorder %s21, 0
      // Predicated region
      $region41: #{_lambda_.2} parent=39 // pred_check
        %p261 = pneg %p260
      $region42: #{_lambda_.2} parent=39 // pred_check_branch
        %263 = sbr.rel (%p261) target = $region44
      $region43: #{_lambda_.2} parent=39 // pred_region
        %vm264 = vcmask 64512
        %265 = vst.msk [vmem:[#allocation2] sm:$0xff] %vm264, 0.0
        %266 = vst.msk [vmem:[#allocation2 + $0x8] sm:$0xff] %vm264, 0.0
        %267 = vst.msk [vmem:[#allocation2 + $0x10] sm:$0xff] %vm264, 0.0
        %268 = vst.msk [vmem:[#allocation2 + $0x18] sm:$0xff] %vm264, 0.0
        %269 = vst.msk [vmem:[#allocation2 + $0x20] sm:$0xff] %vm264, 0.0
        %270 = vst.msk [vmem:[#allocation2 + $0x28] sm:$0xff] %vm264, 0.0
        %271 = vst.msk [vmem:[#allocation2 + $0x30] sm:$0xff] %vm264, 0.0
        %272 = vst.msk [vmem:[#allocation2 + $0x38] sm:$0xff] %vm264, 0.0
        %273 = vst.msk [vmem:[#allocation2 + $0x40] sm:$0xff] %vm264, 0.0
        %274 = vst.msk [vmem:[#allocation2 + $0x48] sm:$0xff] %vm264, 0.0
        %275 = vst.msk [vmem:[#allocation2 + $0x50] sm:$0xff] %vm264, 0.0
        %276 = vst.msk [vmem:[#allocation2 + $0x58] sm:$0xff] %vm264, 0.0
        %277 = vst.msk [vmem:[#allocation2 + $0x60] sm:$0xff] %vm264, 0.0
        %278 = vst.msk [vmem:[#allocation2 + $0x68] sm:$0xff] %vm264, 0.0
        %279 = vst.msk [vmem:[#allocation2 + $0x70] sm:$0xff] %vm264, 0.0
        %280 = vst.msk [vmem:[#allocation2 + $0x78] sm:$0xff] %vm264, 0.0
        %281 = vst.msk [vmem:[#allocation2 + $0x80] sm:$0xff] %vm264, 0.0
        %282 = vst.msk [vmem:[#allocation2 + $0x88] sm:$0xff] %vm264, 0.0
        %283 = vst.msk [vmem:[#allocation2 + $0x90] sm:$0xff] %vm264, 0.0
        %284 = vst.msk [vmem:[#allocation2 + $0x98] sm:$0xff] %vm264, 0.0
        %285 = vst.msk [vmem:[#allocation2 + $0xa0] sm:$0xff] %vm264, 0.0
        %286 = vst.msk [vmem:[#allocation2 + $0xa8] sm:$0xff] %vm264, 0.0
        %287 = vst.msk [vmem:[#allocation2 + $0xb0] sm:$0xff] %vm264, 0.0
        %288 = vst.msk [vmem:[#allocation2 + $0xb8] sm:$0xff] %vm264, 0.0
        %289 = vst.msk [vmem:[#allocation2 + $0xc0] sm:$0xff] %vm264, 0.0
        %290 = vst.msk [vmem:[#allocation2 + $0xc8] sm:$0xff] %vm264, 0.0
        %291 = vst.msk [vmem:[#allocation2 + $0xd0] sm:$0xff] %vm264, 0.0
        %292 = vst.msk [vmem:[#allocation2 + $0xd8] sm:$0xff] %vm264, 0.0
        %293 = vst.msk [vmem:[#allocation2 + $0xe0] sm:$0xff] %vm264, 0.0
        %294 = vst.msk [vmem:[#allocation2 + $0xe8] sm:$0xff] %vm264, 0.0
        %295 = vst.msk [vmem:[#allocation2 + $0xf0] sm:$0xff] %vm264, 0.0
        %296 = vst.msk [vmem:[#allocation2 + $0xf8] sm:$0xff] %vm264, 0.0
      $region44: #{_lambda_.2} parent=39 // pred_fallthru
        _
      %s297 = smul.u32 %s21, 512
      %s298 = sshra.s32 %s297, 3
      %s299 = sand.u32 %s297, 7
      %s300 = smul.addr %s298, 4
      %s301 = scalar_lea.vmem %s1, %s300
      %v302 = vld [vmem:[%s301] sm:$0xf]
      %v303 = vld [vmem:[%s301 + $0x4] sm:$0xf]
      %v304 = vld [vmem:[%s301 + $0x8] sm:$0xf]
      %v305 = vld [vmem:[%s301 + $0xc] sm:$0xf]
      %v306 = vld [vmem:[%s301 + $0x10] sm:$0xf]
      %v307 = vld [vmem:[%s301 + $0x14] sm:$0xf]
      %v308 = vld [vmem:[%s301 + $0x18] sm:$0xf]
      %v309 = vld [vmem:[%s301 + $0x1c] sm:$0xf]
      %v310 = vld [vmem:[%s301 + $0x20] sm:$0xf]
      %v311 = vld [vmem:[%s301 + $0x24] sm:$0xf]
      %v312 = vld [vmem:[%s301 + $0x28] sm:$0xf]
      %v313 = vld [vmem:[%s301 + $0x2c] sm:$0xf]
      %v314 = vld [vmem:[%s301 + $0x30] sm:$0xf]
      %v315 = vld [vmem:[%s301 + $0x34] sm:$0xf]
      %v316 = vld [vmem:[%s301 + $0x38] sm:$0xf]
      %v317 = vld [vmem:[%s301 + $0x3c] sm:$0xf]
      %v318 = vld [vmem:[%s301 + $0x40] sm:$0xf]
      %v319 = vld [vmem:[%s301 + $0x44] sm:$0xf]
      %v320 = vld [vmem:[%s301 + $0x48] sm:$0xf]
      %v321 = vld [vmem:[%s301 + $0x4c] sm:$0xf]
      %v322 = vld [vmem:[%s301 + $0x50] sm:$0xf]
      %v323 = vld [vmem:[%s301 + $0x54] sm:$0xf]
      %v324 = vld [vmem:[%s301 + $0x58] sm:$0xf]
      %v325 = vld [vmem:[%s301 + $0x5c] sm:$0xf]
      %v326 = vld [vmem:[%s301 + $0x60] sm:$0xf]
      %v327 = vld [vmem:[%s301 + $0x64] sm:$0xf]
      %v328 = vld [vmem:[%s301 + $0x68] sm:$0xf]
      %v329 = vld [vmem:[%s301 + $0x6c] sm:$0xf]
      %v330 = vld [vmem:[%s301 + $0x70] sm:$0xf]
      %v331 = vld [vmem:[%s301 + $0x74] sm:$0xf]
      %v332 = vld [vmem:[%s301 + $0x78] sm:$0xf]
      %v333 = vld [vmem:[%s301 + $0x7c] sm:$0xf]
      %v334 = vld [vmem:[%s301 + $0x80] sm:$0xf]
      %v335 = vld [vmem:[%s301 + $0x84] sm:$0xf]
      %v336 = vld [vmem:[%s301 + $0x88] sm:$0xf]
      %v337 = vld [vmem:[%s301 + $0x8c] sm:$0xf]
      %v338 = vld [vmem:[%s301 + $0x90] sm:$0xf]
      %v339 = vld [vmem:[%s301 + $0x94] sm:$0xf]
      %v340 = vld [vmem:[%s301 + $0x98] sm:$0xf]
      %v341 = vld [vmem:[%s301 + $0x9c] sm:$0xf]
      %v342 = vld [vmem:[%s301 + $0xa0] sm:$0xf]
      %v343 = vld [vmem:[%s301 + $0xa4] sm:$0xf]
      %v344 = vld [vmem:[%s301 + $0xa8] sm:$0xf]
      %v345 = vld [vmem:[%s301 + $0xac] sm:$0xf]
      %v346 = vld [vmem:[%s301 + $0xb0] sm:$0xf]
      %v347 = vld [vmem:[%s301 + $0xb4] sm:$0xf]
      %v348 = vld [vmem:[%s301 + $0xb8] sm:$0xf]
      %v349 = vld [vmem:[%s301 + $0xbc] sm:$0xf]
      %v350 = vld [vmem:[%s301 + $0xc0] sm:$0xf]
      %v351 = vld [vmem:[%s301 + $0xc4] sm:$0xf]
      %v352 = vld [vmem:[%s301 + $0xc8] sm:$0xf]
      %v353 = vld [vmem:[%s301 + $0xcc] sm:$0xf]
      %v354 = vld [vmem:[%s301 + $0xd0] sm:$0xf]
      %v355 = vld [vmem:[%s301 + $0xd4] sm:$0xf]
      %v356 = vld [vmem:[%s301 + $0xd8] sm:$0xf]
      %v357 = vld [vmem:[%s301 + $0xdc] sm:$0xf]
      %v358 = vld [vmem:[%s301 + $0xe0] sm:$0xf]
      %v359 = vld [vmem:[%s301 + $0xe4] sm:$0xf]
      %v360 = vld [vmem:[%s301 + $0xe8] sm:$0xf]
      %v361 = vld [vmem:[%s301 + $0xec] sm:$0xf]
      %v362 = vld [vmem:[%s301 + $0xf0] sm:$0xf]
      %v363 = vld [vmem:[%s301 + $0xf4] sm:$0xf]
      %v364 = vld [vmem:[%s301 + $0xf8] sm:$0xf]
      %v365 = vld [vmem:[%s301 + $0xfc] sm:$0xf]
      %v366 = vld [vmem:[#allocation2] sm:$0xff]
      %v367 = vld [vmem:[#allocation2 + $0x8] sm:$0xff]
      %v368 = vld [vmem:[#allocation2 + $0x10] sm:$0xff]
      %v369 = vld [vmem:[#allocation2 + $0x18] sm:$0xff]
      %v370 = vld [vmem:[#allocation2 + $0x20] sm:$0xff]
      %v371 = vld [vmem:[#allocation2 + $0x28] sm:$0xff]
      %v372 = vld [vmem:[#allocation2 + $0x30] sm:$0xff]
      %v373 = vld [vmem:[#allocation2 + $0x38] sm:$0xff]
      %v374 = vld [vmem:[#allocation2 + $0x40] sm:$0xff]
      %v375 = vld [vmem:[#allocation2 + $0x48] sm:$0xff]
      %v376 = vld [vmem:[#allocation2 + $0x50] sm:$0xff]
      %v377 = vld [vmem:[#allocation2 + $0x58] sm:$0xff]
      %v378 = vld [vmem:[#allocation2 + $0x60] sm:$0xff]
      %v379 = vld [vmem:[#allocation2 + $0x68] sm:$0xff]
      %v380 = vld [vmem:[#allocation2 + $0x70] sm:$0xff]
      %v381 = vld [vmem:[#allocation2 + $0x78] sm:$0xff]
      %v382 = vld [vmem:[#allocation2 + $0x80] sm:$0xff]
      %v383 = vld [vmem:[#allocation2 + $0x88] sm:$0xff]
      %v384 = vld [vmem:[#allocation2 + $0x90] sm:$0xff]
      %v385 = vld [vmem:[#allocation2 + $0x98] sm:$0xff]
      %v386 = vld [vmem:[#allocation2 + $0xa0] sm:$0xff]
      %v387 = vld [vmem:[#allocation2 + $0xa8] sm:$0xff]
      %v388 = vld [vmem:[#allocation2 + $0xb0] sm:$0xff]
      %v389 = vld [vmem:[#allocation2 + $0xb8] sm:$0xff]
      %v390 = vld [vmem:[#allocation2 + $0xc0] sm:$0xff]
      %v391 = vld [vmem:[#allocation2 + $0xc8] sm:$0xff]
      %v392 = vld [vmem:[#allocation2 + $0xd0] sm:$0xff]
      %v393 = vld [vmem:[#allocation2 + $0xd8] sm:$0xff]
      %v394 = vld [vmem:[#allocation2 + $0xe0] sm:$0xff]
      %v395 = vld [vmem:[#allocation2 + $0xe8] sm:$0xff]
      %v396 = vld [vmem:[#allocation2 + $0xf0] sm:$0xff]
      %v397 = vld [vmem:[#allocation2 + $0xf8] sm:$0xff]
      %v398 = vld [vmem:[%s250] sm:$0xff]
      %v399 = vld [vmem:[%s250 + $0x8] sm:$0xff]
      %v400 = vld [vmem:[%s250 + $0x10] sm:$0xff]
      %v401 = vld [vmem:[%s250 + $0x18] sm:$0xff]
      %v402 = vld [vmem:[%s250 + $0x20] sm:$0xff]
      %v403 = vld [vmem:[%s250 + $0x28] sm:$0xff]
      %v404 = vld [vmem:[%s250 + $0x30] sm:$0xff]
      %v405 = vld [vmem:[%s250 + $0x38] sm:$0xff]
      %v406 = vld [vmem:[%s250 + $0x40] sm:$0xff]
      %v407 = vld [vmem:[%s250 + $0x48] sm:$0xff]
      %v408 = vld [vmem:[%s250 + $0x50] sm:$0xff]
      %v409 = vld [vmem:[%s250 + $0x58] sm:$0xff]
      %v410 = vld [vmem:[%s250 + $0x60] sm:$0xff]
      %v411 = vld [vmem:[%s250 + $0x68] sm:$0xff]
      %v412 = vld [vmem:[%s250 + $0x70] sm:$0xff]
      %v413 = vld [vmem:[%s250 + $0x78] sm:$0xff]
      %v414 = vld [vmem:[%s250 + $0x80] sm:$0xff]
      %v415 = vld [vmem:[%s250 + $0x88] sm:$0xff]
      %v416 = vld [vmem:[%s250 + $0x90] sm:$0xff]
      %v417 = vld [vmem:[%s250 + $0x98] sm:$0xff]
      %v418 = vld [vmem:[%s250 + $0xa0] sm:$0xff]
      %v419 = vld [vmem:[%s250 + $0xa8] sm:$0xff]
      %v420 = vld [vmem:[%s250 + $0xb0] sm:$0xff]
      %v421 = vld [vmem:[%s250 + $0xb8] sm:$0xff]
      %v422 = vld [vmem:[%s250 + $0xc0] sm:$0xff]
      %v423 = vld [vmem:[%s250 + $0xc8] sm:$0xff]
      %v424 = vld [vmem:[%s250 + $0xd0] sm:$0xff]
      %v425 = vld [vmem:[%s250 + $0xd8] sm:$0xff]
      %v426 = vld [vmem:[%s250 + $0xe0] sm:$0xff]
      %v427 = vld [vmem:[%s250 + $0xe8] sm:$0xff]
      %v428 = vld [vmem:[%s250 + $0xf0] sm:$0xff]
      %v429 = vld [vmem:[%s250 + $0xf8] sm:$0xff]
      %v430 = vld [vmem:[%s250 + $0x100] sm:$0xff]
      %v431 = vld [vmem:[%s250 + $0x108] sm:$0xff]
      %v432 = vld [vmem:[%s250 + $0x110] sm:$0xff]
      %v433 = vld [vmem:[%s250 + $0x118] sm:$0xff]
      %v434 = vld [vmem:[%s250 + $0x120] sm:$0xff]
      %v435 = vld [vmem:[%s250 + $0x128] sm:$0xff]
      %v436 = vld [vmem:[%s250 + $0x130] sm:$0xff]
      %v437 = vld [vmem:[%s250 + $0x138] sm:$0xff]
      %v438 = vld [vmem:[%s250 + $0x140] sm:$0xff]
      %v439 = vld [vmem:[%s250 + $0x148] sm:$0xff]
      %v440 = vld [vmem:[%s250 + $0x150] sm:$0xff]
      %v441 = vld [vmem:[%s250 + $0x158] sm:$0xff]
      %v442 = vld [vmem:[%s250 + $0x160] sm:$0xff]
      %v443 = vld [vmem:[%s250 + $0x168] sm:$0xff]
      %v444 = vld [vmem:[%s250 + $0x170] sm:$0xff]
      %v445 = vld [vmem:[%s250 + $0x178] sm:$0xff]
      %v446 = vld [vmem:[%s250 + $0x180] sm:$0xff]
      %v447 = vld [vmem:[%s250 + $0x188] sm:$0xff]
      %v448 = vld [vmem:[%s250 + $0x190] sm:$0xff]
      %v449 = vld [vmem:[%s250 + $0x198] sm:$0xff]
      %v450 = vld [vmem:[%s250 + $0x1a0] sm:$0xff]
      %v451 = vld [vmem:[%s250 + $0x1a8] sm:$0xff]
      %v452 = vld [vmem:[%s250 + $0x1b0] sm:$0xff]
      %v453 = vld [vmem:[%s250 + $0x1b8] sm:$0xff]
      %v454 = vld [vmem:[%s250 + $0x1c0] sm:$0xff]
      %v455 = vld [vmem:[%s250 + $0x1c8] sm:$0xff]
      %v456 = vld [vmem:[%s250 + $0x1d0] sm:$0xff]
      %v457 = vld [vmem:[%s250 + $0x1d8] sm:$0xff]
      %v458 = vld [vmem:[%s250 + $0x1e0] sm:$0xff]
      %v459 = vld [vmem:[%s250 + $0x1e8] sm:$0xff]
      %v460 = vld [vmem:[%s250 + $0x1f0] sm:$0xff]
      %v461 = vld [vmem:[%s250 + $0x1f8] sm:$0xff]
      %v526 = vunpack.c.l.b16 %v398
      %v527 = vunpack.c.h.b16 %v398
      %v528 = vunpack.c.l.b16 %v399
      %v529 = vunpack.c.h.b16 %v399
      %v530 = vunpack.c.l.b16 %v400
      %v531 = vunpack.c.h.b16 %v400
      %v532 = vunpack.c.l.b16 %v401
      %v533 = vunpack.c.h.b16 %v401
      %v534 = vunpack.c.l.b16 %v402
      %v535 = vunpack.c.h.b16 %v402
      %v536 = vunpack.c.l.b16 %v403
      %v537 = vunpack.c.h.b16 %v403
      %v538 = vunpack.c.l.b16 %v404
      %v539 = vunpack.c.h.b16 %v404
      %v540 = vunpack.c.l.b16 %v405
      %v541 = vunpack.c.h.b16 %v405
      %v542 = vunpack.c.l.b16 %v406
      %v543 = vunpack.c.h.b16 %v406
      %v544 = vunpack.c.l.b16 %v407
      %v545 = vunpack.c.h.b16 %v407
      %v546 = vunpack.c.l.b16 %v408
      %v547 = vunpack.c.h.b16 %v408
      %v548 = vunpack.c.l.b16 %v409
      %v549 = vunpack.c.h.b16 %v409
      %v550 = vunpack.c.l.b16 %v410
      %v551 = vunpack.c.h.b16 %v410
      %v552 = vunpack.c.l.b16 %v411
      %v553 = vunpack.c.h.b16 %v411
      %v554 = vunpack.c.l.b16 %v412
      %v555 = vunpack.c.h.b16 %v412
      %v556 = vunpack.c.l.b16 %v413
      %v557 = vunpack.c.h.b16 %v413
      %v558 = vunpack.c.l.b16 %v414
      %v559 = vunpack.c.h.b16 %v414
      %v560 = vunpack.c.l.b16 %v415
      %v561 = vunpack.c.h.b16 %v415
      %v562 = vunpack.c.l.b16 %v416
      %v563 = vunpack.c.h.b16 %v416
      %v564 = vunpack.c.l.b16 %v417
      %v565 = vunpack.c.h.b16 %v417
      %v566 = vunpack.c.l.b16 %v418
      %v567 = vunpack.c.h.b16 %v418
      %v568 = vunpack.c.l.b16 %v419
      %v569 = vunpack.c.h.b16 %v419
      %v570 = vunpack.c.l.b16 %v420
      %v571 = vunpack.c.h.b16 %v420
      %v572 = vunpack.c.l.b16 %v421
      %v573 = vunpack.c.h.b16 %v421
      %v574 = vunpack.c.l.b16 %v422
      %v575 = vunpack.c.h.b16 %v422
      %v576 = vunpack.c.l.b16 %v423
      %v577 = vunpack.c.h.b16 %v423
      %v578 = vunpack.c.l.b16 %v424
      %v579 = vunpack.c.h.b16 %v424
      %v580 = vunpack.c.l.b16 %v425
      %v581 = vunpack.c.h.b16 %v425
      %v582 = vunpack.c.l.b16 %v426
      %v583 = vunpack.c.h.b16 %v426
      %v584 = vunpack.c.l.b16 %v427
      %v585 = vunpack.c.h.b16 %v427
      %v586 = vunpack.c.l.b16 %v428
      %v587 = vunpack.c.h.b16 %v428
      %v588 = vunpack.c.l.b16 %v429
      %v589 = vunpack.c.h.b16 %v429
      %v590 = vunpack.c.l.b16 %v430
      %v591 = vunpack.c.h.b16 %v430
      %v592 = vunpack.c.l.b16 %v431
      %v593 = vunpack.c.h.b16 %v431
      %v594 = vunpack.c.l.b16 %v432
      %v595 = vunpack.c.h.b16 %v432
      %v596 = vunpack.c.l.b16 %v433
      %v597 = vunpack.c.h.b16 %v433
      %v598 = vunpack.c.l.b16 %v434
      %v599 = vunpack.c.h.b16 %v434
      %v600 = vunpack.c.l.b16 %v435
      %v601 = vunpack.c.h.b16 %v435
      %v602 = vunpack.c.l.b16 %v436
      %v603 = vunpack.c.h.b16 %v436
      %v604 = vunpack.c.l.b16 %v437
      %v605 = vunpack.c.h.b16 %v437
      %v606 = vunpack.c.l.b16 %v438
      %v607 = vunpack.c.h.b16 %v438
      %v608 = vunpack.c.l.b16 %v439
      %v609 = vunpack.c.h.b16 %v439
      %v610 = vunpack.c.l.b16 %v440
      %v611 = vunpack.c.h.b16 %v440
      %v612 = vunpack.c.l.b16 %v441
      %v613 = vunpack.c.h.b16 %v441
      %v614 = vunpack.c.l.b16 %v442
      %v615 = vunpack.c.h.b16 %v442
      %v616 = vunpack.c.l.b16 %v443
      %v617 = vunpack.c.h.b16 %v443
      %v618 = vunpack.c.l.b16 %v444
      %v619 = vunpack.c.h.b16 %v444
      %v620 = vunpack.c.l.b16 %v445
      %v621 = vunpack.c.h.b16 %v445
      %v622 = vunpack.c.l.b16 %v446
      %v623 = vunpack.c.h.b16 %v446
      %v624 = vunpack.c.l.b16 %v447
      %v625 = vunpack.c.h.b16 %v447
      %v626 = vunpack.c.l.b16 %v448
      %v627 = vunpack.c.h.b16 %v448
      %v628 = vunpack.c.l.b16 %v449
      %v629 = vunpack.c.h.b16 %v449
      %v630 = vunpack.c.l.b16 %v450
      %v631 = vunpack.c.h.b16 %v450
      %v632 = vunpack.c.l.b16 %v451
      %v633 = vunpack.c.h.b16 %v451
      %v634 = vunpack.c.l.b16 %v452
      %v635 = vunpack.c.h.b16 %v452
      %v636 = vunpack.c.l.b16 %v453
      %v637 = vunpack.c.h.b16 %v453
      %v638 = vunpack.c.l.b16 %v454
      %v639 = vunpack.c.h.b16 %v454
      %v640 = vunpack.c.l.b16 %v455
      %v641 = vunpack.c.h.b16 %v455
      %v642 = vunpack.c.l.b16 %v456
      %v643 = vunpack.c.h.b16 %v456
      %v644 = vunpack.c.l.b16 %v457
      %v645 = vunpack.c.h.b16 %v457
      %v646 = vunpack.c.l.b16 %v458
      %v647 = vunpack.c.h.b16 %v458
      %v648 = vunpack.c.l.b16 %v459
      %v649 = vunpack.c.h.b16 %v459
      %v650 = vunpack.c.l.b16 %v460
      %v651 = vunpack.c.h.b16 %v460
      %v652 = vunpack.c.l.b16 %v461
      %v653 = vunpack.c.h.b16 %v461
      %v654 = vpack.c.b16 %v530, %v526
      %v655 = vpack.c.b16 %v531, %v527
      %v656 = vpack.c.b16 %v532, %v528
      %v657 = vpack.c.b16 %v533, %v529
      %v658 = vpack.c.b16 %v538, %v534
      %v659 = vpack.c.b16 %v539, %v535
      %v660 = vpack.c.b16 %v540, %v536
      %v661 = vpack.c.b16 %v541, %v537
      %v662 = vpack.c.b16 %v546, %v542
      %v663 = vpack.c.b16 %v547, %v543
      %v664 = vpack.c.b16 %v548, %v544
      %v665 = vpack.c.b16 %v549, %v545
      %v666 = vpack.c.b16 %v554, %v550
      %v667 = vpack.c.b16 %v555, %v551
      %v668 = vpack.c.b16 %v556, %v552
      %v669 = vpack.c.b16 %v557, %v553
      %v670 = vpack.c.b16 %v562, %v558
      %v671 = vpack.c.b16 %v563, %v559
      %v672 = vpack.c.b16 %v564, %v560
      %v673 = vpack.c.b16 %v565, %v561
      %v674 = vpack.c.b16 %v570, %v566
      %v675 = vpack.c.b16 %v571, %v567
      %v676 = vpack.c.b16 %v572, %v568
      %v677 = vpack.c.b16 %v573, %v569
      %v678 = vpack.c.b16 %v578, %v574
      %v679 = vpack.c.b16 %v579, %v575
      %v680 = vpack.c.b16 %v580, %v576
      %v681 = vpack.c.b16 %v581, %v577
      %v682 = vpack.c.b16 %v586, %v582
      %v683 = vpack.c.b16 %v587, %v583
      %v684 = vpack.c.b16 %v588, %v584
      %v685 = vpack.c.b16 %v589, %v585
      %v686 = vpack.c.b16 %v594, %v590
      %v687 = vpack.c.b16 %v595, %v591
      %v688 = vpack.c.b16 %v596, %v592
      %v689 = vpack.c.b16 %v597, %v593
      %v690 = vpack.c.b16 %v602, %v598
      %v691 = vpack.c.b16 %v603, %v599
      %v692 = vpack.c.b16 %v604, %v600
      %v693 = vpack.c.b16 %v605, %v601
      %v694 = vpack.c.b16 %v610, %v606
      %v695 = vpack.c.b16 %v611, %v607
      %v696 = vpack.c.b16 %v612, %v608
      %v697 = vpack.c.b16 %v613, %v609
      %v698 = vpack.c.b16 %v618, %v614
      %v699 = vpack.c.b16 %v619, %v615
      %v700 = vpack.c.b16 %v620, %v616
      %v701 = vpack.c.b16 %v621, %v617
      %v702 = vpack.c.b16 %v626, %v622
      %v703 = vpack.c.b16 %v627, %v623
      %v704 = vpack.c.b16 %v628, %v624
      %v705 = vpack.c.b16 %v629, %v625
      %v706 = vpack.c.b16 %v634, %v630
      %v707 = vpack.c.b16 %v635, %v631
      %v708 = vpack.c.b16 %v636, %v632
      %v709 = vpack.c.b16 %v637, %v633
      %v710 = vpack.c.b16 %v642, %v638
      %v711 = vpack.c.b16 %v643, %v639
      %v712 = vpack.c.b16 %v644, %v640
      %v713 = vpack.c.b16 %v645, %v641
      %v714 = vpack.c.b16 %v650, %v646
      %v715 = vpack.c.b16 %v651, %v647
      %v716 = vpack.c.b16 %v652, %v648
      %v717 = vpack.c.b16 %v653, %v649
      %v846 = vunpack.c.l.b16 %v302
      %v847 = vunpack.c.l.b16 %v303
      %v848 = vunpack.c.l.b16 %v304
      %v849 = vunpack.c.l.b16 %v305
      %v850 = vunpack.c.l.b16 %v306
      %v851 = vunpack.c.l.b16 %v307
      %v852 = vunpack.c.l.b16 %v308
      %v853 = vunpack.c.l.b16 %v309
      %v854 = vunpack.c.l.b16 %v310
      %v855 = vunpack.c.l.b16 %v311
      %v856 = vunpack.c.l.b16 %v312
      %v857 = vunpack.c.l.b16 %v313
      %v858 = vunpack.c.l.b16 %v314
      %v859 = vunpack.c.l.b16 %v315
      %v860 = vunpack.c.l.b16 %v316
      %v861 = vunpack.c.l.b16 %v317
      %v862 = vunpack.c.l.b16 %v318
      %v863 = vunpack.c.l.b16 %v319
      %v864 = vunpack.c.l.b16 %v320
      %v865 = vunpack.c.l.b16 %v321
      %v866 = vunpack.c.l.b16 %v322
      %v867 = vunpack.c.l.b16 %v323
      %v868 = vunpack.c.l.b16 %v324
      %v869 = vunpack.c.l.b16 %v325
      %v870 = vunpack.c.l.b16 %v326
      %v871 = vunpack.c.l.b16 %v327
      %v872 = vunpack.c.l.b16 %v328
      %v873 = vunpack.c.l.b16 %v329
      %v874 = vunpack.c.l.b16 %v330
      %v875 = vunpack.c.l.b16 %v331
      %v876 = vunpack.c.l.b16 %v332
      %v877 = vunpack.c.l.b16 %v333
      %v878 = vunpack.c.l.b16 %v334
      %v879 = vunpack.c.l.b16 %v335
      %v880 = vunpack.c.l.b16 %v336
      %v881 = vunpack.c.l.b16 %v337
      %v882 = vunpack.c.l.b16 %v338
      %v883 = vunpack.c.l.b16 %v339
      %v884 = vunpack.c.l.b16 %v340
      %v885 = vunpack.c.l.b16 %v341
      %v886 = vunpack.c.l.b16 %v342
      %v887 = vunpack.c.l.b16 %v343
      %v888 = vunpack.c.l.b16 %v344
      %v889 = vunpack.c.l.b16 %v345
      %v890 = vunpack.c.l.b16 %v346
      %v891 = vunpack.c.l.b16 %v347
      %v892 = vunpack.c.l.b16 %v348
      %v893 = vunpack.c.l.b16 %v349
      %v894 = vunpack.c.l.b16 %v350
      %v895 = vunpack.c.l.b16 %v351
      %v896 = vunpack.c.l.b16 %v352
      %v897 = vunpack.c.l.b16 %v353
      %v898 = vunpack.c.l.b16 %v354
      %v899 = vunpack.c.l.b16 %v355
      %v900 = vunpack.c.l.b16 %v356
      %v901 = vunpack.c.l.b16 %v357
      %v902 = vunpack.c.l.b16 %v358
      %v903 = vunpack.c.l.b16 %v359
      %v904 = vunpack.c.l.b16 %v360
      %v905 = vunpack.c.l.b16 %v361
      %v906 = vunpack.c.l.b16 %v362
      %v907 = vunpack.c.l.b16 %v363
      %v908 = vunpack.c.l.b16 %v364
      %v909 = vunpack.c.l.b16 %v365
      %v910 = vpack.c.b16 %v847, %v846
      %v911 = vpack.c.b16 %v849, %v848
      %v912 = vpack.c.b16 %v851, %v850
      %v913 = vpack.c.b16 %v853, %v852
      %v914 = vpack.c.b16 %v855, %v854
      %v915 = vpack.c.b16 %v857, %v856
      %v916 = vpack.c.b16 %v859, %v858
      %v917 = vpack.c.b16 %v861, %v860
      %v918 = vpack.c.b16 %v863, %v862
      %v919 = vpack.c.b16 %v865, %v864
      %v920 = vpack.c.b16 %v867, %v866
      %v921 = vpack.c.b16 %v869, %v868
      %v922 = vpack.c.b16 %v871, %v870
      %v923 = vpack.c.b16 %v873, %v872
      %v924 = vpack.c.b16 %v875, %v874
      %v925 = vpack.c.b16 %v877, %v876
      %v926 = vpack.c.b16 %v879, %v878
      %v927 = vpack.c.b16 %v881, %v880
      %v928 = vpack.c.b16 %v883, %v882
      %v929 = vpack.c.b16 %v885, %v884
      %v930 = vpack.c.b16 %v887, %v886
      %v931 = vpack.c.b16 %v889, %v888
      %v932 = vpack.c.b16 %v891, %v890
      %v933 = vpack.c.b16 %v893, %v892
      %v934 = vpack.c.b16 %v895, %v894
      %v935 = vpack.c.b16 %v897, %v896
      %v936 = vpack.c.b16 %v899, %v898
      %v937 = vpack.c.b16 %v901, %v900
      %v938 = vpack.c.b16 %v903, %v902
      %v939 = vpack.c.b16 %v905, %v904
      %v940 = vpack.c.b16 %v907, %v906
      %v941 = vpack.c.b16 %v909, %v908
      %974 = vmatprep.subr.bf16.mxu0 0
      %975 = vmatpush1.bf16.msra.mxu0 %v917
      %976 = vmatprep.subr.bf16.mxu0 0
      %977 = vmatpush1.bf16.msra.mxu0 %v916
      %978 = vmatprep.subr.bf16.mxu0 0
      %979 = vmatpush1.bf16.msra.mxu0 %v915
      %980 = vmatprep.subr.bf16.mxu0 0
      %981 = vmatpush1.bf16.msra.mxu0 %v914
      %982 = vmatprep.subr.bf16.mxu0 0
      %983 = vmatpush1.bf16.msra.mxu0 %v913
      %984 = vmatprep.subr.bf16.mxu0 0
      %985 = vmatpush1.bf16.msra.mxu0 %v912
      %986 = vmatprep.subr.bf16.mxu0 0
      %987 = vmatpush1.bf16.msra.mxu0 %v911
      %988 = vmatprep.subr.bf16.mxu0 0
      %989 = vmatpush1.bf16.msra.mxu0 %v910
      %990 = vmatprep.subr.bf16.mxu0 0
      %991 = vmatpush2.bf16.msra.mxu0 %v925
      %992 = vmatprep.subr.bf16.mxu0 0
      %993 = vmatpush2.bf16.msra.mxu0 %v924
      %994 = vmatprep.subr.bf16.mxu0 0
      %995 = vmatpush2.bf16.msra.mxu0 %v923
      %996 = vmatprep.subr.bf16.mxu0 0
      %997 = vmatpush2.bf16.msra.mxu0 %v922
      %998 = vmatprep.subr.bf16.mxu0 0
      %999 = vmatpush2.bf16.msra.mxu0 %v921
      %1000 = vmatprep.subr.bf16.mxu0 0
      %1001 = vmatpush2.bf16.msra.mxu0 %v920
      %1002 = vmatprep.subr.bf16.mxu0 0
      %1003 = vmatpush2.bf16.msra.mxu0 %v919
      %1004 = vmatprep.subr.bf16.mxu0 0
      %1005 = vmatpush2.bf16.msra.mxu0 %v918
      %1006 = vmatprep.mubr.bf16.mxu0 %v655
      %1007 = vmatmul.mubr.bf16.gmra.mxu0 %v654
      %v1008 = vpop.f32.mrf.mxu0
      %v1009 = vadd.f32 0.0, %v1008
      %v1010 = vpop.f32.mrf.mxu0
      %v1011 = vpop.f32.mrf.mxu0
      %v1012 = vadd.f32 0.0, %v1011
      %v1013 = vpop.f32.mrf.mxu0
      %1014 = vmatprep.mubr.bf16.mxu0 %v659
      %1015 = vmatmul.mubr.bf16.gmra.mxu0 %v658
      %v1016 = vpop.f32.mrf.mxu0
      %v1017 = vadd.f32 0.0, %v1016
      %v1018 = vpop.f32.mrf.mxu0
      %v1019 = vpop.f32.mrf.mxu0
      %v1020 = vadd.f32 0.0, %v1019
      %v1021 = vpop.f32.mrf.mxu0
      %1022 = vmatprep.mubr.bf16.mxu0 %v663
      %1023 = vmatmul.mubr.bf16.gmra.mxu0 %v662
      %v1024 = vpop.f32.mrf.mxu0
      %v1025 = vadd.f32 0.0, %v1024
      %v1026 = vpop.f32.mrf.mxu0
      %v1027 = vpop.f32.mrf.mxu0
      %v1028 = vadd.f32 0.0, %v1027
      %v1029 = vpop.f32.mrf.mxu0
      %1030 = vmatprep.mubr.bf16.mxu0 %v667
      %1031 = vmatmul.mubr.bf16.gmra.mxu0 %v666
      %v1032 = vpop.f32.mrf.mxu0
      %v1033 = vadd.f32 0.0, %v1032
      %v1034 = vpop.f32.mrf.mxu0
      %v1035 = vpop.f32.mrf.mxu0
      %v1036 = vadd.f32 0.0, %v1035
      %v1037 = vpop.f32.mrf.mxu0
      %1038 = vmatprep.mubr.bf16.mxu0 %v671
      %1039 = vmatmul.mubr.bf16.gmra.mxu0 %v670
      %v1040 = vpop.f32.mrf.mxu0
      %v1041 = vadd.f32 0.0, %v1040
      %v1042 = vpop.f32.mrf.mxu0
      %v1043 = vpop.f32.mrf.mxu0
      %v1044 = vadd.f32 0.0, %v1043
      %v1045 = vpop.f32.mrf.mxu0
      %1046 = vmatprep.mubr.bf16.mxu0 %v675
      %1047 = vmatmul.mubr.bf16.gmra.mxu0 %v674
      %v1048 = vpop.f32.mrf.mxu0
      %v1049 = vadd.f32 0.0, %v1048
      %v1050 = vpop.f32.mrf.mxu0
      %v1051 = vpop.f32.mrf.mxu0
      %v1052 = vadd.f32 0.0, %v1051
      %v1053 = vpop.f32.mrf.mxu0
      %1054 = vmatprep.mubr.bf16.mxu0 %v679
      %1055 = vmatmul.mubr.bf16.gmra.mxu0 %v678
      %v1056 = vpop.f32.mrf.mxu0
      %v1057 = vadd.f32 0.0, %v1056
      %v1058 = vpop.f32.mrf.mxu0
      %v1059 = vpop.f32.mrf.mxu0
      %v1060 = vadd.f32 0.0, %v1059
      %v1061 = vpop.f32.mrf.mxu0
      %1062 = vmatprep.mubr.bf16.mxu0 %v683
      %1063 = vmatmul.mubr.bf16.gmra.mxu0 %v682
      %v1064 = vpop.f32.mrf.mxu0
      %v1065 = vadd.f32 0.0, %v1064
      %v1066 = vpop.f32.mrf.mxu0
      %v1067 = vpop.f32.mrf.mxu0
      %v1068 = vadd.f32 0.0, %v1067
      %v1069 = vpop.f32.mrf.mxu0
      %1070 = vmatprep.mubr.bf16.mxu0 %v687
      %1071 = vmatmul.mubr.bf16.gmra.mxu0 %v686
      %v1072 = vpop.f32.mrf.mxu0
      %v1073 = vadd.f32 0.0, %v1072
      %v1074 = vpop.f32.mrf.mxu0
      %v1075 = vpop.f32.mrf.mxu0
      %v1076 = vadd.f32 0.0, %v1075
      %v1077 = vpop.f32.mrf.mxu0
      %1078 = vmatprep.mubr.bf16.mxu0 %v691
      %1079 = vmatmul.mubr.bf16.gmra.mxu0 %v690
      %v1080 = vpop.f32.mrf.mxu0
      %v1081 = vadd.f32 0.0, %v1080
      %v1082 = vpop.f32.mrf.mxu0
      %v1083 = vpop.f32.mrf.mxu0
      %v1084 = vadd.f32 0.0, %v1083
      %v1085 = vpop.f32.mrf.mxu0
      %1086 = vmatprep.mubr.bf16.mxu0 %v695
      %1087 = vmatmul.mubr.bf16.gmra.mxu0 %v694
      %v1088 = vpop.f32.mrf.mxu0
      %v1089 = vadd.f32 0.0, %v1088
      %v1090 = vpop.f32.mrf.mxu0
      %v1091 = vpop.f32.mrf.mxu0
      %v1092 = vadd.f32 0.0, %v1091
      %v1093 = vpop.f32.mrf.mxu0
      %1094 = vmatprep.mubr.bf16.mxu0 %v699
      %1095 = vmatmul.mubr.bf16.gmra.mxu0 %v698
      %v1096 = vpop.f32.mrf.mxu0
      %v1097 = vadd.f32 0.0, %v1096
      %v1098 = vpop.f32.mrf.mxu0
      %v1099 = vpop.f32.mrf.mxu0
      %v1100 = vadd.f32 0.0, %v1099
      %v1101 = vpop.f32.mrf.mxu0
      %1102 = vmatprep.mubr.bf16.mxu0 %v703
      %1103 = vmatmul.mubr.bf16.gmra.mxu0 %v702
      %v1104 = vpop.f32.mrf.mxu0
      %v1105 = vadd.f32 0.0, %v1104
      %v1106 = vpop.f32.mrf.mxu0
      %v1107 = vpop.f32.mrf.mxu0
      %v1108 = vadd.f32 0.0, %v1107
      %v1109 = vpop.f32.mrf.mxu0
      %1110 = vmatprep.mubr.bf16.mxu0 %v707
      %1111 = vmatmul.mubr.bf16.gmra.mxu0 %v706
      %v1112 = vpop.f32.mrf.mxu0
      %v1113 = vadd.f32 0.0, %v1112
      %v1114 = vpop.f32.mrf.mxu0
      %v1115 = vpop.f32.mrf.mxu0
      %v1116 = vadd.f32 0.0, %v1115
      %v1117 = vpop.f32.mrf.mxu0
      %1118 = vmatprep.mubr.bf16.mxu0 %v711
      %1119 = vmatmul.mubr.bf16.gmra.mxu0 %v710
      %v1120 = vpop.f32.mrf.mxu0
      %v1121 = vadd.f32 0.0, %v1120
      %v1122 = vpop.f32.mrf.mxu0
      %v1123 = vpop.f32.mrf.mxu0
      %v1124 = vadd.f32 0.0, %v1123
      %v1125 = vpop.f32.mrf.mxu0
      %1126 = vmatprep.mubr.bf16.mxu0 %v715
      %1127 = vmatmul.mubr.bf16.gmra.mxu0 %v714
      %v1128 = vpop.f32.mrf.mxu0
      %v1129 = vadd.f32 0.0, %v1128
      %v1130 = vpop.f32.mrf.mxu0
      %v1131 = vpop.f32.mrf.mxu0
      %v1132 = vadd.f32 0.0, %v1131
      %v1133 = vpop.f32.mrf.mxu0
      %1134 = vdwg.mxu0
      %1135 = vmatprep.subr.bf16.mxu0 0
      %1136 = vmatpush1.bf16.msra.mxu0 %v933
      %1137 = vmatprep.subr.bf16.mxu0 0
      %1138 = vmatpush1.bf16.msra.mxu0 %v932
      %1139 = vmatprep.subr.bf16.mxu0 0
      %1140 = vmatpush1.bf16.msra.mxu0 %v931
      %1141 = vmatprep.subr.bf16.mxu0 0
      %1142 = vmatpush1.bf16.msra.mxu0 %v930
      %1143 = vmatprep.subr.bf16.mxu0 0
      %1144 = vmatpush1.bf16.msra.mxu0 %v929
      %1145 = vmatprep.subr.bf16.mxu0 0
      %1146 = vmatpush1.bf16.msra.mxu0 %v928
      %1147 = vmatprep.subr.bf16.mxu0 0
      %1148 = vmatpush1.bf16.msra.mxu0 %v927
      %1149 = vmatprep.subr.bf16.mxu0 0
      %1150 = vmatpush1.bf16.msra.mxu0 %v926
      %1151 = vmatprep.subr.bf16.mxu0 0
      %1152 = vmatpush2.bf16.msra.mxu0 %v941
      %1153 = vmatprep.subr.bf16.mxu0 0
      %1154 = vmatpush2.bf16.msra.mxu0 %v940
      %1155 = vmatprep.subr.bf16.mxu0 0
      %1156 = vmatpush2.bf16.msra.mxu0 %v939
      %1157 = vmatprep.subr.bf16.mxu0 0
      %1158 = vmatpush2.bf16.msra.mxu0 %v938
      %1159 = vmatprep.subr.bf16.mxu0 0
      %1160 = vmatpush2.bf16.msra.mxu0 %v937
      %1161 = vmatprep.subr.bf16.mxu0 0
      %1162 = vmatpush2.bf16.msra.mxu0 %v936
      %1163 = vmatprep.subr.bf16.mxu0 0
      %1164 = vmatpush2.bf16.msra.mxu0 %v935
      %1165 = vmatprep.subr.bf16.mxu0 0
      %1166 = vmatpush2.bf16.msra.mxu0 %v934
      %1167 = vmatprep.mubr.bf16.mxu0 %v657
      %1168 = vmatmul.mubr.bf16.gmra.mxu0 %v656
      %v1169 = vpop.f32.mrf.mxu0
      %v1170 = vadd.f32 %v1009, %v1169
      %v1171 = vpop.f32.mrf.mxu0
      %v1172 = vpop.f32.mrf.mxu0
      %v1173 = vadd.f32 %v1012, %v1172
      %v1174 = vpop.f32.mrf.mxu0
      %1175 = vmatprep.mubr.bf16.mxu0 %v661
      %1176 = vmatmul.mubr.bf16.gmra.mxu0 %v660
      %v1177 = vpop.f32.mrf.mxu0
      %v1178 = vadd.f32 %v1017, %v1177
      %v1179 = vpop.f32.mrf.mxu0
      %v1180 = vpop.f32.mrf.mxu0
      %v1181 = vadd.f32 %v1020, %v1180
      %v1182 = vpop.f32.mrf.mxu0
      %1183 = vmatprep.mubr.bf16.mxu0 %v665
      %1184 = vmatmul.mubr.bf16.gmra.mxu0 %v664
      %v1185 = vpop.f32.mrf.mxu0
      %v1186 = vadd.f32 %v1025, %v1185
      %v1187 = vpop.f32.mrf.mxu0
      %v1188 = vpop.f32.mrf.mxu0
      %v1189 = vadd.f32 %v1028, %v1188
      %v1190 = vpop.f32.mrf.mxu0
      %1191 = vmatprep.mubr.bf16.mxu0 %v669
      %1192 = vmatmul.mubr.bf16.gmra.mxu0 %v668
      %v1193 = vpop.f32.mrf.mxu0
      %v1194 = vadd.f32 %v1033, %v1193
      %v1195 = vpop.f32.mrf.mxu0
      %v1196 = vpop.f32.mrf.mxu0
      %v1197 = vadd.f32 %v1036, %v1196
      %v1198 = vpop.f32.mrf.mxu0
      %1199 = vmatprep.mubr.bf16.mxu0 %v673
      %1200 = vmatmul.mubr.bf16.gmra.mxu0 %v672
      %v1201 = vpop.f32.mrf.mxu0
      %v1202 = vadd.f32 %v1041, %v1201
      %v1203 = vpop.f32.mrf.mxu0
      %v1204 = vpop.f32.mrf.mxu0
      %v1205 = vadd.f32 %v1044, %v1204
      %v1206 = vpop.f32.mrf.mxu0
      %1207 = vmatprep.mubr.bf16.mxu0 %v677
      %1208 = vmatmul.mubr.bf16.gmra.mxu0 %v676
      %v1209 = vpop.f32.mrf.mxu0
      %v1210 = vadd.f32 %v1049, %v1209
      %v1211 = vpop.f32.mrf.mxu0
      %v1212 = vpop.f32.mrf.mxu0
      %v1213 = vadd.f32 %v1052, %v1212
      %v1214 = vpop.f32.mrf.mxu0
      %1215 = vmatprep.mubr.bf16.mxu0 %v681
      %1216 = vmatmul.mubr.bf16.gmra.mxu0 %v680
      %v1217 = vpop.f32.mrf.mxu0
      %v1218 = vadd.f32 %v1057, %v1217
      %v1219 = vpop.f32.mrf.mxu0
      %v1220 = vpop.f32.mrf.mxu0
      %v1221 = vadd.f32 %v1060, %v1220
      %v1222 = vpop.f32.mrf.mxu0
      %1223 = vmatprep.mubr.bf16.mxu0 %v685
      %1224 = vmatmul.mubr.bf16.gmra.mxu0 %v684
      %v1225 = vpop.f32.mrf.mxu0
      %v1226 = vadd.f32 %v1065, %v1225
      %v1227 = vpop.f32.mrf.mxu0
      %v1228 = vpop.f32.mrf.mxu0
      %v1229 = vadd.f32 %v1068, %v1228
      %v1230 = vpop.f32.mrf.mxu0
      %1231 = vmatprep.mubr.bf16.mxu0 %v689
      %1232 = vmatmul.mubr.bf16.gmra.mxu0 %v688
      %v1233 = vpop.f32.mrf.mxu0
      %v1234 = vadd.f32 %v1073, %v1233
      %v1235 = vpop.f32.mrf.mxu0
      %v1236 = vpop.f32.mrf.mxu0
      %v1237 = vadd.f32 %v1076, %v1236
      %v1238 = vpop.f32.mrf.mxu0
      %1239 = vmatprep.mubr.bf16.mxu0 %v693
      %1240 = vmatmul.mubr.bf16.gmra.mxu0 %v692
      %v1241 = vpop.f32.mrf.mxu0
      %v1242 = vadd.f32 %v1081, %v1241
      %v1243 = vpop.f32.mrf.mxu0
      %v1244 = vpop.f32.mrf.mxu0
      %v1245 = vadd.f32 %v1084, %v1244
      %v1246 = vpop.f32.mrf.mxu0
      %1247 = vmatprep.mubr.bf16.mxu0 %v697
      %1248 = vmatmul.mubr.bf16.gmra.mxu0 %v696
      %v1249 = vpop.f32.mrf.mxu0
      %v1250 = vadd.f32 %v1089, %v1249
      %v1251 = vpop.f32.mrf.mxu0
      %v1252 = vpop.f32.mrf.mxu0
      %v1253 = vadd.f32 %v1092, %v1252
      %v1254 = vpop.f32.mrf.mxu0
      %1255 = vmatprep.mubr.bf16.mxu0 %v701
      %1256 = vmatmul.mubr.bf16.gmra.mxu0 %v700
      %v1257 = vpop.f32.mrf.mxu0
      %v1258 = vadd.f32 %v1097, %v1257
      %v1259 = vpop.f32.mrf.mxu0
      %v1260 = vpop.f32.mrf.mxu0
      %v1261 = vadd.f32 %v1100, %v1260
      %v1262 = vpop.f32.mrf.mxu0
      %1263 = vmatprep.mubr.bf16.mxu0 %v705
      %1264 = vmatmul.mubr.bf16.gmra.mxu0 %v704
      %v1265 = vpop.f32.mrf.mxu0
      %v1266 = vadd.f32 %v1105, %v1265
      %v1267 = vpop.f32.mrf.mxu0
      %v1268 = vpop.f32.mrf.mxu0
      %v1269 = vadd.f32 %v1108, %v1268
      %v1270 = vpop.f32.mrf.mxu0
      %1271 = vmatprep.mubr.bf16.mxu0 %v709
      %1272 = vmatmul.mubr.bf16.gmra.mxu0 %v708
      %v1273 = vpop.f32.mrf.mxu0
      %v1274 = vadd.f32 %v1113, %v1273
      %v1275 = vpop.f32.mrf.mxu0
      %v1276 = vpop.f32.mrf.mxu0
      %v1277 = vadd.f32 %v1116, %v1276
      %v1278 = vpop.f32.mrf.mxu0
      %1279 = vmatprep.mubr.bf16.mxu0 %v713
      %1280 = vmatmul.mubr.bf16.gmra.mxu0 %v712
      %v1281 = vpop.f32.mrf.mxu0
      %v1282 = vadd.f32 %v1121, %v1281
      %v1283 = vpop.f32.mrf.mxu0
      %v1284 = vpop.f32.mrf.mxu0
      %v1285 = vadd.f32 %v1124, %v1284
      %v1286 = vpop.f32.mrf.mxu0
      %1287 = vmatprep.mubr.bf16.mxu0 %v717
      %1288 = vmatmul.mubr.bf16.gmra.mxu0 %v716
      %v1289 = vpop.f32.mrf.mxu0
      %v1290 = vadd.f32 %v1129, %v1289
      %v1291 = vpop.f32.mrf.mxu0
      %v1292 = vpop.f32.mrf.mxu0
      %v1293 = vadd.f32 %v1132, %v1292
      %v1294 = vpop.f32.mrf.mxu0
      %1295 = vdwg.mxu0
      %v1296 = vadd.f32 %v366, %v1170
      %v1297 = vadd.f32 %v367, %v1173
      %v1298 = vadd.f32 %v368, %v1178
      %v1299 = vadd.f32 %v369, %v1181
      %v1300 = vadd.f32 %v370, %v1186
      %v1301 = vadd.f32 %v371, %v1189
      %v1302 = vadd.f32 %v372, %v1194
      %v1303 = vadd.f32 %v373, %v1197
      %v1304 = vadd.f32 %v374, %v1202
      %v1305 = vadd.f32 %v375, %v1205
      %v1306 = vadd.f32 %v376, %v1210
      %v1307 = vadd.f32 %v377, %v1213
      %v1308 = vadd.f32 %v378, %v1218
      %v1309 = vadd.f32 %v379, %v1221
      %v1310 = vadd.f32 %v380, %v1226
      %v1311 = vadd.f32 %v381, %v1229
      %v1312 = vadd.f32 %v382, %v1234
      %v1313 = vadd.f32 %v383, %v1237
      %v1314 = vadd.f32 %v384, %v1242
      %v1315 = vadd.f32 %v385, %v1245
      %v1316 = vadd.f32 %v386, %v1250
      %v1317 = vadd.f32 %v387, %v1253
      %v1318 = vadd.f32 %v388, %v1258
      %v1319 = vadd.f32 %v389, %v1261
      %v1320 = vadd.f32 %v390, %v1266
      %v1321 = vadd.f32 %v391, %v1269
      %v1322 = vadd.f32 %v392, %v1274
      %v1323 = vadd.f32 %v393, %v1277
      %v1324 = vadd.f32 %v394, %v1282
      %v1325 = vadd.f32 %v395, %v1285
      %v1326 = vadd.f32 %v396, %v1290
      %v1327 = vadd.f32 %v397, %v1293
      %vm1328 = vcmask 64512
      %1329 = vst.msk [vmem:[#allocation2] sm:$0xff] %vm1328, %v1296
      %1330 = vst.msk [vmem:[#allocation2 + $0x8] sm:$0xff] %vm1328, %v1297
      %1331 = vst.msk [vmem:[#allocation2 + $0x10] sm:$0xff] %vm1328, %v1298
      %1332 = vst.msk [vmem:[#allocation2 + $0x18] sm:$0xff] %vm1328, %v1299
      %1333 = vst.msk [vmem:[#allocation2 + $0x20] sm:$0xff] %vm1328, %v1300
      %1334 = vst.msk [vmem:[#allocation2 + $0x28] sm:$0xff] %vm1328, %v1301
      %1335 = vst.msk [vmem:[#allocation2 + $0x30] sm:$0xff] %vm1328, %v1302
      %1336 = vst.msk [vmem:[#allocation2 + $0x38] sm:$0xff] %vm1328, %v1303
      %1337 = vst.msk [vmem:[#allocation2 + $0x40] sm:$0xff] %vm1328, %v1304
      %1338 = vst.msk [vmem:[#allocation2 + $0x48] sm:$0xff] %vm1328, %v1305
      %1339 = vst.msk [vmem:[#allocation2 + $0x50] sm:$0xff] %vm1328, %v1306
      %1340 = vst.msk [vmem:[#allocation2 + $0x58] sm:$0xff] %vm1328, %v1307
      %1341 = vst.msk [vmem:[#allocation2 + $0x60] sm:$0xff] %vm1328, %v1308
      %1342 = vst.msk [vmem:[#allocation2 + $0x68] sm:$0xff] %vm1328, %v1309
      %1343 = vst.msk [vmem:[#allocation2 + $0x70] sm:$0xff] %vm1328, %v1310
      %1344 = vst.msk [vmem:[#allocation2 + $0x78] sm:$0xff] %vm1328, %v1311
      %1345 = vst.msk [vmem:[#allocation2 + $0x80] sm:$0xff] %vm1328, %v1312
      %1346 = vst.msk [vmem:[#allocation2 + $0x88] sm:$0xff] %vm1328, %v1313
      %1347 = vst.msk [vmem:[#allocation2 + $0x90] sm:$0xff] %vm1328, %v1314
      %1348 = vst.msk [vmem:[#allocation2 + $0x98] sm:$0xff] %vm1328, %v1315
      %1349 = vst.msk [vmem:[#allocation2 + $0xa0] sm:$0xff] %vm1328, %v1316
      %1350 = vst.msk [vmem:[#allocation2 + $0xa8] sm:$0xff] %vm1328, %v1317
      %1351 = vst.msk [vmem:[#allocation2 + $0xb0] sm:$0xff] %vm1328, %v1318
      %1352 = vst.msk [vmem:[#allocation2 + $0xb8] sm:$0xff] %vm1328, %v1319
      %1353 = vst.msk [vmem:[#allocation2 + $0xc0] sm:$0xff] %vm1328, %v1320
      %1354 = vst.msk [vmem:[#allocation2 + $0xc8] sm:$0xff] %vm1328, %v1321
      %1355 = vst.msk [vmem:[#allocation2 + $0xd0] sm:$0xff] %vm1328, %v1322
      %1356 = vst.msk [vmem:[#allocation2 + $0xd8] sm:$0xff] %vm1328, %v1323
      %1357 = vst.msk [vmem:[#allocation2 + $0xe0] sm:$0xff] %vm1328, %v1324
      %1358 = vst.msk [vmem:[#allocation2 + $0xe8] sm:$0xff] %vm1328, %v1325
      %1359 = vst.msk [vmem:[#allocation2 + $0xf0] sm:$0xff] %vm1328, %v1326
      %1360 = vst.msk [vmem:[#allocation2 + $0xf8] sm:$0xff] %vm1328, %v1327
      // Predicated region
      $region45: #{_lambda_.2} parent=39 // pred_check
        %p1361 = pneg %p260
      $region46: #{_lambda_.2} parent=39 // pred_check_branch
        %1363 = sbr.rel (%p1361) target = $region48
      $region47: #{_lambda_.2} parent=39 // pred_region
        %v1364 = vld [vmem:[#allocation2] sm:$0xff]
        %v1365 = vld [vmem:[#allocation2 + $0x8] sm:$0xff]
        %v1366 = vld [vmem:[#allocation2 + $0x10] sm:$0xff]
        %v1367 = vld [vmem:[#allocation2 + $0x18] sm:$0xff]
        %v1368 = vld [vmem:[#allocation2 + $0x20] sm:$0xff]
        %v1369 = vld [vmem:[#allocation2 + $0x28] sm:$0xff]
        %v1370 = vld [vmem:[#allocation2 + $0x30] sm:$0xff]
        %v1371 = vld [vmem:[#allocation2 + $0x38] sm:$0xff]
        %v1372 = vld [vmem:[#allocation2 + $0x40] sm:$0xff]
        %v1373 = vld [vmem:[#allocation2 + $0x48] sm:$0xff]
        %v1374 = vld [vmem:[#allocation2 + $0x50] sm:$0xff]
        %v1375 = vld [vmem:[#allocation2 + $0x58] sm:$0xff]
        %v1376 = vld [vmem:[#allocation2 + $0x60] sm:$0xff]
        %v1377 = vld [vmem:[#allocation2 + $0x68] sm:$0xff]
        %v1378 = vld [vmem:[#allocation2 + $0x70] sm:$0xff]
        %v1379 = vld [vmem:[#allocation2 + $0x78] sm:$0xff]
        %v1380 = vld [vmem:[#allocation2 + $0x80] sm:$0xff]
        %v1381 = vld [vmem:[#allocation2 + $0x88] sm:$0xff]
        %v1382 = vld [vmem:[#allocation2 + $0x90] sm:$0xff]
        %v1383 = vld [vmem:[#allocation2 + $0x98] sm:$0xff]
        %v1384 = vld [vmem:[#allocation2 + $0xa0] sm:$0xff]
        %v1385 = vld [vmem:[#allocation2 + $0xa8] sm:$0xff]
        %v1386 = vld [vmem:[#allocation2 + $0xb0] sm:$0xff]
        %v1387 = vld [vmem:[#allocation2 + $0xb8] sm:$0xff]
        %v1388 = vld [vmem:[#allocation2 + $0xc0] sm:$0xff]
        %v1389 = vld [vmem:[#allocation2 + $0xc8] sm:$0xff]
        %v1390 = vld [vmem:[#allocation2 + $0xd0] sm:$0xff]
        %v1391 = vld [vmem:[#allocation2 + $0xd8] sm:$0xff]
        %v1392 = vld [vmem:[#allocation2 + $0xe0] sm:$0xff]
        %v1393 = vld [vmem:[#allocation2 + $0xe8] sm:$0xff]
        %v1394 = vld [vmem:[#allocation2 + $0xf0] sm:$0xff]
        %v1395 = vld [vmem:[#allocation2 + $0xf8] sm:$0xff]
        %v1396 = vld [vmem:[%s2] sm:$0xff]
        %v1397 = vld [vmem:[%s3] sm:$0x1]
        %v1399 = vlaneseq
        %v1400 = vshrl.u32 %v1399, 7
        %v1401 = vsub.s32 0, %v1400
        %v1402 = vrot.slane %v1397, %v1401
        %v1405 = vsel %vm1328, %v1364, 0
        %v1408 = vsel %vm1328, %v1365, 0
        %v1411 = vsel %vm1328, %v1366, 0
        %v1414 = vsel %vm1328, %v1367, 0
        %v1417 = vsel %vm1328, %v1368, 0
        %v1420 = vsel %vm1328, %v1369, 0
        %v1423 = vsel %vm1328, %v1370, 0
        %v1426 = vsel %vm1328, %v1371, 0
        %v1429 = vsel %vm1328, %v1372, 0
        %v1432 = vsel %vm1328, %v1373, 0
        %v1435 = vsel %vm1328, %v1374, 0
        %v1438 = vsel %vm1328, %v1375, 0
        %v1441 = vsel %vm1328, %v1376, 0
        %v1444 = vsel %vm1328, %v1377, 0
        %v1447 = vsel %vm1328, %v1378, 0
        %v1450 = vsel %vm1328, %v1379, 0
        %v1453 = vsel %vm1328, %v1380, 0
        %v1456 = vsel %vm1328, %v1381, 0
        %v1459 = vsel %vm1328, %v1382, 0
        %v1462 = vsel %vm1328, %v1383, 0
        %v1465 = vsel %vm1328, %v1384, 0
        %v1468 = vsel %vm1328, %v1385, 0
        %v1471 = vsel %vm1328, %v1386, 0
        %v1474 = vsel %vm1328, %v1387, 0
        %v1477 = vsel %vm1328, %v1388, 0
        %v1480 = vsel %vm1328, %v1389, 0
        %v1483 = vsel %vm1328, %v1390, 0
        %v1486 = vsel %vm1328, %v1391, 0
        %v1489 = vsel %vm1328, %v1392, 0
        %v1492 = vsel %vm1328, %v1393, 0
        %v1495 = vsel %vm1328, %v1394, 0
        %v1498 = vsel %vm1328, %v1395, 0
        %1500 = vmatprep.subr.mxu0 0.0
        %1501 = vmatpush1.msra.mxu0 0.0
        %1502 = vmatprep.subr.mxu0 0.0
        %1503 = vmatpush1.msra.mxu0 0.0
        %1504 = vmatprep.subr.mxu0 0.0
        %1505 = vmatpush1.msra.mxu0 0.0
        %1506 = vmatprep.subr.mxu0 0.0
        %1507 = vmatpush1.msra.mxu0 0.0
        %1508 = vmatprep.subr.mxu0 0.0
        %1509 = vmatpush1.msra.mxu0 0.0
        %1510 = vmatprep.subr.mxu0 0.0
        %1511 = vmatpush1.msra.mxu0 0.0
        %1512 = vmatprep.subr.mxu0 0.0
        %1513 = vmatpush1.msra.mxu0 0.0
        %1514 = vmatprep.subr.mxu0 0.0
        %1515 = vmatpush1.msra.mxu0 0.0
        %1516 = vmatprep.subr.mxu0 0.0
        %1517 = vmatpush1.msra.mxu0 0.0
        %1518 = vmatprep.subr.mxu0 0.0
        %1519 = vmatpush1.msra.mxu0 0.0
        %1520 = vmatprep.subr.mxu0 0.0
        %1521 = vmatpush1.msra.mxu0 0.0
        %1522 = vmatprep.subr.mxu0 0.0
        %1523 = vmatpush1.msra.mxu0 0.0
        %1524 = vmatprep.subr.mxu0 0.0
        %1525 = vmatpush1.msra.mxu0 0.0
        %1526 = vmatprep.subr.mxu0 0.0
        %1527 = vmatpush1.msra.mxu0 0.0
        %1528 = vmatprep.subr.mxu0 0.0
        %1529 = vmatpush1.msra.mxu0 0.0
        %1530 = vmatprep.subr.mxu0 0.0
        %1531 = vmatpush1.msra.mxu0 %v1396
        %1532 = vmatprep.subr.mxu0 0.0
        %1533 = vmatpush2.msra.mxu0 0.0
        %1534 = vmatprep.subr.mxu0 0.0
        %1535 = vmatpush2.msra.mxu0 0.0
        %1536 = vmatprep.subr.mxu0 0.0
        %1537 = vmatpush2.msra.mxu0 0.0
        %1538 = vmatprep.subr.mxu0 0.0
        %1539 = vmatpush2.msra.mxu0 0.0
        %1540 = vmatprep.subr.mxu0 0.0
        %1541 = vmatpush2.msra.mxu0 0.0
        %1542 = vmatprep.subr.mxu0 0.0
        %1543 = vmatpush2.msra.mxu0 0.0
        %1544 = vmatprep.subr.mxu0 0.0
        %1545 = vmatpush2.msra.mxu0 0.0
        %1546 = vmatprep.subr.mxu0 0.0
        %1547 = vmatpush2.msra.mxu0 0.0
        %1548 = vmatprep.subr.mxu0 0.0
        %1549 = vmatpush2.msra.mxu0 0.0
        %1550 = vmatprep.subr.mxu0 0.0
        %1551 = vmatpush2.msra.mxu0 0.0
        %1552 = vmatprep.subr.mxu0 0.0
        %1553 = vmatpush2.msra.mxu0 0.0
        %1554 = vmatprep.subr.mxu0 0.0
        %1555 = vmatpush2.msra.mxu0 0.0
        %1556 = vmatprep.subr.mxu0 0.0
        %1557 = vmatpush2.msra.mxu0 0.0
        %1558 = vmatprep.subr.mxu0 0.0
        %1559 = vmatpush2.msra.mxu0 0.0
        %1560 = vmatprep.subr.mxu0 0.0
        %1561 = vmatpush2.msra.mxu0 0.0
        %1562 = vmatprep.subr.mxu0 0.0
        %1563 = vmatpush2.msra.mxu0 0.0
        %1564 = vmatprep.mubr.f32.mxu0 0.0
        %1565 = vmatmul.mubr.f32.gmra.mxu0 %v1405
        %v1566 = vpop.f32.mrf.mxu0
        %v1567 = vadd.f32 %v1402, %v1566
        %v1568 = vpop.f32.mrf.mxu0
        %1569 = vmatprep.mubr.f32.mxu0 0.0
        %1570 = vmatmul.mubr.f32.gmra.mxu0 %v1408
        %v1571 = vpop.f32.mrf.mxu0
        %v1572 = vadd.f32 %v1402, %v1571
        %v1573 = vpop.f32.mrf.mxu0
        %1574 = vmatprep.mubr.f32.mxu0 0.0
        %1575 = vmatmul.mubr.f32.gmra.mxu0 %v1411
        %v1576 = vpop.f32.mrf.mxu0
        %v1577 = vadd.f32 %v1402, %v1576
        %v1578 = vpop.f32.mrf.mxu0
        %1579 = vmatprep.mubr.f32.mxu0 0.0
        %1580 = vmatmul.mubr.f32.gmra.mxu0 %v1414
        %v1581 = vpop.f32.mrf.mxu0
        %v1582 = vadd.f32 %v1402, %v1581
        %v1583 = vpop.f32.mrf.mxu0
        %1584 = vmatprep.mubr.f32.mxu0 0.0
        %1585 = vmatmul.mubr.f32.gmra.mxu0 %v1417
        %v1586 = vpop.f32.mrf.mxu0
        %v1587 = vadd.f32 %v1402, %v1586
        %v1588 = vpop.f32.mrf.mxu0
        %1589 = vmatprep.mubr.f32.mxu0 0.0
        %1590 = vmatmul.mubr.f32.gmra.mxu0 %v1420
        %v1591 = vpop.f32.mrf.mxu0
        %v1592 = vadd.f32 %v1402, %v1591
        %v1593 = vpop.f32.mrf.mxu0
        %1594 = vmatprep.mubr.f32.mxu0 0.0
        %1595 = vmatmul.mubr.f32.gmra.mxu0 %v1423
        %v1596 = vpop.f32.mrf.mxu0
        %v1597 = vadd.f32 %v1402, %v1596
        %v1598 = vpop.f32.mrf.mxu0
        %1599 = vmatprep.mubr.f32.mxu0 0.0
        %1600 = vmatmul.mubr.f32.gmra.mxu0 %v1426
        %v1601 = vpop.f32.mrf.mxu0
        %v1602 = vadd.f32 %v1402, %v1601
        %v1603 = vpop.f32.mrf.mxu0
        %1604 = vmatprep.mubr.f32.mxu0 0.0
        %1605 = vmatmul.mubr.f32.gmra.mxu0 %v1429
        %v1606 = vpop.f32.mrf.mxu0
        %v1607 = vadd.f32 %v1402, %v1606
        %v1608 = vpop.f32.mrf.mxu0
        %1609 = vmatprep.mubr.f32.mxu0 0.0
        %1610 = vmatmul.mubr.f32.gmra.mxu0 %v1432
        %v1611 = vpop.f32.mrf.mxu0
        %v1612 = vadd.f32 %v1402, %v1611
        %v1613 = vpop.f32.mrf.mxu0
        %1614 = vmatprep.mubr.f32.mxu0 0.0
        %1615 = vmatmul.mubr.f32.gmra.mxu0 %v1435
        %v1616 = vpop.f32.mrf.mxu0
        %v1617 = vadd.f32 %v1402, %v1616
        %v1618 = vpop.f32.mrf.mxu0
        %1619 = vmatprep.mubr.f32.mxu0 0.0
        %1620 = vmatmul.mubr.f32.gmra.mxu0 %v1438
        %v1621 = vpop.f32.mrf.mxu0
        %v1622 = vadd.f32 %v1402, %v1621
        %v1623 = vpop.f32.mrf.mxu0
        %1624 = vmatprep.mubr.f32.mxu0 0.0
        %1625 = vmatmul.mubr.f32.gmra.mxu0 %v1441
        %v1626 = vpop.f32.mrf.mxu0
        %v1627 = vadd.f32 %v1402, %v1626
        %v1628 = vpop.f32.mrf.mxu0
        %1629 = vmatprep.mubr.f32.mxu0 0.0
        %1630 = vmatmul.mubr.f32.gmra.mxu0 %v1444
        %v1631 = vpop.f32.mrf.mxu0
        %v1632 = vadd.f32 %v1402, %v1631
        %v1633 = vpop.f32.mrf.mxu0
        %1634 = vmatprep.mubr.f32.mxu0 0.0
        %1635 = vmatmul.mubr.f32.gmra.mxu0 %v1447
        %v1636 = vpop.f32.mrf.mxu0
        %v1637 = vadd.f32 %v1402, %v1636
        %v1638 = vpop.f32.mrf.mxu0
        %1639 = vmatprep.mubr.f32.mxu0 0.0
        %1640 = vmatmul.mubr.f32.gmra.mxu0 %v1450
        %v1641 = vpop.f32.mrf.mxu0
        %v1642 = vadd.f32 %v1402, %v1641
        %v1643 = vpop.f32.mrf.mxu0
        %1644 = vmatprep.mubr.f32.mxu0 0.0
        %1645 = vmatmul.mubr.f32.gmra.mxu0 %v1453
        %v1646 = vpop.f32.mrf.mxu0
        %v1647 = vadd.f32 %v1402, %v1646
        %v1648 = vpop.f32.mrf.mxu0
        %1649 = vmatprep.mubr.f32.mxu0 0.0
        %1650 = vmatmul.mubr.f32.gmra.mxu0 %v1456
        %v1651 = vpop.f32.mrf.mxu0
        %v1652 = vadd.f32 %v1402, %v1651
        %v1653 = vpop.f32.mrf.mxu0
        %1654 = vmatprep.mubr.f32.mxu0 0.0
        %1655 = vmatmul.mubr.f32.gmra.mxu0 %v1459
        %v1656 = vpop.f32.mrf.mxu0
        %v1657 = vadd.f32 %v1402, %v1656
        %v1658 = vpop.f32.mrf.mxu0
        %1659 = vmatprep.mubr.f32.mxu0 0.0
        %1660 = vmatmul.mubr.f32.gmra.mxu0 %v1462
        %v1661 = vpop.f32.mrf.mxu0
        %v1662 = vadd.f32 %v1402, %v1661
        %v1663 = vpop.f32.mrf.mxu0
        %1664 = vmatprep.mubr.f32.mxu0 0.0
        %1665 = vmatmul.mubr.f32.gmra.mxu0 %v1465
        %v1666 = vpop.f32.mrf.mxu0
        %v1667 = vadd.f32 %v1402, %v1666
        %v1668 = vpop.f32.mrf.mxu0
        %1669 = vmatprep.mubr.f32.mxu0 0.0
        %1670 = vmatmul.mubr.f32.gmra.mxu0 %v1468
        %v1671 = vpop.f32.mrf.mxu0
        %v1672 = vadd.f32 %v1402, %v1671
        %v1673 = vpop.f32.mrf.mxu0
        %1674 = vmatprep.mubr.f32.mxu0 0.0
        %1675 = vmatmul.mubr.f32.gmra.mxu0 %v1471
        %v1676 = vpop.f32.mrf.mxu0
        %v1677 = vadd.f32 %v1402, %v1676
        %v1678 = vpop.f32.mrf.mxu0
        %1679 = vmatprep.mubr.f32.mxu0 0.0
        %1680 = vmatmul.mubr.f32.gmra.mxu0 %v1474
        %v1681 = vpop.f32.mrf.mxu0
        %v1682 = vadd.f32 %v1402, %v1681
        %v1683 = vpop.f32.mrf.mxu0
        %1684 = vmatprep.mubr.f32.mxu0 0.0
        %1685 = vmatmul.mubr.f32.gmra.mxu0 %v1477
        %v1686 = vpop.f32.mrf.mxu0
        %v1687 = vadd.f32 %v1402, %v1686
        %v1688 = vpop.f32.mrf.mxu0
        %1689 = vmatprep.mubr.f32.mxu0 0.0
        %1690 = vmatmul.mubr.f32.gmra.mxu0 %v1480
        %v1691 = vpop.f32.mrf.mxu0
        %v1692 = vadd.f32 %v1402, %v1691
        %v1693 = vpop.f32.mrf.mxu0
        %1694 = vmatprep.mubr.f32.mxu0 0.0
        %1695 = vmatmul.mubr.f32.gmra.mxu0 %v1483
        %v1696 = vpop.f32.mrf.mxu0
        %v1697 = vadd.f32 %v1402, %v1696
        %v1698 = vpop.f32.mrf.mxu0
        %1699 = vmatprep.mubr.f32.mxu0 0.0
        %1700 = vmatmul.mubr.f32.gmra.mxu0 %v1486
        %v1701 = vpop.f32.mrf.mxu0
        %v1702 = vadd.f32 %v1402, %v1701
        %v1703 = vpop.f32.mrf.mxu0
        %1704 = vmatprep.mubr.f32.mxu0 0.0
        %1705 = vmatmul.mubr.f32.gmra.mxu0 %v1489
        %v1706 = vpop.f32.mrf.mxu0
        %v1707 = vadd.f32 %v1402, %v1706
        %v1708 = vpop.f32.mrf.mxu0
        %1709 = vmatprep.mubr.f32.mxu0 0.0
        %1710 = vmatmul.mubr.f32.gmra.mxu0 %v1492
        %v1711 = vpop.f32.mrf.mxu0
        %v1712 = vadd.f32 %v1402, %v1711
        %v1713 = vpop.f32.mrf.mxu0
        %1714 = vmatprep.mubr.f32.mxu0 0.0
        %1715 = vmatmul.mubr.f32.gmra.mxu0 %v1495
        %v1716 = vpop.f32.mrf.mxu0
        %v1717 = vadd.f32 %v1402, %v1716
        %v1718 = vpop.f32.mrf.mxu0
        %1719 = vmatprep.mubr.f32.mxu0 0.0
        %1720 = vmatmul.mubr.f32.gmra.mxu0 %v1498
        %v1721 = vpop.f32.mrf.mxu0
        %v1722 = vadd.f32 %v1402, %v1721
        %v1723 = vpop.f32.mrf.mxu0
        %1724 = vdwg.mxu0
        %v1725 = vmax.f32 %v1567, 0.0
        %v1726 = vmax.f32 %v1572, 0.0
        %v1727 = vmax.f32 %v1577, 0.0
        %v1728 = vmax.f32 %v1582, 0.0
        %v1729 = vmax.f32 %v1587, 0.0
        %v1730 = vmax.f32 %v1592, 0.0
        %v1731 = vmax.f32 %v1597, 0.0
        %v1732 = vmax.f32 %v1602, 0.0
        %v1733 = vmax.f32 %v1607, 0.0
        %v1734 = vmax.f32 %v1612, 0.0
        %v1735 = vmax.f32 %v1617, 0.0
        %v1736 = vmax.f32 %v1622, 0.0
        %v1737 = vmax.f32 %v1627, 0.0
        %v1738 = vmax.f32 %v1632, 0.0
        %v1739 = vmax.f32 %v1637, 0.0
        %v1740 = vmax.f32 %v1642, 0.0
        %v1741 = vmax.f32 %v1647, 0.0
        %v1742 = vmax.f32 %v1652, 0.0
        %v1743 = vmax.f32 %v1657, 0.0
        %v1744 = vmax.f32 %v1662, 0.0
        %v1745 = vmax.f32 %v1667, 0.0
        %v1746 = vmax.f32 %v1672, 0.0
        %v1747 = vmax.f32 %v1677, 0.0
        %v1748 = vmax.f32 %v1682, 0.0
        %v1749 = vmax.f32 %v1687, 0.0
        %v1750 = vmax.f32 %v1692, 0.0
        %v1751 = vmax.f32 %v1697, 0.0
        %v1752 = vmax.f32 %v1702, 0.0
        %v1753 = vmax.f32 %v1707, 0.0
        %v1754 = vmax.f32 %v1712, 0.0
        %v1755 = vmax.f32 %v1717, 0.0
        %v1756 = vmax.f32 %v1722, 0.0
        %v1757 = vld [vmem:[%s4] sm:$0xff]
        %v1758 = vld [vmem:[%s4 + $0x8] sm:$0xff]
        %vm1759 = vcmask 130048
        %v1761 = vsel %vm1759, %v1725, 0
        %v1764 = vsel %vm1759, %v1726, 0
        %v1767 = vsel %vm1759, %v1727, 0
        %v1770 = vsel %vm1759, %v1728, 0
        %v1773 = vsel %vm1759, %v1729, 0
        %v1776 = vsel %vm1759, %v1730, 0
        %v1779 = vsel %vm1759, %v1731, 0
        %v1782 = vsel %vm1759, %v1732, 0
        %v1785 = vsel %vm1759, %v1733, 0
        %v1788 = vsel %vm1759, %v1734, 0
        %v1791 = vsel %vm1759, %v1735, 0
        %v1794 = vsel %vm1759, %v1736, 0
        %v1797 = vsel %vm1759, %v1737, 0
        %v1800 = vsel %vm1759, %v1738, 0
        %v1803 = vsel %vm1759, %v1739, 0
        %v1806 = vsel %vm1759, %v1740, 0
        %v1809 = vsel %vm1759, %v1741, 0
        %v1812 = vsel %vm1759, %v1742, 0
        %v1815 = vsel %vm1759, %v1743, 0
        %v1818 = vsel %vm1759, %v1744, 0
        %v1821 = vsel %vm1759, %v1745, 0
        %v1824 = vsel %vm1759, %v1746, 0
        %v1827 = vsel %vm1759, %v1747, 0
        %v1830 = vsel %vm1759, %v1748, 0
        %v1833 = vsel %vm1759, %v1749, 0
        %v1836 = vsel %vm1759, %v1750, 0
        %v1839 = vsel %vm1759, %v1751, 0
        %v1842 = vsel %vm1759, %v1752, 0
        %v1845 = vsel %vm1759, %v1753, 0
        %v1848 = vsel %vm1759, %v1754, 0
        %v1851 = vsel %vm1759, %v1755, 0
        %v1854 = vsel %vm1759, %v1756, 0
        %1856 = vmatprep.subr.mxu0 0.0
        %1857 = vmatpush1.msra.mxu0 0.0
        %1858 = vmatprep.subr.mxu0 0.0
        %1859 = vmatpush1.msra.mxu0 0.0
        %1860 = vmatprep.subr.mxu0 0.0
        %1861 = vmatpush1.msra.mxu0 0.0
        %1862 = vmatprep.subr.mxu0 0.0
        %1863 = vmatpush1.msra.mxu0 0.0
        %1864 = vmatprep.subr.mxu0 0.0
        %1865 = vmatpush1.msra.mxu0 0.0
        %1866 = vmatprep.subr.mxu0 0.0
        %1867 = vmatpush1.msra.mxu0 0.0
        %1868 = vmatprep.subr.mxu0 0.0
        %1869 = vmatpush1.msra.mxu0 0.0
        %1870 = vmatprep.subr.mxu0 0.0
        %1871 = vmatpush1.msra.mxu0 0.0
        %1872 = vmatprep.subr.mxu0 0.0
        %1873 = vmatpush1.msra.mxu0 0.0
        %1874 = vmatprep.subr.mxu0 0.0
        %1875 = vmatpush1.msra.mxu0 0.0
        %1876 = vmatprep.subr.mxu0 0.0
        %1877 = vmatpush1.msra.mxu0 0.0
        %1878 = vmatprep.subr.mxu0 0.0
        %1879 = vmatpush1.msra.mxu0 0.0
        %1880 = vmatprep.subr.mxu0 0.0
        %1881 = vmatpush1.msra.mxu0 0.0
        %1882 = vmatprep.subr.mxu0 0.0
        %1883 = vmatpush1.msra.mxu0 0.0
        %1884 = vmatprep.subr.mxu0 0.0
        %1885 = vmatpush1.msra.mxu0 %v1758
        %1886 = vmatprep.subr.mxu0 0.0
        %1887 = vmatpush1.msra.mxu0 %v1757
        %1888 = vmatprep.subr.mxu0 0.0
        %1889 = vmatpush2.msra.mxu0 0.0
        %1890 = vmatprep.subr.mxu0 0.0
        %1891 = vmatpush2.msra.mxu0 0.0
        %1892 = vmatprep.subr.mxu0 0.0
        %1893 = vmatpush2.msra.mxu0 0.0
        %1894 = vmatprep.subr.mxu0 0.0
        %1895 = vmatpush2.msra.mxu0 0.0
        %1896 = vmatprep.subr.mxu0 0.0
        %1897 = vmatpush2.msra.mxu0 0.0
        %1898 = vmatprep.subr.mxu0 0.0
        %1899 = vmatpush2.msra.mxu0 0.0
        %1900 = vmatprep.subr.mxu0 0.0
        %1901 = vmatpush2.msra.mxu0 0.0
        %1902 = vmatprep.subr.mxu0 0.0
        %1903 = vmatpush2.msra.mxu0 0.0
        %1904 = vmatprep.subr.mxu0 0.0
        %1905 = vmatpush2.msra.mxu0 0.0
        %1906 = vmatprep.subr.mxu0 0.0
        %1907 = vmatpush2.msra.mxu0 0.0
        %1908 = vmatprep.subr.mxu0 0.0
        %1909 = vmatpush2.msra.mxu0 0.0
        %1910 = vmatprep.subr.mxu0 0.0
        %1911 = vmatpush2.msra.mxu0 0.0
        %1912 = vmatprep.subr.mxu0 0.0
        %1913 = vmatpush2.msra.mxu0 0.0
        %1914 = vmatprep.subr.mxu0 0.0
        %1915 = vmatpush2.msra.mxu0 0.0
        %1916 = vmatprep.subr.mxu0 0.0
        %1917 = vmatpush2.msra.mxu0 0.0
        %1918 = vmatprep.subr.mxu0 0.0
        %1919 = vmatpush2.msra.mxu0 0.0
        %1920 = vmatprep.mubr.f32.mxu0 0.0
        %1921 = vmatmul.mubr.f32.gmra.mxu0 %v1761
        %v1922 = vpop.f32.mrf.mxu0
        %v1923 = vadd.f32 0.0, %v1922
        %v1924 = vpop.f32.mrf.mxu0
        %1925 = vmatprep.mubr.f32.mxu0 0.0
        %1926 = vmatmul.mubr.f32.gmra.mxu0 %v1764
        %v1927 = vpop.f32.mrf.mxu0
        %v1928 = vadd.f32 0.0, %v1927
        %v1929 = vpop.f32.mrf.mxu0
        %1930 = vmatprep.mubr.f32.mxu0 0.0
        %1931 = vmatmul.mubr.f32.gmra.mxu0 %v1767
        %v1932 = vpop.f32.mrf.mxu0
        %v1933 = vadd.f32 0.0, %v1932
        %v1934 = vpop.f32.mrf.mxu0
        %1935 = vmatprep.mubr.f32.mxu0 0.0
        %1936 = vmatmul.mubr.f32.gmra.mxu0 %v1770
        %v1937 = vpop.f32.mrf.mxu0
        %v1938 = vadd.f32 0.0, %v1937
        %v1939 = vpop.f32.mrf.mxu0
        %1940 = vmatprep.mubr.f32.mxu0 0.0
        %1941 = vmatmul.mubr.f32.gmra.mxu0 %v1773
        %v1942 = vpop.f32.mrf.mxu0
        %v1943 = vadd.f32 0.0, %v1942
        %v1944 = vpop.f32.mrf.mxu0
        %1945 = vmatprep.mubr.f32.mxu0 0.0
        %1946 = vmatmul.mubr.f32.gmra.mxu0 %v1776
        %v1947 = vpop.f32.mrf.mxu0
        %v1948 = vadd.f32 0.0, %v1947
        %v1949 = vpop.f32.mrf.mxu0
        %1950 = vmatprep.mubr.f32.mxu0 0.0
        %1951 = vmatmul.mubr.f32.gmra.mxu0 %v1779
        %v1952 = vpop.f32.mrf.mxu0
        %v1953 = vadd.f32 0.0, %v1952
        %v1954 = vpop.f32.mrf.mxu0
        %1955 = vmatprep.mubr.f32.mxu0 0.0
        %1956 = vmatmul.mubr.f32.gmra.mxu0 %v1782
        %v1957 = vpop.f32.mrf.mxu0
        %v1958 = vadd.f32 0.0, %v1957
        %v1959 = vpop.f32.mrf.mxu0
        %1960 = vmatprep.mubr.f32.mxu0 0.0
        %1961 = vmatmul.mubr.f32.gmra.mxu0 %v1785
        %v1962 = vpop.f32.mrf.mxu0
        %v1963 = vadd.f32 0.0, %v1962
        %v1964 = vpop.f32.mrf.mxu0
        %1965 = vmatprep.mubr.f32.mxu0 0.0
        %1966 = vmatmul.mubr.f32.gmra.mxu0 %v1788
        %v1967 = vpop.f32.mrf.mxu0
        %v1968 = vadd.f32 0.0, %v1967
        %v1969 = vpop.f32.mrf.mxu0
        %1970 = vmatprep.mubr.f32.mxu0 0.0
        %1971 = vmatmul.mubr.f32.gmra.mxu0 %v1791
        %v1972 = vpop.f32.mrf.mxu0
        %v1973 = vadd.f32 0.0, %v1972
        %v1974 = vpop.f32.mrf.mxu0
        %1975 = vmatprep.mubr.f32.mxu0 0.0
        %1976 = vmatmul.mubr.f32.gmra.mxu0 %v1794
        %v1977 = vpop.f32.mrf.mxu0
        %v1978 = vadd.f32 0.0, %v1977
        %v1979 = vpop.f32.mrf.mxu0
        %1980 = vmatprep.mubr.f32.mxu0 0.0
        %1981 = vmatmul.mubr.f32.gmra.mxu0 %v1797
        %v1982 = vpop.f32.mrf.mxu0
        %v1983 = vadd.f32 0.0, %v1982
        %v1984 = vpop.f32.mrf.mxu0
        %1985 = vmatprep.mubr.f32.mxu0 0.0
        %1986 = vmatmul.mubr.f32.gmra.mxu0 %v1800
        %v1987 = vpop.f32.mrf.mxu0
        %v1988 = vadd.f32 0.0, %v1987
        %v1989 = vpop.f32.mrf.mxu0
        %1990 = vmatprep.mubr.f32.mxu0 0.0
        %1991 = vmatmul.mubr.f32.gmra.mxu0 %v1803
        %v1992 = vpop.f32.mrf.mxu0
        %v1993 = vadd.f32 0.0, %v1992
        %v1994 = vpop.f32.mrf.mxu0
        %1995 = vmatprep.mubr.f32.mxu0 0.0
        %1996 = vmatmul.mubr.f32.gmra.mxu0 %v1806
        %v1997 = vpop.f32.mrf.mxu0
        %v1998 = vadd.f32 0.0, %v1997
        %v1999 = vpop.f32.mrf.mxu0
        %2000 = vmatprep.mubr.f32.mxu0 0.0
        %2001 = vmatmul.mubr.f32.gmra.mxu0 %v1809
        %v2002 = vpop.f32.mrf.mxu0
        %v2003 = vadd.f32 0.0, %v2002
        %v2004 = vpop.f32.mrf.mxu0
        %2005 = vmatprep.mubr.f32.mxu0 0.0
        %2006 = vmatmul.mubr.f32.gmra.mxu0 %v1812
        %v2007 = vpop.f32.mrf.mxu0
        %v2008 = vadd.f32 0.0, %v2007
        %v2009 = vpop.f32.mrf.mxu0
        %2010 = vmatprep.mubr.f32.mxu0 0.0
        %2011 = vmatmul.mubr.f32.gmra.mxu0 %v1815
        %v2012 = vpop.f32.mrf.mxu0
        %v2013 = vadd.f32 0.0, %v2012
        %v2014 = vpop.f32.mrf.mxu0
        %2015 = vmatprep.mubr.f32.mxu0 0.0
        %2016 = vmatmul.mubr.f32.gmra.mxu0 %v1818
        %v2017 = vpop.f32.mrf.mxu0
        %v2018 = vadd.f32 0.0, %v2017
        %v2019 = vpop.f32.mrf.mxu0
        %2020 = vmatprep.mubr.f32.mxu0 0.0
        %2021 = vmatmul.mubr.f32.gmra.mxu0 %v1821
        %v2022 = vpop.f32.mrf.mxu0
        %v2023 = vadd.f32 0.0, %v2022
        %v2024 = vpop.f32.mrf.mxu0
        %2025 = vmatprep.mubr.f32.mxu0 0.0
        %2026 = vmatmul.mubr.f32.gmra.mxu0 %v1824
        %v2027 = vpop.f32.mrf.mxu0
        %v2028 = vadd.f32 0.0, %v2027
        %v2029 = vpop.f32.mrf.mxu0
        %2030 = vmatprep.mubr.f32.mxu0 0.0
        %2031 = vmatmul.mubr.f32.gmra.mxu0 %v1827
        %v2032 = vpop.f32.mrf.mxu0
        %v2033 = vadd.f32 0.0, %v2032
        %v2034 = vpop.f32.mrf.mxu0
        %2035 = vmatprep.mubr.f32.mxu0 0.0
        %2036 = vmatmul.mubr.f32.gmra.mxu0 %v1830
        %v2037 = vpop.f32.mrf.mxu0
        %v2038 = vadd.f32 0.0, %v2037
        %v2039 = vpop.f32.mrf.mxu0
        %2040 = vmatprep.mubr.f32.mxu0 0.0
        %2041 = vmatmul.mubr.f32.gmra.mxu0 %v1833
        %v2042 = vpop.f32.mrf.mxu0
        %v2043 = vadd.f32 0.0, %v2042
        %v2044 = vpop.f32.mrf.mxu0
        %2045 = vmatprep.mubr.f32.mxu0 0.0
        %2046 = vmatmul.mubr.f32.gmra.mxu0 %v1836
        %v2047 = vpop.f32.mrf.mxu0
        %v2048 = vadd.f32 0.0, %v2047
        %v2049 = vpop.f32.mrf.mxu0
        %2050 = vmatprep.mubr.f32.mxu0 0.0
        %2051 = vmatmul.mubr.f32.gmra.mxu0 %v1839
        %v2052 = vpop.f32.mrf.mxu0
        %v2053 = vadd.f32 0.0, %v2052
        %v2054 = vpop.f32.mrf.mxu0
        %2055 = vmatprep.mubr.f32.mxu0 0.0
        %2056 = vmatmul.mubr.f32.gmra.mxu0 %v1842
        %v2057 = vpop.f32.mrf.mxu0
        %v2058 = vadd.f32 0.0, %v2057
        %v2059 = vpop.f32.mrf.mxu0
        %2060 = vmatprep.mubr.f32.mxu0 0.0
        %2061 = vmatmul.mubr.f32.gmra.mxu0 %v1845
        %v2062 = vpop.f32.mrf.mxu0
        %v2063 = vadd.f32 0.0, %v2062
        %v2064 = vpop.f32.mrf.mxu0
        %2065 = vmatprep.mubr.f32.mxu0 0.0
        %2066 = vmatmul.mubr.f32.gmra.mxu0 %v1848
        %v2067 = vpop.f32.mrf.mxu0
        %v2068 = vadd.f32 0.0, %v2067
        %v2069 = vpop.f32.mrf.mxu0
        %2070 = vmatprep.mubr.f32.mxu0 0.0
        %2071 = vmatmul.mubr.f32.gmra.mxu0 %v1851
        %v2072 = vpop.f32.mrf.mxu0
        %v2073 = vadd.f32 0.0, %v2072
        %v2074 = vpop.f32.mrf.mxu0
        %2075 = vmatprep.mubr.f32.mxu0 0.0
        %2076 = vmatmul.mubr.f32.gmra.mxu0 %v1854
        %v2077 = vpop.f32.mrf.mxu0
        %v2078 = vadd.f32 0.0, %v2077
        %v2079 = vpop.f32.mrf.mxu0
        %2080 = vdwg.mxu0
        %v2081 = vpack.c.bf16 %v1928, %v1923
        %v2082 = vpack.c.bf16 %v1938, %v1933
        %v2083 = vpack.c.bf16 %v1948, %v1943
        %v2084 = vpack.c.bf16 %v1958, %v1953
        %v2085 = vpack.c.bf16 %v1968, %v1963
        %v2086 = vpack.c.bf16 %v1978, %v1973
        %v2087 = vpack.c.bf16 %v1988, %v1983
        %v2088 = vpack.c.bf16 %v1998, %v1993
        %v2089 = vpack.c.bf16 %v2008, %v2003
        %v2090 = vpack.c.bf16 %v2018, %v2013
        %v2091 = vpack.c.bf16 %v2028, %v2023
        %v2092 = vpack.c.bf16 %v2038, %v2033
        %v2093 = vpack.c.bf16 %v2048, %v2043
        %v2094 = vpack.c.bf16 %v2058, %v2053
        %v2095 = vpack.c.bf16 %v2068, %v2063
        %v2096 = vpack.c.bf16 %v2078, %v2073
        %v2113 = vunpack.c.l.b16 %v2081
        %v2114 = vunpack.c.h.b16 %v2081
        %v2115 = vunpack.c.l.b16 %v2082
        %v2116 = vunpack.c.h.b16 %v2082
        %v2117 = vunpack.c.l.b16 %v2083
        %v2118 = vunpack.c.h.b16 %v2083
        %v2119 = vunpack.c.l.b16 %v2084
        %v2120 = vunpack.c.h.b16 %v2084
        %v2121 = vunpack.c.l.b16 %v2085
        %v2122 = vunpack.c.h.b16 %v2085
        %v2123 = vunpack.c.l.b16 %v2086
        %v2124 = vunpack.c.h.b16 %v2086
        %v2125 = vunpack.c.l.b16 %v2087
        %v2126 = vunpack.c.h.b16 %v2087
        %v2127 = vunpack.c.l.b16 %v2088
        %v2128 = vunpack.c.h.b16 %v2088
        %v2129 = vunpack.c.l.b16 %v2089
        %v2130 = vunpack.c.h.b16 %v2089
        %v2131 = vunpack.c.l.b16 %v2090
        %v2132 = vunpack.c.h.b16 %v2090
        %v2133 = vunpack.c.l.b16 %v2091
        %v2134 = vunpack.c.h.b16 %v2091
        %v2135 = vunpack.c.l.b16 %v2092
        %v2136 = vunpack.c.h.b16 %v2092
        %v2137 = vunpack.c.l.b16 %v2093
        %v2138 = vunpack.c.h.b16 %v2093
        %v2139 = vunpack.c.l.b16 %v2094
        %v2140 = vunpack.c.h.b16 %v2094
        %v2141 = vunpack.c.l.b16 %v2095
        %v2142 = vunpack.c.h.b16 %v2095
        %v2143 = vunpack.c.l.b16 %v2096
        %v2144 = vunpack.c.h.b16 %v2096
        %v2145 = vpack.c.b16 %v2113, %v2113
        %v2146 = vpack.c.b16 %v2114, %v2114
        %v2147 = vpack.c.b16 %v2115, %v2115
        %v2148 = vpack.c.b16 %v2116, %v2116
        %v2149 = vpack.c.b16 %v2117, %v2117
        %v2150 = vpack.c.b16 %v2118, %v2118
        %v2151 = vpack.c.b16 %v2119, %v2119
        %v2152 = vpack.c.b16 %v2120, %v2120
        %v2153 = vpack.c.b16 %v2121, %v2121
        %v2154 = vpack.c.b16 %v2122, %v2122
        %v2155 = vpack.c.b16 %v2123, %v2123
        %v2156 = vpack.c.b16 %v2124, %v2124
        %v2157 = vpack.c.b16 %v2125, %v2125
        %v2158 = vpack.c.b16 %v2126, %v2126
        %v2159 = vpack.c.b16 %v2127, %v2127
        %v2160 = vpack.c.b16 %v2128, %v2128
        %v2161 = vpack.c.b16 %v2129, %v2129
        %v2162 = vpack.c.b16 %v2130, %v2130
        %v2163 = vpack.c.b16 %v2131, %v2131
        %v2164 = vpack.c.b16 %v2132, %v2132
        %v2165 = vpack.c.b16 %v2133, %v2133
        %v2166 = vpack.c.b16 %v2134, %v2134
        %v2167 = vpack.c.b16 %v2135, %v2135
        %v2168 = vpack.c.b16 %v2136, %v2136
        %v2169 = vpack.c.b16 %v2137, %v2137
        %v2170 = vpack.c.b16 %v2138, %v2138
        %v2171 = vpack.c.b16 %v2139, %v2139
        %v2172 = vpack.c.b16 %v2140, %v2140
        %v2173 = vpack.c.b16 %v2141, %v2141
        %v2174 = vpack.c.b16 %v2142, %v2142
        %v2175 = vpack.c.b16 %v2143, %v2143
        %v2176 = vpack.c.b16 %v2144, %v2144
        %vm2209 = vcmask 27648
        %2210 = vst.msk [vmem:[%s257] sm:$0xf] %vm2209, %v2145
        %2211 = vst.msk [vmem:[%s257 + $0x4] sm:$0xf] %vm2209, %v2146
        %2212 = vst.msk [vmem:[%s257 + $0x8] sm:$0xf] %vm2209, %v2147
        %2213 = vst.msk [vmem:[%s257 + $0xc] sm:$0xf] %vm2209, %v2148
        %2214 = vst.msk [vmem:[%s257 + $0x10] sm:$0xf] %vm2209, %v2149
        %2215 = vst.msk [vmem:[%s257 + $0x14] sm:$0xf] %vm2209, %v2150
        %2216 = vst.msk [vmem:[%s257 + $0x18] sm:$0xf] %vm2209, %v2151
        %2217 = vst.msk [vmem:[%s257 + $0x1c] sm:$0xf] %vm2209, %v2152
        %2218 = vst.msk [vmem:[%s257 + $0x20] sm:$0xf] %vm2209, %v2153
        %2219 = vst.msk [vmem:[%s257 + $0x24] sm:$0xf] %vm2209, %v2154
        %2220 = vst.msk [vmem:[%s257 + $0x28] sm:$0xf] %vm2209, %v2155
        %2221 = vst.msk [vmem:[%s257 + $0x2c] sm:$0xf] %vm2209, %v2156
        %2222 = vst.msk [vmem:[%s257 + $0x30] sm:$0xf] %vm2209, %v2157
        %2223 = vst.msk [vmem:[%s257 + $0x34] sm:$0xf] %vm2209, %v2158
        %2224 = vst.msk [vmem:[%s257 + $0x38] sm:$0xf] %vm2209, %v2159
        %2225 = vst.msk [vmem:[%s257 + $0x3c] sm:$0xf] %vm2209, %v2160
        %2226 = vst.msk [vmem:[%s257 + $0x40] sm:$0xf] %vm2209, %v2161
        %2227 = vst.msk [vmem:[%s257 + $0x44] sm:$0xf] %vm2209, %v2162
        %2228 = vst.msk [vmem:[%s257 + $0x48] sm:$0xf] %vm2209, %v2163
        %2229 = vst.msk [vmem:[%s257 + $0x4c] sm:$0xf] %vm2209, %v2164
        %2230 = vst.msk [vmem:[%s257 + $0x50] sm:$0xf] %vm2209, %v2165
        %2231 = vst.msk [vmem:[%s257 + $0x54] sm:$0xf] %vm2209, %v2166
        %2232 = vst.msk [vmem:[%s257 + $0x58] sm:$0xf] %vm2209, %v2167
        %2233 = vst.msk [vmem:[%s257 + $0x5c] sm:$0xf] %vm2209, %v2168
        %2234 = vst.msk [vmem:[%s257 + $0x60] sm:$0xf] %vm2209, %v2169
        %2235 = vst.msk [vmem:[%s257 + $0x64] sm:$0xf] %vm2209, %v2170
        %2236 = vst.msk [vmem:[%s257 + $0x68] sm:$0xf] %vm2209, %v2171
        %2237 = vst.msk [vmem:[%s257 + $0x6c] sm:$0xf] %vm2209, %v2172
        %2238 = vst.msk [vmem:[%s257 + $0x70] sm:$0xf] %vm2209, %v2173
        %2239 = vst.msk [vmem:[%s257 + $0x74] sm:$0xf] %vm2209, %v2174
        %2240 = vst.msk [vmem:[%s257 + $0x78] sm:$0xf] %vm2209, %v2175
        %2241 = vst.msk [vmem:[%s257 + $0x7c] sm:$0xf] %vm2209, %v2176
      $region48: #{_lambda_.2} parent=39 // pred_fallthru
        _
      %s2242 = smul.u32 32, %s20
      %p2243 = scmp.lt.s32.totalorder %s2242, 63
      %s2244 = scalar_select %p2243, %s2242, 63
      %s2245 = smul.addr %s2244, 4
      %s2246 = scalar_lea.vmem %s5, %s2245
      // Predicated region
      $region49: #{_lambda_.2} parent=39 // pred_check
        %p2247 = pneg %p158
      $region50: #{_lambda_.2} parent=39 // pred_check_branch
        %2249 = sbr.rel (%p2247) target = $region52
      $region51: #{_lambda_.2} parent=39 // pred_region
        %s2250 = smul.u32 32, %s20
      $region52: #{_lambda_.2} parent=39 // pred_fallthru
        _
    $region40: #{_lambda_.2} parent=5 // pred_fallthru
      _
    %p2251 = scmp.le.s32.totalorder 2, %s11
    // Predicated region
    $region53: #{_lambda_.2} parent=5 // pred_check
      %p2252 = pneg %p2251
    $region54: #{_lambda_.2} parent=5 // pred_check_branch
      %2254 = sbr.rel (%p2252) target = $region56
    $region55: #{_lambda_.2} parent=5 // pred_region
      %s2255 = ssub.s32 %s11, 2
      // Predicated region
      $region57: #{_lambda_.2} parent=55 // pred_check
        %p2256 = pneg %p164
      $region58: #{_lambda_.2} parent=55 // pred_check_branch
        %2258 = sbr.rel (%p2256) target = $region60
      $region59: #{_lambda_.2} parent=55 // pred_region
        %s2259 = smul.u32 32, %s22
        %p2260 = scmp.lt.s32.totalorder %s2259, 63
        %s2261 = scalar_select %p2260, %s2259, 63
        %s2262 = smul.addr %s2261, 4
        %s2263 = scalar_lea.vmem %s5, %s2262
      $region60: #{_lambda_.2} parent=55 // pred_fallthru
        _
    $region56: #{_lambda_.2} parent=5 // pred_fallthru
      _
  $region6: #{_lambda_.2} parent=0 // loop_footer
    %s15 = sadd.s32 1, %s11
  $region7: #{_lambda_.2} parent=0 // loop_footer_branch
    %10 = sbr.rel target = $region3
  $region8: #{_lambda_.2} parent=0 // loop_exit
    _

// kernel: _lambda_.3
$region0: #{_lambda_.3}
  #allocation0 [shape = 'u32[]', space=smem, size = 0x4, offset = 0x4, fixed_abs, tag = 'smem constant byte address 0x4 - core index']
  #allocation1 [shape = 'u32[144,128]{1,0:T(1,128)}', space=vmem, size = 0x12000, scoped, tag = 'internal scratch']
  #allocation2 [shape = 'f32[256,4]{1,0:T(8,128)}', space=vmem, size = 0x20000, scoped, tag = 'scratch operand']
  %s0 = inlined_call_operand.vmem [shape: bf16[512,512], index: 0, kind: input, shape index: {}]
  %s1 = inlined_call_operand.vmem [shape: bf16[512,4], index: 1, kind: input, shape index: {}]
  %s2 = inlined_call_operand.vmem [shape: f32[1,4], index: 2, kind: input, shape index: {}]
  %s3 = inlined_call_operand.vmem [shape: f32[512,4], index: 3, kind: output, shape index: {}]
  %s4 = sld [smem:[#allocation0]]
  $region53: #{_lambda_.3} parent=0
    _
  %s6 = ssub.s32 1, %s4
  %s7 = scalar_select 0, %s6, %s4
  loop: start=0, step=1, limit=4
  $region2: #{_lambda_.3} parent=0 // loop_pre_header
    _
  $region3: #{_lambda_.3} parent=0 // loop_header
    %s9 = sphi 0, %s13
    %p10 = scmp.ge.s32.totalorder %s9, 4
    %s16 = sphi 0, %s28
    %s17 = sphi 0, %s24
    %s18 = sphi 0, %s16
    %s19 = sphi 0, %s17
    %s20 = sphi 0, %s18
    %s21 = sphi 0, %s19
    %s33 = sphi 0, %s35
    %s36 = sphi 0, %s33
    %s37 = sphi 0, %s36
    %s53 = sphi 0, %s37
    %s57 = sphi 0, %s57
    %s59 = sphi 0, %s57
    %s60 = sphi 0, %s59
    %s74 = sphi 0, %s60
    %s78 = sphi 0, %s78
    %s80 = sphi 0, %s78
    %s81 = sphi 0, %s80
    %s95 = sphi 0, %s81
    %s101 = sphi 0, %s103
    %s104 = sphi 0, %s101
    %s105 = sphi 0, %s104
    %s121 = sphi 0, %s105
  $region4: #{_lambda_.3} parent=0 // loop_header_branch
    %12 = sbr.rel (%p10) target = $region8
  $region5: #{_lambda_.3} parent=0 // loop_body
    %s14 = ssub.s32 %s9, 1
    %s15 = ssub.s32 %s9, 2
    %s22 = sadd.s32 1, %s17
    %p23 = scmp.ge.s32.totalorder %s22, 1
    %s24 = scalar_select %p23, 0, %s22
    %s25 = sadd.s32 1, %s16
    %s26 = scalar_select %p23, %s25, %s16
    %p27 = scmp.ge.s32.totalorder %s26, 2
    %s28 = scalar_select %p27, 0, %s26
    %s29 = ssub.s32 %s16, %s28
    %s30 = ssub.s32 %s17, %s24
    %s31 = sor.u32 %s29, %s30
    %p32 = scmp.eq.s32.totalorder %s31, 0
    %s34 = sadd.s32 %s33, 1
    %s35 = scalar_select %p32, %s33, %s34
    %p38 = pneg %p32
    %p39 = scmp.eq.s32.totalorder %s9, 1
    %p40 = por %p38, %p39
    %p41 = scmp.ne.s32.totalorder %s33, %s36
    %p42 = scmp.eq.s32.totalorder %s9, 0
    %p43 = por %p41, %p42
    %p44 = scmp.ne.s32.totalorder %s33, %s36
    %p45 = scmp.eq.s32.totalorder %s14, 1
    %p46 = por %p44, %p45
    %p47 = scmp.ne.s32.totalorder %s36, %s37
    %p48 = scmp.eq.s32.totalorder %s14, 0
    %p49 = por %p47, %p48
    %p50 = scmp.ne.s32.totalorder %s36, %s37
    %p51 = scmp.eq.s32.totalorder %s15, 1
    %p52 = por %p50, %p51
    %p54 = scmp.ne.s32.totalorder %s37, %s53
    %p55 = scmp.eq.s32.totalorder %s15, 0
    %p56 = por %p54, %p55
    %s58 = sadd.s32 %s57, 1
    %p61 = scmp.eq.s32.totalorder %s9, 1
    %p62 = scmp.ne.s32.totalorder %s57, %s59
    %p63 = scmp.eq.s32.totalorder %s9, 0
    %p64 = por %p62, %p63
    %p65 = scmp.ne.s32.totalorder %s57, %s59
    %p66 = scmp.eq.s32.totalorder %s14, 1
    %p67 = por %p65, %p66
    %p68 = scmp.ne.s32.totalorder %s59, %s60
    %p69 = scmp.eq.s32.totalorder %s14, 0
    %p70 = por %p68, %p69
    %p71 = scmp.ne.s32.totalorder %s59, %s60
    %p72 = scmp.eq.s32.totalorder %s15, 1
    %p73 = por %p71, %p72
    %p75 = scmp.ne.s32.totalorder %s60, %s74
    %p76 = scmp.eq.s32.totalorder %s15, 0
    %p77 = por %p75, %p76
    %s79 = sadd.s32 %s78, 1
    %p82 = scmp.eq.s32.totalorder %s9, 1
    %p83 = scmp.ne.s32.totalorder %s78, %s80
    %p84 = scmp.eq.s32.totalorder %s9, 0
    %p85 = por %p83, %p84
    %p86 = scmp.ne.s32.totalorder %s78, %s80
    %p87 = scmp.eq.s32.totalorder %s14, 1
    %p88 = por %p86, %p87
    %p89 = scmp.ne.s32.totalorder %s80, %s81
    %p90 = scmp.eq.s32.totalorder %s14, 0
    %p91 = por %p89, %p90
    %p92 = scmp.ne.s32.totalorder %s80, %s81
    %p93 = scmp.eq.s32.totalorder %s15, 1
    %p94 = por %p92, %p93
    %p96 = scmp.ne.s32.totalorder %s81, %s95
    %p97 = scmp.eq.s32.totalorder %s15, 0
    %p98 = por %p96, %p97
    %s99 = ssub.s32 %s16, %s28
    %p100 = scmp.eq.s32.totalorder %s99, 0
    %s102 = sadd.s32 %s101, 1
    %s103 = scalar_select %p100, %s101, %s102
    %p106 = pneg %p100
    %p107 = scmp.eq.s32.totalorder %s9, 1
    %p108 = por %p106, %p107
    %p109 = scmp.ne.s32.totalorder %s101, %s104
    %p110 = scmp.eq.s32.totalorder %s9, 0
    %p111 = por %p109, %p110
    %p112 = scmp.ne.s32.totalorder %s101, %s104
    %p113 = scmp.eq.s32.totalorder %s14, 1
    %p114 = por %p112, %p113
    %p115 = scmp.ne.s32.totalorder %s104, %s105
    %p116 = scmp.eq.s32.totalorder %s14, 0
    %p117 = por %p115, %p116
    %p118 = scmp.ne.s32.totalorder %s104, %s105
    %p119 = scmp.eq.s32.totalorder %s15, 1
    %p120 = por %p118, %p119
    %p122 = scmp.ne.s32.totalorder %s105, %s121
    %p123 = scmp.eq.s32.totalorder %s15, 0
    %p124 = por %p122, %p123
    %p125 = scmp.le.s32.totalorder 1, %s9
    %p126 = scmp.lt.s32.totalorder %s9, 3
    %p127 = pnand %p125, %p126
    %p128 = pneg %p127
    // Predicated region
    $region9: #{_lambda_.3} parent=5 // pred_check
      _
    $region10: #{_lambda_.3} parent=5 // pred_check_branch
      %130 = sbr.rel (%p127) target = $region12
    $region11: #{_lambda_.3} parent=5 // pred_region
      %s131 = ssub.s32 %s9, 1
      // Predicated region
      $region13: #{_lambda_.3} parent=11 // pred_check
        %p132 = pneg %p70
      $region14: #{_lambda_.3} parent=11 // pred_check_branch
        %134 = sbr.rel (%p132) target = $region16
      $region15: #{_lambda_.3} parent=11 // pred_region
        _
      $region16: #{_lambda_.3} parent=11 // pred_fallthru
        _
      // Predicated region
      $region17: #{_lambda_.3} parent=11 // pred_check
        %p135 = pneg %p91
      $region18: #{_lambda_.3} parent=11 // pred_check_branch
        %137 = sbr.rel (%p135) target = $region20
      $region19: #{_lambda_.3} parent=11 // pred_region
        _
      $region20: #{_lambda_.3} parent=11 // pred_fallthru
        _
    $region12: #{_lambda_.3} parent=5 // pred_fallthru
      _
    %p138 = scmp.lt.s32.totalorder %s9, 2
    // Predicated region
    $region21: #{_lambda_.3} parent=5 // pred_check
      %p139 = pneg %p138
    $region22: #{_lambda_.3} parent=5 // pred_check_branch
      %141 = sbr.rel (%p139) target = $region24
    $region23: #{_lambda_.3} parent=5 // pred_region
      // Predicated region
      $region25: #{_lambda_.3} parent=23 // pred_check
        %p142 = pneg %p43
      $region26: #{_lambda_.3} parent=23 // pred_check_branch
        %144 = sbr.rel (%p142) target = $region28
      $region27: #{_lambda_.3} parent=23 // pred_region
        %s145 = smul.u32 32, %s16
        %s146 = smul.u32 4, %s17
        %p147 = scmp.lt.s32.totalorder %s145, 63
        %s148 = scalar_select %p147, %s145, 63
        %p149 = scmp.lt.s32.totalorder %s146, 3
        %s150 = scalar_select %p149, %s146, 3
        %s151 = smul.addr %s148, 4
        %s152 = sadd.s32 %s150, %s151
        %s153 = smul.addr %s152, 4
        %s154 = scalar_lea.vmem %s0, %s153
        %s155 = smul.u32 32, %s16
        %s156 = smul.u32 4, %s17
      $region28: #{_lambda_.3} parent=23 // pred_fallthru
        _
    $region24: #{_lambda_.3} parent=5 // pred_fallthru
      _
    %p157 = scmp.le.s32.totalorder 1, %s9
    %p158 = scmp.lt.s32.totalorder %s9, 3
    %p159 = pnand %p157, %p158
    %p160 = pneg %p159
    // Predicated region
    $region29: #{_lambda_.3} parent=5 // pred_check
      _
    $region30: #{_lambda_.3} parent=5 // pred_check_branch
      %162 = sbr.rel (%p159) target = $region32
    $region31: #{_lambda_.3} parent=5 // pred_region
      %s163 = ssub.s32 %s9, 1
      %s164 = smul.u32 32, %s18
      %s165 = smul.u32 4, %s19
      %p166 = scmp.lt.s32.totalorder %s164, 63
      %s167 = scalar_select %p166, %s164, 63
      %p168 = scmp.lt.s32.totalorder %s165, 3
      %s169 = scalar_select %p168, %s165, 3
      %s170 = smul.addr %s167, 4
      %s171 = sadd.s32 %s169, %s170
      %s172 = smul.addr %s171, 4
      %s173 = scalar_lea.vmem %s0, %s172
      %p174 = pneg %p49
      %p175 = pneg %p46
      %p176 = pneg %p70
      %p177 = pneg %p67
      %p178 = pneg %p91
      %p179 = pneg %p88
      %p180 = pneg %p117
      %p181 = pneg %p114
      %s182 = smul.u32 32, %s18
      %p183 = scmp.lt.s32.totalorder %s182, 63
      %s184 = scalar_select %p183, %s182, 63
      %s185 = smul.addr %s184, 8
      %s186 = scalar_lea.vmem %s3, %s185
      %s187 = smul.u32 32, %s18
      %s188 = smul.u32 4, %s19
      %p189 = scmp.lt.s32.totalorder %s187, 63
      %s190 = scalar_select %p189, %s187, 63
      %p191 = scmp.lt.s32.totalorder %s188, 3
      %s192 = scalar_select %p191, %s188, 3
      %s193 = smul.addr %s190, 4
      %s194 = sadd.s32 %s192, %s193
      %s195 = smul.addr %s194, 4
      %s196 = scalar_lea.vmem %s0, %s195
      %s197 = smul.u32 32, %s18
      %s198 = smul.u32 4, %s19
      %s199 = smul.u32 32, %s18
      %p200 = scmp.lt.s32.totalorder %s199, 63
      %s201 = scalar_select %p200, %s199, 63
      %s202 = smul.addr %s201, 8
      %s203 = scalar_lea.vmem %s3, %s202
      %s204 = smul.u32 32, %s18
      %p206 = scmp.eq.s32.totalorder %s19, 0
      // Predicated region
      $region33: #{_lambda_.3} parent=31 // pred_check
        %p207 = pneg %p206
      $region34: #{_lambda_.3} parent=31 // pred_check_branch
        %209 = sbr.rel (%p207) target = $region36
      $region35: #{_lambda_.3} parent=31 // pred_region
        %vm210 = vcmask 31744
        %211 = vst.msk [vmem:[#allocation2] sm:$0xff] %vm210, 0.0
        %212 = vst.msk [vmem:[#allocation2 + $0x8] sm:$0xff] %vm210, 0.0
        %213 = vst.msk [vmem:[#allocation2 + $0x10] sm:$0xff] %vm210, 0.0
        %214 = vst.msk [vmem:[#allocation2 + $0x18] sm:$0xff] %vm210, 0.0
        %215 = vst.msk [vmem:[#allocation2 + $0x20] sm:$0xff] %vm210, 0.0
        %216 = vst.msk [vmem:[#allocation2 + $0x28] sm:$0xff] %vm210, 0.0
        %217 = vst.msk [vmem:[#allocation2 + $0x30] sm:$0xff] %vm210, 0.0
        %218 = vst.msk [vmem:[#allocation2 + $0x38] sm:$0xff] %vm210, 0.0
        %219 = vst.msk [vmem:[#allocation2 + $0x40] sm:$0xff] %vm210, 0.0
        %220 = vst.msk [vmem:[#allocation2 + $0x48] sm:$0xff] %vm210, 0.0
        %221 = vst.msk [vmem:[#allocation2 + $0x50] sm:$0xff] %vm210, 0.0
        %222 = vst.msk [vmem:[#allocation2 + $0x58] sm:$0xff] %vm210, 0.0
        %223 = vst.msk [vmem:[#allocation2 + $0x60] sm:$0xff] %vm210, 0.0
        %224 = vst.msk [vmem:[#allocation2 + $0x68] sm:$0xff] %vm210, 0.0
        %225 = vst.msk [vmem:[#allocation2 + $0x70] sm:$0xff] %vm210, 0.0
        %226 = vst.msk [vmem:[#allocation2 + $0x78] sm:$0xff] %vm210, 0.0
        %227 = vst.msk [vmem:[#allocation2 + $0x80] sm:$0xff] %vm210, 0.0
        %228 = vst.msk [vmem:[#allocation2 + $0x88] sm:$0xff] %vm210, 0.0
        %229 = vst.msk [vmem:[#allocation2 + $0x90] sm:$0xff] %vm210, 0.0
        %230 = vst.msk [vmem:[#allocation2 + $0x98] sm:$0xff] %vm210, 0.0
        %231 = vst.msk [vmem:[#allocation2 + $0xa0] sm:$0xff] %vm210, 0.0
        %232 = vst.msk [vmem:[#allocation2 + $0xa8] sm:$0xff] %vm210, 0.0
        %233 = vst.msk [vmem:[#allocation2 + $0xb0] sm:$0xff] %vm210, 0.0
        %234 = vst.msk [vmem:[#allocation2 + $0xb8] sm:$0xff] %vm210, 0.0
        %235 = vst.msk [vmem:[#allocation2 + $0xc0] sm:$0xff] %vm210, 0.0
        %236 = vst.msk [vmem:[#allocation2 + $0xc8] sm:$0xff] %vm210, 0.0
        %237 = vst.msk [vmem:[#allocation2 + $0xd0] sm:$0xff] %vm210, 0.0
        %238 = vst.msk [vmem:[#allocation2 + $0xd8] sm:$0xff] %vm210, 0.0
        %239 = vst.msk [vmem:[#allocation2 + $0xe0] sm:$0xff] %vm210, 0.0
        %240 = vst.msk [vmem:[#allocation2 + $0xe8] sm:$0xff] %vm210, 0.0
        %241 = vst.msk [vmem:[#allocation2 + $0xf0] sm:$0xff] %vm210, 0.0
        %242 = vst.msk [vmem:[#allocation2 + $0xf8] sm:$0xff] %vm210, 0.0
      $region36: #{_lambda_.3} parent=31 // pred_fallthru
        _
      %s243 = smul.u32 %s19, 512
      %s244 = sshra.s32 %s243, 3
      %s245 = sand.u32 %s243, 7
      %s246 = smul.addr %s244, 4
      %s247 = scalar_lea.vmem %s1, %s246
      %v248 = vld [vmem:[%s247] sm:$0xf]
      %v249 = vld [vmem:[%s247 + $0x4] sm:$0xf]
      %v250 = vld [vmem:[%s247 + $0x8] sm:$0xf]
      %v251 = vld [vmem:[%s247 + $0xc] sm:$0xf]
      %v252 = vld [vmem:[%s247 + $0x10] sm:$0xf]
      %v253 = vld [vmem:[%s247 + $0x14] sm:$0xf]
      %v254 = vld [vmem:[%s247 + $0x18] sm:$0xf]
      %v255 = vld [vmem:[%s247 + $0x1c] sm:$0xf]
      %v256 = vld [vmem:[%s247 + $0x20] sm:$0xf]
      %v257 = vld [vmem:[%s247 + $0x24] sm:$0xf]
      %v258 = vld [vmem:[%s247 + $0x28] sm:$0xf]
      %v259 = vld [vmem:[%s247 + $0x2c] sm:$0xf]
      %v260 = vld [vmem:[%s247 + $0x30] sm:$0xf]
      %v261 = vld [vmem:[%s247 + $0x34] sm:$0xf]
      %v262 = vld [vmem:[%s247 + $0x38] sm:$0xf]
      %v263 = vld [vmem:[%s247 + $0x3c] sm:$0xf]
      %v264 = vld [vmem:[%s247 + $0x40] sm:$0xf]
      %v265 = vld [vmem:[%s247 + $0x44] sm:$0xf]
      %v266 = vld [vmem:[%s247 + $0x48] sm:$0xf]
      %v267 = vld [vmem:[%s247 + $0x4c] sm:$0xf]
      %v268 = vld [vmem:[%s247 + $0x50] sm:$0xf]
      %v269 = vld [vmem:[%s247 + $0x54] sm:$0xf]
      %v270 = vld [vmem:[%s247 + $0x58] sm:$0xf]
      %v271 = vld [vmem:[%s247 + $0x5c] sm:$0xf]
      %v272 = vld [vmem:[%s247 + $0x60] sm:$0xf]
      %v273 = vld [vmem:[%s247 + $0x64] sm:$0xf]
      %v274 = vld [vmem:[%s247 + $0x68] sm:$0xf]
      %v275 = vld [vmem:[%s247 + $0x6c] sm:$0xf]
      %v276 = vld [vmem:[%s247 + $0x70] sm:$0xf]
      %v277 = vld [vmem:[%s247 + $0x74] sm:$0xf]
      %v278 = vld [vmem:[%s247 + $0x78] sm:$0xf]
      %v279 = vld [vmem:[%s247 + $0x7c] sm:$0xf]
      %v280 = vld [vmem:[%s247 + $0x80] sm:$0xf]
      %v281 = vld [vmem:[%s247 + $0x84] sm:$0xf]
      %v282 = vld [vmem:[%s247 + $0x88] sm:$0xf]
      %v283 = vld [vmem:[%s247 + $0x8c] sm:$0xf]
      %v284 = vld [vmem:[%s247 + $0x90] sm:$0xf]
      %v285 = vld [vmem:[%s247 + $0x94] sm:$0xf]
      %v286 = vld [vmem:[%s247 + $0x98] sm:$0xf]
      %v287 = vld [vmem:[%s247 + $0x9c] sm:$0xf]
      %v288 = vld [vmem:[%s247 + $0xa0] sm:$0xf]
      %v289 = vld [vmem:[%s247 + $0xa4] sm:$0xf]
      %v290 = vld [vmem:[%s247 + $0xa8] sm:$0xf]
      %v291 = vld [vmem:[%s247 + $0xac] sm:$0xf]
      %v292 = vld [vmem:[%s247 + $0xb0] sm:$0xf]
      %v293 = vld [vmem:[%s247 + $0xb4] sm:$0xf]
      %v294 = vld [vmem:[%s247 + $0xb8] sm:$0xf]
      %v295 = vld [vmem:[%s247 + $0xbc] sm:$0xf]
      %v296 = vld [vmem:[%s247 + $0xc0] sm:$0xf]
      %v297 = vld [vmem:[%s247 + $0xc4] sm:$0xf]
      %v298 = vld [vmem:[%s247 + $0xc8] sm:$0xf]
      %v299 = vld [vmem:[%s247 + $0xcc] sm:$0xf]
      %v300 = vld [vmem:[%s247 + $0xd0] sm:$0xf]
      %v301 = vld [vmem:[%s247 + $0xd4] sm:$0xf]
      %v302 = vld [vmem:[%s247 + $0xd8] sm:$0xf]
      %v303 = vld [vmem:[%s247 + $0xdc] sm:$0xf]
      %v304 = vld [vmem:[%s247 + $0xe0] sm:$0xf]
      %v305 = vld [vmem:[%s247 + $0xe4] sm:$0xf]
      %v306 = vld [vmem:[%s247 + $0xe8] sm:$0xf]
      %v307 = vld [vmem:[%s247 + $0xec] sm:$0xf]
      %v308 = vld [vmem:[%s247 + $0xf0] sm:$0xf]
      %v309 = vld [vmem:[%s247 + $0xf4] sm:$0xf]
      %v310 = vld [vmem:[%s247 + $0xf8] sm:$0xf]
      %v311 = vld [vmem:[%s247 + $0xfc] sm:$0xf]
      %v312 = vld [vmem:[#allocation2] sm:$0xff]
      %v313 = vld [vmem:[#allocation2 + $0x8] sm:$0xff]
      %v314 = vld [vmem:[#allocation2 + $0x10] sm:$0xff]
      %v315 = vld [vmem:[#allocation2 + $0x18] sm:$0xff]
      %v316 = vld [vmem:[#allocation2 + $0x20] sm:$0xff]
      %v317 = vld [vmem:[#allocation2 + $0x28] sm:$0xff]
      %v318 = vld [vmem:[#allocation2 + $0x30] sm:$0xff]
      %v319 = vld [vmem:[#allocation2 + $0x38] sm:$0xff]
      %v320 = vld [vmem:[#allocation2 + $0x40] sm:$0xff]
      %v321 = vld [vmem:[#allocation2 + $0x48] sm:$0xff]
      %v322 = vld [vmem:[#allocation2 + $0x50] sm:$0xff]
      %v323 = vld [vmem:[#allocation2 + $0x58] sm:$0xff]
      %v324 = vld [vmem:[#allocation2 + $0x60] sm:$0xff]
      %v325 = vld [vmem:[#allocation2 + $0x68] sm:$0xff]
      %v326 = vld [vmem:[#allocation2 + $0x70] sm:$0xff]
      %v327 = vld [vmem:[#allocation2 + $0x78] sm:$0xff]
      %v328 = vld [vmem:[#allocation2 + $0x80] sm:$0xff]
      %v329 = vld [vmem:[#allocation2 + $0x88] sm:$0xff]
      %v330 = vld [vmem:[#allocation2 + $0x90] sm:$0xff]
      %v331 = vld [vmem:[#allocation2 + $0x98] sm:$0xff]
      %v332 = vld [vmem:[#allocation2 + $0xa0] sm:$0xff]
      %v333 = vld [vmem:[#allocation2 + $0xa8] sm:$0xff]
      %v334 = vld [vmem:[#allocation2 + $0xb0] sm:$0xff]
      %v335 = vld [vmem:[#allocation2 + $0xb8] sm:$0xff]
      %v336 = vld [vmem:[#allocation2 + $0xc0] sm:$0xff]
      %v337 = vld [vmem:[#allocation2 + $0xc8] sm:$0xff]
      %v338 = vld [vmem:[#allocation2 + $0xd0] sm:$0xff]
      %v339 = vld [vmem:[#allocation2 + $0xd8] sm:$0xff]
      %v340 = vld [vmem:[#allocation2 + $0xe0] sm:$0xff]
      %v341 = vld [vmem:[#allocation2 + $0xe8] sm:$0xff]
      %v342 = vld [vmem:[#allocation2 + $0xf0] sm:$0xff]
      %v343 = vld [vmem:[#allocation2 + $0xf8] sm:$0xff]
      %v344 = vld [vmem:[%s196] sm:$0xff]
      %v345 = vld [vmem:[%s196 + $0x8] sm:$0xff]
      %v346 = vld [vmem:[%s196 + $0x10] sm:$0xff]
      %v347 = vld [vmem:[%s196 + $0x18] sm:$0xff]
      %v348 = vld [vmem:[%s196 + $0x20] sm:$0xff]
      %v349 = vld [vmem:[%s196 + $0x28] sm:$0xff]
      %v350 = vld [vmem:[%s196 + $0x30] sm:$0xff]
      %v351 = vld [vmem:[%s196 + $0x38] sm:$0xff]
      %v352 = vld [vmem:[%s196 + $0x40] sm:$0xff]
      %v353 = vld [vmem:[%s196 + $0x48] sm:$0xff]
      %v354 = vld [vmem:[%s196 + $0x50] sm:$0xff]
      %v355 = vld [vmem:[%s196 + $0x58] sm:$0xff]
      %v356 = vld [vmem:[%s196 + $0x60] sm:$0xff]
      %v357 = vld [vmem:[%s196 + $0x68] sm:$0xff]
      %v358 = vld [vmem:[%s196 + $0x70] sm:$0xff]
      %v359 = vld [vmem:[%s196 + $0x78] sm:$0xff]
      %v360 = vld [vmem:[%s196 + $0x80] sm:$0xff]
      %v361 = vld [vmem:[%s196 + $0x88] sm:$0xff]
      %v362 = vld [vmem:[%s196 + $0x90] sm:$0xff]
      %v363 = vld [vmem:[%s196 + $0x98] sm:$0xff]
      %v364 = vld [vmem:[%s196 + $0xa0] sm:$0xff]
      %v365 = vld [vmem:[%s196 + $0xa8] sm:$0xff]
      %v366 = vld [vmem:[%s196 + $0xb0] sm:$0xff]
      %v367 = vld [vmem:[%s196 + $0xb8] sm:$0xff]
      %v368 = vld [vmem:[%s196 + $0xc0] sm:$0xff]
      %v369 = vld [vmem:[%s196 + $0xc8] sm:$0xff]
      %v370 = vld [vmem:[%s196 + $0xd0] sm:$0xff]
      %v371 = vld [vmem:[%s196 + $0xd8] sm:$0xff]
      %v372 = vld [vmem:[%s196 + $0xe0] sm:$0xff]
      %v373 = vld [vmem:[%s196 + $0xe8] sm:$0xff]
      %v374 = vld [vmem:[%s196 + $0xf0] sm:$0xff]
      %v375 = vld [vmem:[%s196 + $0xf8] sm:$0xff]
      %v376 = vld [vmem:[%s196 + $0x100] sm:$0xff]
      %v377 = vld [vmem:[%s196 + $0x108] sm:$0xff]
      %v378 = vld [vmem:[%s196 + $0x110] sm:$0xff]
      %v379 = vld [vmem:[%s196 + $0x118] sm:$0xff]
      %v380 = vld [vmem:[%s196 + $0x120] sm:$0xff]
      %v381 = vld [vmem:[%s196 + $0x128] sm:$0xff]
      %v382 = vld [vmem:[%s196 + $0x130] sm:$0xff]
      %v383 = vld [vmem:[%s196 + $0x138] sm:$0xff]
      %v384 = vld [vmem:[%s196 + $0x140] sm:$0xff]
      %v385 = vld [vmem:[%s196 + $0x148] sm:$0xff]
      %v386 = vld [vmem:[%s196 + $0x150] sm:$0xff]
      %v387 = vld [vmem:[%s196 + $0x158] sm:$0xff]
      %v388 = vld [vmem:[%s196 + $0x160] sm:$0xff]
      %v389 = vld [vmem:[%s196 + $0x168] sm:$0xff]
      %v390 = vld [vmem:[%s196 + $0x170] sm:$0xff]
      %v391 = vld [vmem:[%s196 + $0x178] sm:$0xff]
      %v392 = vld [vmem:[%s196 + $0x180] sm:$0xff]
      %v393 = vld [vmem:[%s196 + $0x188] sm:$0xff]
      %v394 = vld [vmem:[%s196 + $0x190] sm:$0xff]
      %v395 = vld [vmem:[%s196 + $0x198] sm:$0xff]
      %v396 = vld [vmem:[%s196 + $0x1a0] sm:$0xff]
      %v397 = vld [vmem:[%s196 + $0x1a8] sm:$0xff]
      %v398 = vld [vmem:[%s196 + $0x1b0] sm:$0xff]
      %v399 = vld [vmem:[%s196 + $0x1b8] sm:$0xff]
      %v400 = vld [vmem:[%s196 + $0x1c0] sm:$0xff]
      %v401 = vld [vmem:[%s196 + $0x1c8] sm:$0xff]
      %v402 = vld [vmem:[%s196 + $0x1d0] sm:$0xff]
      %v403 = vld [vmem:[%s196 + $0x1d8] sm:$0xff]
      %v404 = vld [vmem:[%s196 + $0x1e0] sm:$0xff]
      %v405 = vld [vmem:[%s196 + $0x1e8] sm:$0xff]
      %v406 = vld [vmem:[%s196 + $0x1f0] sm:$0xff]
      %v407 = vld [vmem:[%s196 + $0x1f8] sm:$0xff]
      %v472 = vunpack.c.l.b16 %v344
      %v473 = vunpack.c.h.b16 %v344
      %v474 = vunpack.c.l.b16 %v345
      %v475 = vunpack.c.h.b16 %v345
      %v476 = vunpack.c.l.b16 %v346
      %v477 = vunpack.c.h.b16 %v346
      %v478 = vunpack.c.l.b16 %v347
      %v479 = vunpack.c.h.b16 %v347
      %v480 = vunpack.c.l.b16 %v348
      %v481 = vunpack.c.h.b16 %v348
      %v482 = vunpack.c.l.b16 %v349
      %v483 = vunpack.c.h.b16 %v349
      %v484 = vunpack.c.l.b16 %v350
      %v485 = vunpack.c.h.b16 %v350
      %v486 = vunpack.c.l.b16 %v351
      %v487 = vunpack.c.h.b16 %v351
      %v488 = vunpack.c.l.b16 %v352
      %v489 = vunpack.c.h.b16 %v352
      %v490 = vunpack.c.l.b16 %v353
      %v491 = vunpack.c.h.b16 %v353
      %v492 = vunpack.c.l.b16 %v354
      %v493 = vunpack.c.h.b16 %v354
      %v494 = vunpack.c.l.b16 %v355
      %v495 = vunpack.c.h.b16 %v355
      %v496 = vunpack.c.l.b16 %v356
      %v497 = vunpack.c.h.b16 %v356
      %v498 = vunpack.c.l.b16 %v357
      %v499 = vunpack.c.h.b16 %v357
      %v500 = vunpack.c.l.b16 %v358
      %v501 = vunpack.c.h.b16 %v358
      %v502 = vunpack.c.l.b16 %v359
      %v503 = vunpack.c.h.b16 %v359
      %v504 = vunpack.c.l.b16 %v360
      %v505 = vunpack.c.h.b16 %v360
      %v506 = vunpack.c.l.b16 %v361
      %v507 = vunpack.c.h.b16 %v361
      %v508 = vunpack.c.l.b16 %v362
      %v509 = vunpack.c.h.b16 %v362
      %v510 = vunpack.c.l.b16 %v363
      %v511 = vunpack.c.h.b16 %v363
      %v512 = vunpack.c.l.b16 %v364
      %v513 = vunpack.c.h.b16 %v364
      %v514 = vunpack.c.l.b16 %v365
      %v515 = vunpack.c.h.b16 %v365
      %v516 = vunpack.c.l.b16 %v366
      %v517 = vunpack.c.h.b16 %v366
      %v518 = vunpack.c.l.b16 %v367
      %v519 = vunpack.c.h.b16 %v367
      %v520 = vunpack.c.l.b16 %v368
      %v521 = vunpack.c.h.b16 %v368
      %v522 = vunpack.c.l.b16 %v369
      %v523 = vunpack.c.h.b16 %v369
      %v524 = vunpack.c.l.b16 %v370
      %v525 = vunpack.c.h.b16 %v370
      %v526 = vunpack.c.l.b16 %v371
      %v527 = vunpack.c.h.b16 %v371
      %v528 = vunpack.c.l.b16 %v372
      %v529 = vunpack.c.h.b16 %v372
      %v530 = vunpack.c.l.b16 %v373
      %v531 = vunpack.c.h.b16 %v373
      %v532 = vunpack.c.l.b16 %v374
      %v533 = vunpack.c.h.b16 %v374
      %v534 = vunpack.c.l.b16 %v375
      %v535 = vunpack.c.h.b16 %v375
      %v536 = vunpack.c.l.b16 %v376
      %v537 = vunpack.c.h.b16 %v376
      %v538 = vunpack.c.l.b16 %v377
      %v539 = vunpack.c.h.b16 %v377
      %v540 = vunpack.c.l.b16 %v378
      %v541 = vunpack.c.h.b16 %v378
      %v542 = vunpack.c.l.b16 %v379
      %v543 = vunpack.c.h.b16 %v379
      %v544 = vunpack.c.l.b16 %v380
      %v545 = vunpack.c.h.b16 %v380
      %v546 = vunpack.c.l.b16 %v381
      %v547 = vunpack.c.h.b16 %v381
      %v548 = vunpack.c.l.b16 %v382
      %v549 = vunpack.c.h.b16 %v382
      %v550 = vunpack.c.l.b16 %v383
      %v551 = vunpack.c.h.b16 %v383
      %v552 = vunpack.c.l.b16 %v384
      %v553 = vunpack.c.h.b16 %v384
      %v554 = vunpack.c.l.b16 %v385
      %v555 = vunpack.c.h.b16 %v385
      %v556 = vunpack.c.l.b16 %v386
      %v557 = vunpack.c.h.b16 %v386
      %v558 = vunpack.c.l.b16 %v387
      %v559 = vunpack.c.h.b16 %v387
      %v560 = vunpack.c.l.b16 %v388
      %v561 = vunpack.c.h.b16 %v388
      %v562 = vunpack.c.l.b16 %v389
      %v563 = vunpack.c.h.b16 %v389
      %v564 = vunpack.c.l.b16 %v390
      %v565 = vunpack.c.h.b16 %v390
      %v566 = vunpack.c.l.b16 %v391
      %v567 = vunpack.c.h.b16 %v391
      %v568 = vunpack.c.l.b16 %v392
      %v569 = vunpack.c.h.b16 %v392
      %v570 = vunpack.c.l.b16 %v393
      %v571 = vunpack.c.h.b16 %v393
      %v572 = vunpack.c.l.b16 %v394
      %v573 = vunpack.c.h.b16 %v394
      %v574 = vunpack.c.l.b16 %v395
      %v575 = vunpack.c.h.b16 %v395
      %v576 = vunpack.c.l.b16 %v396
      %v577 = vunpack.c.h.b16 %v396
      %v578 = vunpack.c.l.b16 %v397
      %v579 = vunpack.c.h.b16 %v397
      %v580 = vunpack.c.l.b16 %v398
      %v581 = vunpack.c.h.b16 %v398
      %v582 = vunpack.c.l.b16 %v399
      %v583 = vunpack.c.h.b16 %v399
      %v584 = vunpack.c.l.b16 %v400
      %v585 = vunpack.c.h.b16 %v400
      %v586 = vunpack.c.l.b16 %v401
      %v587 = vunpack.c.h.b16 %v401
      %v588 = vunpack.c.l.b16 %v402
      %v589 = vunpack.c.h.b16 %v402
      %v590 = vunpack.c.l.b16 %v403
      %v591 = vunpack.c.h.b16 %v403
      %v592 = vunpack.c.l.b16 %v404
      %v593 = vunpack.c.h.b16 %v404
      %v594 = vunpack.c.l.b16 %v405
      %v595 = vunpack.c.h.b16 %v405
      %v596 = vunpack.c.l.b16 %v406
      %v597 = vunpack.c.h.b16 %v406
      %v598 = vunpack.c.l.b16 %v407
      %v599 = vunpack.c.h.b16 %v407
      %v600 = vpack.c.b16 %v476, %v472
      %v601 = vpack.c.b16 %v477, %v473
      %v602 = vpack.c.b16 %v478, %v474
      %v603 = vpack.c.b16 %v479, %v475
      %v604 = vpack.c.b16 %v484, %v480
      %v605 = vpack.c.b16 %v485, %v481
      %v606 = vpack.c.b16 %v486, %v482
      %v607 = vpack.c.b16 %v487, %v483
      %v608 = vpack.c.b16 %v492, %v488
      %v609 = vpack.c.b16 %v493, %v489
      %v610 = vpack.c.b16 %v494, %v490
      %v611 = vpack.c.b16 %v495, %v491
      %v612 = vpack.c.b16 %v500, %v496
      %v613 = vpack.c.b16 %v501, %v497
      %v614 = vpack.c.b16 %v502, %v498
      %v615 = vpack.c.b16 %v503, %v499
      %v616 = vpack.c.b16 %v508, %v504
      %v617 = vpack.c.b16 %v509, %v505
      %v618 = vpack.c.b16 %v510, %v506
      %v619 = vpack.c.b16 %v511, %v507
      %v620 = vpack.c.b16 %v516, %v512
      %v621 = vpack.c.b16 %v517, %v513
      %v622 = vpack.c.b16 %v518, %v514
      %v623 = vpack.c.b16 %v519, %v515
      %v624 = vpack.c.b16 %v524, %v520
      %v625 = vpack.c.b16 %v525, %v521
      %v626 = vpack.c.b16 %v526, %v522
      %v627 = vpack.c.b16 %v527, %v523
      %v628 = vpack.c.b16 %v532, %v528
      %v629 = vpack.c.b16 %v533, %v529
      %v630 = vpack.c.b16 %v534, %v530
      %v631 = vpack.c.b16 %v535, %v531
      %v632 = vpack.c.b16 %v540, %v536
      %v633 = vpack.c.b16 %v541, %v537
      %v634 = vpack.c.b16 %v542, %v538
      %v635 = vpack.c.b16 %v543, %v539
      %v636 = vpack.c.b16 %v548, %v544
      %v637 = vpack.c.b16 %v549, %v545
      %v638 = vpack.c.b16 %v550, %v546
      %v639 = vpack.c.b16 %v551, %v547
      %v640 = vpack.c.b16 %v556, %v552
      %v641 = vpack.c.b16 %v557, %v553
      %v642 = vpack.c.b16 %v558, %v554
      %v643 = vpack.c.b16 %v559, %v555
      %v644 = vpack.c.b16 %v564, %v560
      %v645 = vpack.c.b16 %v565, %v561
      %v646 = vpack.c.b16 %v566, %v562
      %v647 = vpack.c.b16 %v567, %v563
      %v648 = vpack.c.b16 %v572, %v568
      %v649 = vpack.c.b16 %v573, %v569
      %v650 = vpack.c.b16 %v574, %v570
      %v651 = vpack.c.b16 %v575, %v571
      %v652 = vpack.c.b16 %v580, %v576
      %v653 = vpack.c.b16 %v581, %v577
      %v654 = vpack.c.b16 %v582, %v578
      %v655 = vpack.c.b16 %v583, %v579
      %v656 = vpack.c.b16 %v588, %v584
      %v657 = vpack.c.b16 %v589, %v585
      %v658 = vpack.c.b16 %v590, %v586
      %v659 = vpack.c.b16 %v591, %v587
      %v660 = vpack.c.b16 %v596, %v592
      %v661 = vpack.c.b16 %v597, %v593
      %v662 = vpack.c.b16 %v598, %v594
      %v663 = vpack.c.b16 %v599, %v595
      %v792 = vunpack.c.l.b16 %v248
      %v793 = vunpack.c.l.b16 %v249
      %v794 = vunpack.c.l.b16 %v250
      %v795 = vunpack.c.l.b16 %v251
      %v796 = vunpack.c.l.b16 %v252
      %v797 = vunpack.c.l.b16 %v253
      %v798 = vunpack.c.l.b16 %v254
      %v799 = vunpack.c.l.b16 %v255
      %v800 = vunpack.c.l.b16 %v256
      %v801 = vunpack.c.l.b16 %v257
      %v802 = vunpack.c.l.b16 %v258
      %v803 = vunpack.c.l.b16 %v259
      %v804 = vunpack.c.l.b16 %v260
      %v805 = vunpack.c.l.b16 %v261
      %v806 = vunpack.c.l.b16 %v262
      %v807 = vunpack.c.l.b16 %v263
      %v808 = vunpack.c.l.b16 %v264
      %v809 = vunpack.c.l.b16 %v265
      %v810 = vunpack.c.l.b16 %v266
      %v811 = vunpack.c.l.b16 %v267
      %v812 = vunpack.c.l.b16 %v268
      %v813 = vunpack.c.l.b16 %v269
      %v814 = vunpack.c.l.b16 %v270
      %v815 = vunpack.c.l.b16 %v271
      %v816 = vunpack.c.l.b16 %v272
      %v817 = vunpack.c.l.b16 %v273
      %v818 = vunpack.c.l.b16 %v274
      %v819 = vunpack.c.l.b16 %v275
      %v820 = vunpack.c.l.b16 %v276
      %v821 = vunpack.c.l.b16 %v277
      %v822 = vunpack.c.l.b16 %v278
      %v823 = vunpack.c.l.b16 %v279
      %v824 = vunpack.c.l.b16 %v280
      %v825 = vunpack.c.l.b16 %v281
      %v826 = vunpack.c.l.b16 %v282
      %v827 = vunpack.c.l.b16 %v283
      %v828 = vunpack.c.l.b16 %v284
      %v829 = vunpack.c.l.b16 %v285
      %v830 = vunpack.c.l.b16 %v286
      %v831 = vunpack.c.l.b16 %v287
      %v832 = vunpack.c.l.b16 %v288
      %v833 = vunpack.c.l.b16 %v289
      %v834 = vunpack.c.l.b16 %v290
      %v835 = vunpack.c.l.b16 %v291
      %v836 = vunpack.c.l.b16 %v292
      %v837 = vunpack.c.l.b16 %v293
      %v838 = vunpack.c.l.b16 %v294
      %v839 = vunpack.c.l.b16 %v295
      %v840 = vunpack.c.l.b16 %v296
      %v841 = vunpack.c.l.b16 %v297
      %v842 = vunpack.c.l.b16 %v298
      %v843 = vunpack.c.l.b16 %v299
      %v844 = vunpack.c.l.b16 %v300
      %v845 = vunpack.c.l.b16 %v301
      %v846 = vunpack.c.l.b16 %v302
      %v847 = vunpack.c.l.b16 %v303
      %v848 = vunpack.c.l.b16 %v304
      %v849 = vunpack.c.l.b16 %v305
      %v850 = vunpack.c.l.b16 %v306
      %v851 = vunpack.c.l.b16 %v307
      %v852 = vunpack.c.l.b16 %v308
      %v853 = vunpack.c.l.b16 %v309
      %v854 = vunpack.c.l.b16 %v310
      %v855 = vunpack.c.l.b16 %v311
      %v856 = vpack.c.b16 %v793, %v792
      %v857 = vpack.c.b16 %v795, %v794
      %v858 = vpack.c.b16 %v797, %v796
      %v859 = vpack.c.b16 %v799, %v798
      %v860 = vpack.c.b16 %v801, %v800
      %v861 = vpack.c.b16 %v803, %v802
      %v862 = vpack.c.b16 %v805, %v804
      %v863 = vpack.c.b16 %v807, %v806
      %v864 = vpack.c.b16 %v809, %v808
      %v865 = vpack.c.b16 %v811, %v810
      %v866 = vpack.c.b16 %v813, %v812
      %v867 = vpack.c.b16 %v815, %v814
      %v868 = vpack.c.b16 %v817, %v816
      %v869 = vpack.c.b16 %v819, %v818
      %v870 = vpack.c.b16 %v821, %v820
      %v871 = vpack.c.b16 %v823, %v822
      %v872 = vpack.c.b16 %v825, %v824
      %v873 = vpack.c.b16 %v827, %v826
      %v874 = vpack.c.b16 %v829, %v828
      %v875 = vpack.c.b16 %v831, %v830
      %v876 = vpack.c.b16 %v833, %v832
      %v877 = vpack.c.b16 %v835, %v834
      %v878 = vpack.c.b16 %v837, %v836
      %v879 = vpack.c.b16 %v839, %v838
      %v880 = vpack.c.b16 %v841, %v840
      %v881 = vpack.c.b16 %v843, %v842
      %v882 = vpack.c.b16 %v845, %v844
      %v883 = vpack.c.b16 %v847, %v846
      %v884 = vpack.c.b16 %v849, %v848
      %v885 = vpack.c.b16 %v851, %v850
      %v886 = vpack.c.b16 %v853, %v852
      %v887 = vpack.c.b16 %v855, %v854
      %920 = vmatprep.subr.bf16.mxu0 0
      %921 = vmatpush1.bf16.msra.mxu0 %v863
      %922 = vmatprep.subr.bf16.mxu0 0
      %923 = vmatpush1.bf16.msra.mxu0 %v862
      %924 = vmatprep.subr.bf16.mxu0 0
      %925 = vmatpush1.bf16.msra.mxu0 %v861
      %926 = vmatprep.subr.bf16.mxu0 0
      %927 = vmatpush1.bf16.msra.mxu0 %v860
      %928 = vmatprep.subr.bf16.mxu0 0
      %929 = vmatpush1.bf16.msra.mxu0 %v859
      %930 = vmatprep.subr.bf16.mxu0 0
      %931 = vmatpush1.bf16.msra.mxu0 %v858
      %932 = vmatprep.subr.bf16.mxu0 0
      %933 = vmatpush1.bf16.msra.mxu0 %v857
      %934 = vmatprep.subr.bf16.mxu0 0
      %935 = vmatpush1.bf16.msra.mxu0 %v856
      %936 = vmatprep.subr.bf16.mxu0 0
      %937 = vmatpush2.bf16.msra.mxu0 %v871
      %938 = vmatprep.subr.bf16.mxu0 0
      %939 = vmatpush2.bf16.msra.mxu0 %v870
      %940 = vmatprep.subr.bf16.mxu0 0
      %941 = vmatpush2.bf16.msra.mxu0 %v869
      %942 = vmatprep.subr.bf16.mxu0 0
      %943 = vmatpush2.bf16.msra.mxu0 %v868
      %944 = vmatprep.subr.bf16.mxu0 0
      %945 = vmatpush2.bf16.msra.mxu0 %v867
      %946 = vmatprep.subr.bf16.mxu0 0
      %947 = vmatpush2.bf16.msra.mxu0 %v866
      %948 = vmatprep.subr.bf16.mxu0 0
      %949 = vmatpush2.bf16.msra.mxu0 %v865
      %950 = vmatprep.subr.bf16.mxu0 0
      %951 = vmatpush2.bf16.msra.mxu0 %v864
      %952 = vmatprep.mubr.bf16.mxu0 %v601
      %953 = vmatmul.mubr.bf16.gmra.mxu0 %v600
      %v954 = vpop.f32.mrf.mxu0
      %v955 = vadd.f32 0.0, %v954
      %v956 = vpop.f32.mrf.mxu0
      %v957 = vpop.f32.mrf.mxu0
      %v958 = vadd.f32 0.0, %v957
      %v959 = vpop.f32.mrf.mxu0
      %960 = vmatprep.mubr.bf16.mxu0 %v605
      %961 = vmatmul.mubr.bf16.gmra.mxu0 %v604
      %v962 = vpop.f32.mrf.mxu0
      %v963 = vadd.f32 0.0, %v962
      %v964 = vpop.f32.mrf.mxu0
      %v965 = vpop.f32.mrf.mxu0
      %v966 = vadd.f32 0.0, %v965
      %v967 = vpop.f32.mrf.mxu0
      %968 = vmatprep.mubr.bf16.mxu0 %v609
      %969 = vmatmul.mubr.bf16.gmra.mxu0 %v608
      %v970 = vpop.f32.mrf.mxu0
      %v971 = vadd.f32 0.0, %v970
      %v972 = vpop.f32.mrf.mxu0
      %v973 = vpop.f32.mrf.mxu0
      %v974 = vadd.f32 0.0, %v973
      %v975 = vpop.f32.mrf.mxu0
      %976 = vmatprep.mubr.bf16.mxu0 %v613
      %977 = vmatmul.mubr.bf16.gmra.mxu0 %v612
      %v978 = vpop.f32.mrf.mxu0
      %v979 = vadd.f32 0.0, %v978
      %v980 = vpop.f32.mrf.mxu0
      %v981 = vpop.f32.mrf.mxu0
      %v982 = vadd.f32 0.0, %v981
      %v983 = vpop.f32.mrf.mxu0
      %984 = vmatprep.mubr.bf16.mxu0 %v617
      %985 = vmatmul.mubr.bf16.gmra.mxu0 %v616
      %v986 = vpop.f32.mrf.mxu0
      %v987 = vadd.f32 0.0, %v986
      %v988 = vpop.f32.mrf.mxu0
      %v989 = vpop.f32.mrf.mxu0
      %v990 = vadd.f32 0.0, %v989
      %v991 = vpop.f32.mrf.mxu0
      %992 = vmatprep.mubr.bf16.mxu0 %v621
      %993 = vmatmul.mubr.bf16.gmra.mxu0 %v620
      %v994 = vpop.f32.mrf.mxu0
      %v995 = vadd.f32 0.0, %v994
      %v996 = vpop.f32.mrf.mxu0
      %v997 = vpop.f32.mrf.mxu0
      %v998 = vadd.f32 0.0, %v997
      %v999 = vpop.f32.mrf.mxu0
      %1000 = vmatprep.mubr.bf16.mxu0 %v625
      %1001 = vmatmul.mubr.bf16.gmra.mxu0 %v624
      %v1002 = vpop.f32.mrf.mxu0
      %v1003 = vadd.f32 0.0, %v1002
      %v1004 = vpop.f32.mrf.mxu0
      %v1005 = vpop.f32.mrf.mxu0
      %v1006 = vadd.f32 0.0, %v1005
      %v1007 = vpop.f32.mrf.mxu0
      %1008 = vmatprep.mubr.bf16.mxu0 %v629
      %1009 = vmatmul.mubr.bf16.gmra.mxu0 %v628
      %v1010 = vpop.f32.mrf.mxu0
      %v1011 = vadd.f32 0.0, %v1010
      %v1012 = vpop.f32.mrf.mxu0
      %v1013 = vpop.f32.mrf.mxu0
      %v1014 = vadd.f32 0.0, %v1013
      %v1015 = vpop.f32.mrf.mxu0
      %1016 = vmatprep.mubr.bf16.mxu0 %v633
      %1017 = vmatmul.mubr.bf16.gmra.mxu0 %v632
      %v1018 = vpop.f32.mrf.mxu0
      %v1019 = vadd.f32 0.0, %v1018
      %v1020 = vpop.f32.mrf.mxu0
      %v1021 = vpop.f32.mrf.mxu0
      %v1022 = vadd.f32 0.0, %v1021
      %v1023 = vpop.f32.mrf.mxu0
      %1024 = vmatprep.mubr.bf16.mxu0 %v637
      %1025 = vmatmul.mubr.bf16.gmra.mxu0 %v636
      %v1026 = vpop.f32.mrf.mxu0
      %v1027 = vadd.f32 0.0, %v1026
      %v1028 = vpop.f32.mrf.mxu0
      %v1029 = vpop.f32.mrf.mxu0
      %v1030 = vadd.f32 0.0, %v1029
      %v1031 = vpop.f32.mrf.mxu0
      %1032 = vmatprep.mubr.bf16.mxu0 %v641
      %1033 = vmatmul.mubr.bf16.gmra.mxu0 %v640
      %v1034 = vpop.f32.mrf.mxu0
      %v1035 = vadd.f32 0.0, %v1034
      %v1036 = vpop.f32.mrf.mxu0
      %v1037 = vpop.f32.mrf.mxu0
      %v1038 = vadd.f32 0.0, %v1037
      %v1039 = vpop.f32.mrf.mxu0
      %1040 = vmatprep.mubr.bf16.mxu0 %v645
      %1041 = vmatmul.mubr.bf16.gmra.mxu0 %v644
      %v1042 = vpop.f32.mrf.mxu0
      %v1043 = vadd.f32 0.0, %v1042
      %v1044 = vpop.f32.mrf.mxu0
      %v1045 = vpop.f32.mrf.mxu0
      %v1046 = vadd.f32 0.0, %v1045
      %v1047 = vpop.f32.mrf.mxu0
      %1048 = vmatprep.mubr.bf16.mxu0 %v649
      %1049 = vmatmul.mubr.bf16.gmra.mxu0 %v648
      %v1050 = vpop.f32.mrf.mxu0
      %v1051 = vadd.f32 0.0, %v1050
      %v1052 = vpop.f32.mrf.mxu0
      %v1053 = vpop.f32.mrf.mxu0
      %v1054 = vadd.f32 0.0, %v1053
      %v1055 = vpop.f32.mrf.mxu0
      %1056 = vmatprep.mubr.bf16.mxu0 %v653
      %1057 = vmatmul.mubr.bf16.gmra.mxu0 %v652
      %v1058 = vpop.f32.mrf.mxu0
      %v1059 = vadd.f32 0.0, %v1058
      %v1060 = vpop.f32.mrf.mxu0
      %v1061 = vpop.f32.mrf.mxu0
      %v1062 = vadd.f32 0.0, %v1061
      %v1063 = vpop.f32.mrf.mxu0
      %1064 = vmatprep.mubr.bf16.mxu0 %v657
      %1065 = vmatmul.mubr.bf16.gmra.mxu0 %v656
      %v1066 = vpop.f32.mrf.mxu0
      %v1067 = vadd.f32 0.0, %v1066
      %v1068 = vpop.f32.mrf.mxu0
      %v1069 = vpop.f32.mrf.mxu0
      %v1070 = vadd.f32 0.0, %v1069
      %v1071 = vpop.f32.mrf.mxu0
      %1072 = vmatprep.mubr.bf16.mxu0 %v661
      %1073 = vmatmul.mubr.bf16.gmra.mxu0 %v660
      %v1074 = vpop.f32.mrf.mxu0
      %v1075 = vadd.f32 0.0, %v1074
      %v1076 = vpop.f32.mrf.mxu0
      %v1077 = vpop.f32.mrf.mxu0
      %v1078 = vadd.f32 0.0, %v1077
      %v1079 = vpop.f32.mrf.mxu0
      %1080 = vdwg.mxu0
      %1081 = vmatprep.subr.bf16.mxu0 0
      %1082 = vmatpush1.bf16.msra.mxu0 %v879
      %1083 = vmatprep.subr.bf16.mxu0 0
      %1084 = vmatpush1.bf16.msra.mxu0 %v878
      %1085 = vmatprep.subr.bf16.mxu0 0
      %1086 = vmatpush1.bf16.msra.mxu0 %v877
      %1087 = vmatprep.subr.bf16.mxu0 0
      %1088 = vmatpush1.bf16.msra.mxu0 %v876
      %1089 = vmatprep.subr.bf16.mxu0 0
      %1090 = vmatpush1.bf16.msra.mxu0 %v875
      %1091 = vmatprep.subr.bf16.mxu0 0
      %1092 = vmatpush1.bf16.msra.mxu0 %v874
      %1093 = vmatprep.subr.bf16.mxu0 0
      %1094 = vmatpush1.bf16.msra.mxu0 %v873
      %1095 = vmatprep.subr.bf16.mxu0 0
      %1096 = vmatpush1.bf16.msra.mxu0 %v872
      %1097 = vmatprep.subr.bf16.mxu0 0
      %1098 = vmatpush2.bf16.msra.mxu0 %v887
      %1099 = vmatprep.subr.bf16.mxu0 0
      %1100 = vmatpush2.bf16.msra.mxu0 %v886
      %1101 = vmatprep.subr.bf16.mxu0 0
      %1102 = vmatpush2.bf16.msra.mxu0 %v885
      %1103 = vmatprep.subr.bf16.mxu0 0
      %1104 = vmatpush2.bf16.msra.mxu0 %v884
      %1105 = vmatprep.subr.bf16.mxu0 0
      %1106 = vmatpush2.bf16.msra.mxu0 %v883
      %1107 = vmatprep.subr.bf16.mxu0 0
      %1108 = vmatpush2.bf16.msra.mxu0 %v882
      %1109 = vmatprep.subr.bf16.mxu0 0
      %1110 = vmatpush2.bf16.msra.mxu0 %v881
      %1111 = vmatprep.subr.bf16.mxu0 0
      %1112 = vmatpush2.bf16.msra.mxu0 %v880
      %1113 = vmatprep.mubr.bf16.mxu0 %v603
      %1114 = vmatmul.mubr.bf16.gmra.mxu0 %v602
      %v1115 = vpop.f32.mrf.mxu0
      %v1116 = vadd.f32 %v955, %v1115
      %v1117 = vpop.f32.mrf.mxu0
      %v1118 = vpop.f32.mrf.mxu0
      %v1119 = vadd.f32 %v958, %v1118
      %v1120 = vpop.f32.mrf.mxu0
      %1121 = vmatprep.mubr.bf16.mxu0 %v607
      %1122 = vmatmul.mubr.bf16.gmra.mxu0 %v606
      %v1123 = vpop.f32.mrf.mxu0
      %v1124 = vadd.f32 %v963, %v1123
      %v1125 = vpop.f32.mrf.mxu0
      %v1126 = vpop.f32.mrf.mxu0
      %v1127 = vadd.f32 %v966, %v1126
      %v1128 = vpop.f32.mrf.mxu0
      %1129 = vmatprep.mubr.bf16.mxu0 %v611
      %1130 = vmatmul.mubr.bf16.gmra.mxu0 %v610
      %v1131 = vpop.f32.mrf.mxu0
      %v1132 = vadd.f32 %v971, %v1131
      %v1133 = vpop.f32.mrf.mxu0
      %v1134 = vpop.f32.mrf.mxu0
      %v1135 = vadd.f32 %v974, %v1134
      %v1136 = vpop.f32.mrf.mxu0
      %1137 = vmatprep.mubr.bf16.mxu0 %v615
      %1138 = vmatmul.mubr.bf16.gmra.mxu0 %v614
      %v1139 = vpop.f32.mrf.mxu0
      %v1140 = vadd.f32 %v979, %v1139
      %v1141 = vpop.f32.mrf.mxu0
      %v1142 = vpop.f32.mrf.mxu0
      %v1143 = vadd.f32 %v982, %v1142
      %v1144 = vpop.f32.mrf.mxu0
      %1145 = vmatprep.mubr.bf16.mxu0 %v619
      %1146 = vmatmul.mubr.bf16.gmra.mxu0 %v618
      %v1147 = vpop.f32.mrf.mxu0
      %v1148 = vadd.f32 %v987, %v1147
      %v1149 = vpop.f32.mrf.mxu0
      %v1150 = vpop.f32.mrf.mxu0
      %v1151 = vadd.f32 %v990, %v1150
      %v1152 = vpop.f32.mrf.mxu0
      %1153 = vmatprep.mubr.bf16.mxu0 %v623
      %1154 = vmatmul.mubr.bf16.gmra.mxu0 %v622
      %v1155 = vpop.f32.mrf.mxu0
      %v1156 = vadd.f32 %v995, %v1155
      %v1157 = vpop.f32.mrf.mxu0
      %v1158 = vpop.f32.mrf.mxu0
      %v1159 = vadd.f32 %v998, %v1158
      %v1160 = vpop.f32.mrf.mxu0
      %1161 = vmatprep.mubr.bf16.mxu0 %v627
      %1162 = vmatmul.mubr.bf16.gmra.mxu0 %v626
      %v1163 = vpop.f32.mrf.mxu0
      %v1164 = vadd.f32 %v1003, %v1163
      %v1165 = vpop.f32.mrf.mxu0
      %v1166 = vpop.f32.mrf.mxu0
      %v1167 = vadd.f32 %v1006, %v1166
      %v1168 = vpop.f32.mrf.mxu0
      %1169 = vmatprep.mubr.bf16.mxu0 %v631
      %1170 = vmatmul.mubr.bf16.gmra.mxu0 %v630
      %v1171 = vpop.f32.mrf.mxu0
      %v1172 = vadd.f32 %v1011, %v1171
      %v1173 = vpop.f32.mrf.mxu0
      %v1174 = vpop.f32.mrf.mxu0
      %v1175 = vadd.f32 %v1014, %v1174
      %v1176 = vpop.f32.mrf.mxu0
      %1177 = vmatprep.mubr.bf16.mxu0 %v635
      %1178 = vmatmul.mubr.bf16.gmra.mxu0 %v634
      %v1179 = vpop.f32.mrf.mxu0
      %v1180 = vadd.f32 %v1019, %v1179
      %v1181 = vpop.f32.mrf.mxu0
      %v1182 = vpop.f32.mrf.mxu0
      %v1183 = vadd.f32 %v1022, %v1182
      %v1184 = vpop.f32.mrf.mxu0
      %1185 = vmatprep.mubr.bf16.mxu0 %v639
      %1186 = vmatmul.mubr.bf16.gmra.mxu0 %v638
      %v1187 = vpop.f32.mrf.mxu0
      %v1188 = vadd.f32 %v1027, %v1187
      %v1189 = vpop.f32.mrf.mxu0
      %v1190 = vpop.f32.mrf.mxu0
      %v1191 = vadd.f32 %v1030, %v1190
      %v1192 = vpop.f32.mrf.mxu0
      %1193 = vmatprep.mubr.bf16.mxu0 %v643
      %1194 = vmatmul.mubr.bf16.gmra.mxu0 %v642
      %v1195 = vpop.f32.mrf.mxu0
      %v1196 = vadd.f32 %v1035, %v1195
      %v1197 = vpop.f32.mrf.mxu0
      %v1198 = vpop.f32.mrf.mxu0
      %v1199 = vadd.f32 %v1038, %v1198
      %v1200 = vpop.f32.mrf.mxu0
      %1201 = vmatprep.mubr.bf16.mxu0 %v647
      %1202 = vmatmul.mubr.bf16.gmra.mxu0 %v646
      %v1203 = vpop.f32.mrf.mxu0
      %v1204 = vadd.f32 %v1043, %v1203
      %v1205 = vpop.f32.mrf.mxu0
      %v1206 = vpop.f32.mrf.mxu0
      %v1207 = vadd.f32 %v1046, %v1206
      %v1208 = vpop.f32.mrf.mxu0
      %1209 = vmatprep.mubr.bf16.mxu0 %v651
      %1210 = vmatmul.mubr.bf16.gmra.mxu0 %v650
      %v1211 = vpop.f32.mrf.mxu0
      %v1212 = vadd.f32 %v1051, %v1211
      %v1213 = vpop.f32.mrf.mxu0
      %v1214 = vpop.f32.mrf.mxu0
      %v1215 = vadd.f32 %v1054, %v1214
      %v1216 = vpop.f32.mrf.mxu0
      %1217 = vmatprep.mubr.bf16.mxu0 %v655
      %1218 = vmatmul.mubr.bf16.gmra.mxu0 %v654
      %v1219 = vpop.f32.mrf.mxu0
      %v1220 = vadd.f32 %v1059, %v1219
      %v1221 = vpop.f32.mrf.mxu0
      %v1222 = vpop.f32.mrf.mxu0
      %v1223 = vadd.f32 %v1062, %v1222
      %v1224 = vpop.f32.mrf.mxu0
      %1225 = vmatprep.mubr.bf16.mxu0 %v659
      %1226 = vmatmul.mubr.bf16.gmra.mxu0 %v658
      %v1227 = vpop.f32.mrf.mxu0
      %v1228 = vadd.f32 %v1067, %v1227
      %v1229 = vpop.f32.mrf.mxu0
      %v1230 = vpop.f32.mrf.mxu0
      %v1231 = vadd.f32 %v1070, %v1230
      %v1232 = vpop.f32.mrf.mxu0
      %1233 = vmatprep.mubr.bf16.mxu0 %v663
      %1234 = vmatmul.mubr.bf16.gmra.mxu0 %v662
      %v1235 = vpop.f32.mrf.mxu0
      %v1236 = vadd.f32 %v1075, %v1235
      %v1237 = vpop.f32.mrf.mxu0
      %v1238 = vpop.f32.mrf.mxu0
      %v1239 = vadd.f32 %v1078, %v1238
      %v1240 = vpop.f32.mrf.mxu0
      %1241 = vdwg.mxu0
      %v1242 = vadd.f32 %v312, %v1116
      %v1243 = vadd.f32 %v313, %v1119
      %v1244 = vadd.f32 %v314, %v1124
      %v1245 = vadd.f32 %v315, %v1127
      %v1246 = vadd.f32 %v316, %v1132
      %v1247 = vadd.f32 %v317, %v1135
      %v1248 = vadd.f32 %v318, %v1140
      %v1249 = vadd.f32 %v319, %v1143
      %v1250 = vadd.f32 %v320, %v1148
      %v1251 = vadd.f32 %v321, %v1151
      %v1252 = vadd.f32 %v322, %v1156
      %v1253 = vadd.f32 %v323, %v1159
      %v1254 = vadd.f32 %v324, %v1164
      %v1255 = vadd.f32 %v325, %v1167
      %v1256 = vadd.f32 %v326, %v1172
      %v1257 = vadd.f32 %v327, %v1175
      %v1258 = vadd.f32 %v328, %v1180
      %v1259 = vadd.f32 %v329, %v1183
      %v1260 = vadd.f32 %v330, %v1188
      %v1261 = vadd.f32 %v331, %v1191
      %v1262 = vadd.f32 %v332, %v1196
      %v1263 = vadd.f32 %v333, %v1199
      %v1264 = vadd.f32 %v334, %v1204
      %v1265 = vadd.f32 %v335, %v1207
      %v1266 = vadd.f32 %v336, %v1212
      %v1267 = vadd.f32 %v337, %v1215
      %v1268 = vadd.f32 %v338, %v1220
      %v1269 = vadd.f32 %v339, %v1223
      %v1270 = vadd.f32 %v340, %v1228
      %v1271 = vadd.f32 %v341, %v1231
      %v1272 = vadd.f32 %v342, %v1236
      %v1273 = vadd.f32 %v343, %v1239
      %vm1274 = vcmask 31744
      %1275 = vst.msk [vmem:[#allocation2] sm:$0xff] %vm1274, %v1242
      %1276 = vst.msk [vmem:[#allocation2 + $0x8] sm:$0xff] %vm1274, %v1243
      %1277 = vst.msk [vmem:[#allocation2 + $0x10] sm:$0xff] %vm1274, %v1244
      %1278 = vst.msk [vmem:[#allocation2 + $0x18] sm:$0xff] %vm1274, %v1245
      %1279 = vst.msk [vmem:[#allocation2 + $0x20] sm:$0xff] %vm1274, %v1246
      %1280 = vst.msk [vmem:[#allocation2 + $0x28] sm:$0xff] %vm1274, %v1247
      %1281 = vst.msk [vmem:[#allocation2 + $0x30] sm:$0xff] %vm1274, %v1248
      %1282 = vst.msk [vmem:[#allocation2 + $0x38] sm:$0xff] %vm1274, %v1249
      %1283 = vst.msk [vmem:[#allocation2 + $0x40] sm:$0xff] %vm1274, %v1250
      %1284 = vst.msk [vmem:[#allocation2 + $0x48] sm:$0xff] %vm1274, %v1251
      %1285 = vst.msk [vmem:[#allocation2 + $0x50] sm:$0xff] %vm1274, %v1252
      %1286 = vst.msk [vmem:[#allocation2 + $0x58] sm:$0xff] %vm1274, %v1253
      %1287 = vst.msk [vmem:[#allocation2 + $0x60] sm:$0xff] %vm1274, %v1254
      %1288 = vst.msk [vmem:[#allocation2 + $0x68] sm:$0xff] %vm1274, %v1255
      %1289 = vst.msk [vmem:[#allocation2 + $0x70] sm:$0xff] %vm1274, %v1256
      %1290 = vst.msk [vmem:[#allocation2 + $0x78] sm:$0xff] %vm1274, %v1257
      %1291 = vst.msk [vmem:[#allocation2 + $0x80] sm:$0xff] %vm1274, %v1258
      %1292 = vst.msk [vmem:[#allocation2 + $0x88] sm:$0xff] %vm1274, %v1259
      %1293 = vst.msk [vmem:[#allocation2 + $0x90] sm:$0xff] %vm1274, %v1260
      %1294 = vst.msk [vmem:[#allocation2 + $0x98] sm:$0xff] %vm1274, %v1261
      %1295 = vst.msk [vmem:[#allocation2 + $0xa0] sm:$0xff] %vm1274, %v1262
      %1296 = vst.msk [vmem:[#allocation2 + $0xa8] sm:$0xff] %vm1274, %v1263
      %1297 = vst.msk [vmem:[#allocation2 + $0xb0] sm:$0xff] %vm1274, %v1264
      %1298 = vst.msk [vmem:[#allocation2 + $0xb8] sm:$0xff] %vm1274, %v1265
      %1299 = vst.msk [vmem:[#allocation2 + $0xc0] sm:$0xff] %vm1274, %v1266
      %1300 = vst.msk [vmem:[#allocation2 + $0xc8] sm:$0xff] %vm1274, %v1267
      %1301 = vst.msk [vmem:[#allocation2 + $0xd0] sm:$0xff] %vm1274, %v1268
      %1302 = vst.msk [vmem:[#allocation2 + $0xd8] sm:$0xff] %vm1274, %v1269
      %1303 = vst.msk [vmem:[#allocation2 + $0xe0] sm:$0xff] %vm1274, %v1270
      %1304 = vst.msk [vmem:[#allocation2 + $0xe8] sm:$0xff] %vm1274, %v1271
      %1305 = vst.msk [vmem:[#allocation2 + $0xf0] sm:$0xff] %vm1274, %v1272
      %1306 = vst.msk [vmem:[#allocation2 + $0xf8] sm:$0xff] %vm1274, %v1273
      // Predicated region
      $region37: #{_lambda_.3} parent=31 // pred_check
        %p1307 = pneg %p206
      $region38: #{_lambda_.3} parent=31 // pred_check_branch
        %1309 = sbr.rel (%p1307) target = $region40
      $region39: #{_lambda_.3} parent=31 // pred_region
        %v1310 = vld [vmem:[#allocation2] sm:$0xff]
        %v1311 = vld [vmem:[#allocation2 + $0x8] sm:$0xff]
        %v1312 = vld [vmem:[#allocation2 + $0x10] sm:$0xff]
        %v1313 = vld [vmem:[#allocation2 + $0x18] sm:$0xff]
        %v1314 = vld [vmem:[#allocation2 + $0x20] sm:$0xff]
        %v1315 = vld [vmem:[#allocation2 + $0x28] sm:$0xff]
        %v1316 = vld [vmem:[#allocation2 + $0x30] sm:$0xff]
        %v1317 = vld [vmem:[#allocation2 + $0x38] sm:$0xff]
        %v1318 = vld [vmem:[#allocation2 + $0x40] sm:$0xff]
        %v1319 = vld [vmem:[#allocation2 + $0x48] sm:$0xff]
        %v1320 = vld [vmem:[#allocation2 + $0x50] sm:$0xff]
        %v1321 = vld [vmem:[#allocation2 + $0x58] sm:$0xff]
        %v1322 = vld [vmem:[#allocation2 + $0x60] sm:$0xff]
        %v1323 = vld [vmem:[#allocation2 + $0x68] sm:$0xff]
        %v1324 = vld [vmem:[#allocation2 + $0x70] sm:$0xff]
        %v1325 = vld [vmem:[#allocation2 + $0x78] sm:$0xff]
        %v1326 = vld [vmem:[#allocation2 + $0x80] sm:$0xff]
        %v1327 = vld [vmem:[#allocation2 + $0x88] sm:$0xff]
        %v1328 = vld [vmem:[#allocation2 + $0x90] sm:$0xff]
        %v1329 = vld [vmem:[#allocation2 + $0x98] sm:$0xff]
        %v1330 = vld [vmem:[#allocation2 + $0xa0] sm:$0xff]
        %v1331 = vld [vmem:[#allocation2 + $0xa8] sm:$0xff]
        %v1332 = vld [vmem:[#allocation2 + $0xb0] sm:$0xff]
        %v1333 = vld [vmem:[#allocation2 + $0xb8] sm:$0xff]
        %v1334 = vld [vmem:[#allocation2 + $0xc0] sm:$0xff]
        %v1335 = vld [vmem:[#allocation2 + $0xc8] sm:$0xff]
        %v1336 = vld [vmem:[#allocation2 + $0xd0] sm:$0xff]
        %v1337 = vld [vmem:[#allocation2 + $0xd8] sm:$0xff]
        %v1338 = vld [vmem:[#allocation2 + $0xe0] sm:$0xff]
        %v1339 = vld [vmem:[#allocation2 + $0xe8] sm:$0xff]
        %v1340 = vld [vmem:[#allocation2 + $0xf0] sm:$0xff]
        %v1341 = vld [vmem:[#allocation2 + $0xf8] sm:$0xff]
        %v1342 = vld [vmem:[%s2] sm:$0x1]
        %v1344 = vlaneseq
        %v1345 = vshrl.u32 %v1344, 7
        %v1346 = vsub.s32 0, %v1345
        %v1347 = vrot.slane %v1342, %v1346
        %v1349 = vadd.f32 %v1310, %v1347
        %v1350 = vadd.f32 %v1311, %v1347
        %v1351 = vadd.f32 %v1312, %v1347
        %v1352 = vadd.f32 %v1313, %v1347
        %v1353 = vadd.f32 %v1314, %v1347
        %v1354 = vadd.f32 %v1315, %v1347
        %v1355 = vadd.f32 %v1316, %v1347
        %v1356 = vadd.f32 %v1317, %v1347
        %v1357 = vadd.f32 %v1318, %v1347
        %v1358 = vadd.f32 %v1319, %v1347
        %v1359 = vadd.f32 %v1320, %v1347
        %v1360 = vadd.f32 %v1321, %v1347
        %v1361 = vadd.f32 %v1322, %v1347
        %v1362 = vadd.f32 %v1323, %v1347
        %v1363 = vadd.f32 %v1324, %v1347
        %v1364 = vadd.f32 %v1325, %v1347
        %v1365 = vadd.f32 %v1326, %v1347
        %v1366 = vadd.f32 %v1327, %v1347
        %v1367 = vadd.f32 %v1328, %v1347
        %v1368 = vadd.f32 %v1329, %v1347
        %v1369 = vadd.f32 %v1330, %v1347
        %v1370 = vadd.f32 %v1331, %v1347
        %v1371 = vadd.f32 %v1332, %v1347
        %v1372 = vadd.f32 %v1333, %v1347
        %v1373 = vadd.f32 %v1334, %v1347
        %v1374 = vadd.f32 %v1335, %v1347
        %v1375 = vadd.f32 %v1336, %v1347
        %v1376 = vadd.f32 %v1337, %v1347
        %v1377 = vadd.f32 %v1338, %v1347
        %v1378 = vadd.f32 %v1339, %v1347
        %v1379 = vadd.f32 %v1340, %v1347
        %v1380 = vadd.f32 %v1341, %v1347
        %v1381 = vsel %vm1274, %v1349, -inf
        %1382 = vmax.xlane.f32.xlu0 %v1381
        %v1383 = vpop.xlane.xlu0 %1382
        %v1384 = vsel %vm1274, %v1350, -inf
        %1385 = vmax.xlane.f32.xlu0 %v1384
        %v1386 = vpop.xlane.xlu0 %1385
        %v1387 = vsel %vm1274, %v1351, -inf
        %1388 = vmax.xlane.f32.xlu0 %v1387
        %v1389 = vpop.xlane.xlu0 %1388
        %v1390 = vsel %vm1274, %v1352, -inf
        %1391 = vmax.xlane.f32.xlu0 %v1390
        %v1392 = vpop.xlane.xlu0 %1391
        %v1393 = vsel %vm1274, %v1353, -inf
        %1394 = vmax.xlane.f32.xlu0 %v1393
        %v1395 = vpop.xlane.xlu0 %1394
        %v1396 = vsel %vm1274, %v1354, -inf
        %1397 = vmax.xlane.f32.xlu0 %v1396
        %v1398 = vpop.xlane.xlu0 %1397
        %v1399 = vsel %vm1274, %v1355, -inf
        %1400 = vmax.xlane.f32.xlu0 %v1399
        %v1401 = vpop.xlane.xlu0 %1400
        %v1402 = vsel %vm1274, %v1356, -inf
        %1403 = vmax.xlane.f32.xlu0 %v1402
        %v1404 = vpop.xlane.xlu0 %1403
        %v1405 = vsel %vm1274, %v1357, -inf
        %1406 = vmax.xlane.f32.xlu0 %v1405
        %v1407 = vpop.xlane.xlu0 %1406
        %v1408 = vsel %vm1274, %v1358, -inf
        %1409 = vmax.xlane.f32.xlu0 %v1408
        %v1410 = vpop.xlane.xlu0 %1409
        %v1411 = vsel %vm1274, %v1359, -inf
        %1412 = vmax.xlane.f32.xlu0 %v1411
        %v1413 = vpop.xlane.xlu0 %1412
        %v1414 = vsel %vm1274, %v1360, -inf
        %1415 = vmax.xlane.f32.xlu0 %v1414
        %v1416 = vpop.xlane.xlu0 %1415
        %v1417 = vsel %vm1274, %v1361, -inf
        %1418 = vmax.xlane.f32.xlu0 %v1417
        %v1419 = vpop.xlane.xlu0 %1418
        %v1420 = vsel %vm1274, %v1362, -inf
        %1421 = vmax.xlane.f32.xlu0 %v1420
        %v1422 = vpop.xlane.xlu0 %1421
        %v1423 = vsel %vm1274, %v1363, -inf
        %1424 = vmax.xlane.f32.xlu0 %v1423
        %v1425 = vpop.xlane.xlu0 %1424
        %v1426 = vsel %vm1274, %v1364, -inf
        %1427 = vmax.xlane.f32.xlu0 %v1426
        %v1428 = vpop.xlane.xlu0 %1427
        %v1429 = vsel %vm1274, %v1365, -inf
        %1430 = vmax.xlane.f32.xlu0 %v1429
        %v1431 = vpop.xlane.xlu0 %1430
        %v1432 = vsel %vm1274, %v1366, -inf
        %1433 = vmax.xlane.f32.xlu0 %v1432
        %v1434 = vpop.xlane.xlu0 %1433
        %v1435 = vsel %vm1274, %v1367, -inf
        %1436 = vmax.xlane.f32.xlu0 %v1435
        %v1437 = vpop.xlane.xlu0 %1436
        %v1438 = vsel %vm1274, %v1368, -inf
        %1439 = vmax.xlane.f32.xlu0 %v1438
        %v1440 = vpop.xlane.xlu0 %1439
        %v1441 = vsel %vm1274, %v1369, -inf
        %1442 = vmax.xlane.f32.xlu0 %v1441
        %v1443 = vpop.xlane.xlu0 %1442
        %v1444 = vsel %vm1274, %v1370, -inf
        %1445 = vmax.xlane.f32.xlu0 %v1444
        %v1446 = vpop.xlane.xlu0 %1445
        %v1447 = vsel %vm1274, %v1371, -inf
        %1448 = vmax.xlane.f32.xlu0 %v1447
        %v1449 = vpop.xlane.xlu0 %1448
        %v1450 = vsel %vm1274, %v1372, -inf
        %1451 = vmax.xlane.f32.xlu0 %v1450
        %v1452 = vpop.xlane.xlu0 %1451
        %v1453 = vsel %vm1274, %v1373, -inf
        %1454 = vmax.xlane.f32.xlu0 %v1453
        %v1455 = vpop.xlane.xlu0 %1454
        %v1456 = vsel %vm1274, %v1374, -inf
        %1457 = vmax.xlane.f32.xlu0 %v1456
        %v1458 = vpop.xlane.xlu0 %1457
        %v1459 = vsel %vm1274, %v1375, -inf
        %1460 = vmax.xlane.f32.xlu0 %v1459
        %v1461 = vpop.xlane.xlu0 %1460
        %v1462 = vsel %vm1274, %v1376, -inf
        %1463 = vmax.xlane.f32.xlu0 %v1462
        %v1464 = vpop.xlane.xlu0 %1463
        %v1465 = vsel %vm1274, %v1377, -inf
        %1466 = vmax.xlane.f32.xlu0 %v1465
        %v1467 = vpop.xlane.xlu0 %1466
        %v1468 = vsel %vm1274, %v1378, -inf
        %1469 = vmax.xlane.f32.xlu0 %v1468
        %v1470 = vpop.xlane.xlu0 %1469
        %v1471 = vsel %vm1274, %v1379, -inf
        %1472 = vmax.xlane.f32.xlu0 %v1471
        %v1473 = vpop.xlane.xlu0 %1472
        %v1474 = vsel %vm1274, %v1380, -inf
        %1475 = vmax.xlane.f32.xlu0 %v1474
        %v1476 = vpop.xlane.xlu0 %1475
        %v1477 = vsub.f32 %v1349, %v1383
        %v1478 = vsub.f32 %v1350, %v1386
        %v1479 = vsub.f32 %v1351, %v1389
        %v1480 = vsub.f32 %v1352, %v1392
        %v1481 = vsub.f32 %v1353, %v1395
        %v1482 = vsub.f32 %v1354, %v1398
        %v1483 = vsub.f32 %v1355, %v1401
        %v1484 = vsub.f32 %v1356, %v1404
        %v1485 = vsub.f32 %v1357, %v1407
        %v1486 = vsub.f32 %v1358, %v1410
        %v1487 = vsub.f32 %v1359, %v1413
        %v1488 = vsub.f32 %v1360, %v1416
        %v1489 = vsub.f32 %v1361, %v1419
        %v1490 = vsub.f32 %v1362, %v1422
        %v1491 = vsub.f32 %v1363, %v1425
        %v1492 = vsub.f32 %v1364, %v1428
        %v1493 = vsub.f32 %v1365, %v1431
        %v1494 = vsub.f32 %v1366, %v1434
        %v1495 = vsub.f32 %v1367, %v1437
        %v1496 = vsub.f32 %v1368, %v1440
        %v1497 = vsub.f32 %v1369, %v1443
        %v1498 = vsub.f32 %v1370, %v1446
        %v1499 = vsub.f32 %v1371, %v1449
        %v1500 = vsub.f32 %v1372, %v1452
        %v1501 = vsub.f32 %v1373, %v1455
        %v1502 = vsub.f32 %v1374, %v1458
        %v1503 = vsub.f32 %v1375, %v1461
        %v1504 = vsub.f32 %v1376, %v1464
        %v1505 = vsub.f32 %v1377, %v1467
        %v1506 = vsub.f32 %v1378, %v1470
        %v1507 = vsub.f32 %v1379, %v1473
        %v1508 = vsub.f32 %v1380, %v1476
        %v1509 = vmul.f32 %v1477, 1.442695
        %v1510 = vpow.pop %v1509
        %v1511 = vmul.f32 %v1478, 1.442695
        %v1512 = vpow.pop %v1511
        %v1513 = vmul.f32 %v1479, 1.442695
        %v1514 = vpow.pop %v1513
        %v1515 = vmul.f32 %v1480, 1.442695
        %v1516 = vpow.pop %v1515
        %v1517 = vmul.f32 %v1481, 1.442695
        %v1518 = vpow.pop %v1517
        %v1519 = vmul.f32 %v1482, 1.442695
        %v1520 = vpow.pop %v1519
        %v1521 = vmul.f32 %v1483, 1.442695
        %v1522 = vpow.pop %v1521
        %v1523 = vmul.f32 %v1484, 1.442695
        %v1524 = vpow.pop %v1523
        %v1525 = vmul.f32 %v1485, 1.442695
        %v1526 = vpow.pop %v1525
        %v1527 = vmul.f32 %v1486, 1.442695
        %v1528 = vpow.pop %v1527
        %v1529 = vmul.f32 %v1487, 1.442695
        %v1530 = vpow.pop %v1529
        %v1531 = vmul.f32 %v1488, 1.442695
        %v1532 = vpow.pop %v1531
        %v1533 = vmul.f32 %v1489, 1.442695
        %v1534 = vpow.pop %v1533
        %v1535 = vmul.f32 %v1490, 1.442695
        %v1536 = vpow.pop %v1535
        %v1537 = vmul.f32 %v1491, 1.442695
        %v1538 = vpow.pop %v1537
        %v1539 = vmul.f32 %v1492, 1.442695
        %v1540 = vpow.pop %v1539
        %v1541 = vmul.f32 %v1493, 1.442695
        %v1542 = vpow.pop %v1541
        %v1543 = vmul.f32 %v1494, 1.442695
        %v1544 = vpow.pop %v1543
        %v1545 = vmul.f32 %v1495, 1.442695
        %v1546 = vpow.pop %v1545
        %v1547 = vmul.f32 %v1496, 1.442695
        %v1548 = vpow.pop %v1547
        %v1549 = vmul.f32 %v1497, 1.442695
        %v1550 = vpow.pop %v1549
        %v1551 = vmul.f32 %v1498, 1.442695
        %v1552 = vpow.pop %v1551
        %v1553 = vmul.f32 %v1499, 1.442695
        %v1554 = vpow.pop %v1553
        %v1555 = vmul.f32 %v1500, 1.442695
        %v1556 = vpow.pop %v1555
        %v1557 = vmul.f32 %v1501, 1.442695
        %v1558 = vpow.pop %v1557
        %v1559 = vmul.f32 %v1502, 1.442695
        %v1560 = vpow.pop %v1559
        %v1561 = vmul.f32 %v1503, 1.442695
        %v1562 = vpow.pop %v1561
        %v1563 = vmul.f32 %v1504, 1.442695
        %v1564 = vpow.pop %v1563
        %v1565 = vmul.f32 %v1505, 1.442695
        %v1566 = vpow.pop %v1565
        %v1567 = vmul.f32 %v1506, 1.442695
        %v1568 = vpow.pop %v1567
        %v1569 = vmul.f32 %v1507, 1.442695
        %v1570 = vpow.pop %v1569
        %v1571 = vmul.f32 %v1508, 1.442695
        %v1572 = vpow.pop %v1571
        %v1573 = vsel %vm1274, %v1510, 0.0
        %1574 = vadd.xlane.f32.xlu0 %v1573
        %v1575 = vpop.xlane.xlu0 %1574
        %v1576 = vsel %vm1274, %v1512, 0.0
        %1577 = vadd.xlane.f32.xlu0 %v1576
        %v1578 = vpop.xlane.xlu0 %1577
        %v1579 = vsel %vm1274, %v1514, 0.0
        %1580 = vadd.xlane.f32.xlu0 %v1579
        %v1581 = vpop.xlane.xlu0 %1580
        %v1582 = vsel %vm1274, %v1516, 0.0
        %1583 = vadd.xlane.f32.xlu0 %v1582
        %v1584 = vpop.xlane.xlu0 %1583
        %v1585 = vsel %vm1274, %v1518, 0.0
        %1586 = vadd.xlane.f32.xlu0 %v1585
        %v1587 = vpop.xlane.xlu0 %1586
        %v1588 = vsel %vm1274, %v1520, 0.0
        %1589 = vadd.xlane.f32.xlu0 %v1588
        %v1590 = vpop.xlane.xlu0 %1589
        %v1591 = vsel %vm1274, %v1522, 0.0
        %1592 = vadd.xlane.f32.xlu0 %v1591
        %v1593 = vpop.xlane.xlu0 %1592
        %v1594 = vsel %vm1274, %v1524, 0.0
        %1595 = vadd.xlane.f32.xlu0 %v1594
        %v1596 = vpop.xlane.xlu0 %1595
        %v1597 = vsel %vm1274, %v1526, 0.0
        %1598 = vadd.xlane.f32.xlu0 %v1597
        %v1599 = vpop.xlane.xlu0 %1598
        %v1600 = vsel %vm1274, %v1528, 0.0
        %1601 = vadd.xlane.f32.xlu0 %v1600
        %v1602 = vpop.xlane.xlu0 %1601
        %v1603 = vsel %vm1274, %v1530, 0.0
        %1604 = vadd.xlane.f32.xlu0 %v1603
        %v1605 = vpop.xlane.xlu0 %1604
        %v1606 = vsel %vm1274, %v1532, 0.0
        %1607 = vadd.xlane.f32.xlu0 %v1606
        %v1608 = vpop.xlane.xlu0 %1607
        %v1609 = vsel %vm1274, %v1534, 0.0
        %1610 = vadd.xlane.f32.xlu0 %v1609
        %v1611 = vpop.xlane.xlu0 %1610
        %v1612 = vsel %vm1274, %v1536, 0.0
        %1613 = vadd.xlane.f32.xlu0 %v1612
        %v1614 = vpop.xlane.xlu0 %1613
        %v1615 = vsel %vm1274, %v1538, 0.0
        %1616 = vadd.xlane.f32.xlu0 %v1615
        %v1617 = vpop.xlane.xlu0 %1616
        %v1618 = vsel %vm1274, %v1540, 0.0
        %1619 = vadd.xlane.f32.xlu0 %v1618
        %v1620 = vpop.xlane.xlu0 %1619
        %v1621 = vsel %vm1274, %v1542, 0.0
        %1622 = vadd.xlane.f32.xlu0 %v1621
        %v1623 = vpop.xlane.xlu0 %1622
        %v1624 = vsel %vm1274, %v1544, 0.0
        %1625 = vadd.xlane.f32.xlu0 %v1624
        %v1626 = vpop.xlane.xlu0 %1625
        %v1627 = vsel %vm1274, %v1546, 0.0
        %1628 = vadd.xlane.f32.xlu0 %v1627
        %v1629 = vpop.xlane.xlu0 %1628
        %v1630 = vsel %vm1274, %v1548, 0.0
        %1631 = vadd.xlane.f32.xlu0 %v1630
        %v1632 = vpop.xlane.xlu0 %1631
        %v1633 = vsel %vm1274, %v1550, 0.0
        %1634 = vadd.xlane.f32.xlu0 %v1633
        %v1635 = vpop.xlane.xlu0 %1634
        %v1636 = vsel %vm1274, %v1552, 0.0
        %1637 = vadd.xlane.f32.xlu0 %v1636
        %v1638 = vpop.xlane.xlu0 %1637
        %v1639 = vsel %vm1274, %v1554, 0.0
        %1640 = vadd.xlane.f32.xlu0 %v1639
        %v1641 = vpop.xlane.xlu0 %1640
        %v1642 = vsel %vm1274, %v1556, 0.0
        %1643 = vadd.xlane.f32.xlu0 %v1642
        %v1644 = vpop.xlane.xlu0 %1643
        %v1645 = vsel %vm1274, %v1558, 0.0
        %1646 = vadd.xlane.f32.xlu0 %v1645
        %v1647 = vpop.xlane.xlu0 %1646
        %v1648 = vsel %vm1274, %v1560, 0.0
        %1649 = vadd.xlane.f32.xlu0 %v1648
        %v1650 = vpop.xlane.xlu0 %1649
        %v1651 = vsel %vm1274, %v1562, 0.0
        %1652 = vadd.xlane.f32.xlu0 %v1651
        %v1653 = vpop.xlane.xlu0 %1652
        %v1654 = vsel %vm1274, %v1564, 0.0
        %1655 = vadd.xlane.f32.xlu0 %v1654
        %v1656 = vpop.xlane.xlu0 %1655
        %v1657 = vsel %vm1274, %v1566, 0.0
        %1658 = vadd.xlane.f32.xlu0 %v1657
        %v1659 = vpop.xlane.xlu0 %1658
        %v1660 = vsel %vm1274, %v1568, 0.0
        %1661 = vadd.xlane.f32.xlu0 %v1660
        %v1662 = vpop.xlane.xlu0 %1661
        %v1663 = vsel %vm1274, %v1570, 0.0
        %1664 = vadd.xlane.f32.xlu0 %v1663
        %v1665 = vpop.xlane.xlu0 %1664
        %v1666 = vsel %vm1274, %v1572, 0.0
        %1667 = vadd.xlane.f32.xlu0 %v1666
        %v1668 = vpop.xlane.xlu0 %1667
        %v1669 = vlog2.pop %v1575
        %v1670 = vmul.f32 %v1669, 0.6931472
        %v1671 = vlog2.pop %v1578
        %v1672 = vmul.f32 %v1671, 0.6931472
        %v1673 = vlog2.pop %v1581
        %v1674 = vmul.f32 %v1673, 0.6931472
        %v1675 = vlog2.pop %v1584
        %v1676 = vmul.f32 %v1675, 0.6931472
        %v1677 = vlog2.pop %v1587
        %v1678 = vmul.f32 %v1677, 0.6931472
        %v1679 = vlog2.pop %v1590
        %v1680 = vmul.f32 %v1679, 0.6931472
        %v1681 = vlog2.pop %v1593
        %v1682 = vmul.f32 %v1681, 0.6931472
        %v1683 = vlog2.pop %v1596
        %v1684 = vmul.f32 %v1683, 0.6931472
        %v1685 = vlog2.pop %v1599
        %v1686 = vmul.f32 %v1685, 0.6931472
        %v1687 = vlog2.pop %v1602
        %v1688 = vmul.f32 %v1687, 0.6931472
        %v1689 = vlog2.pop %v1605
        %v1690 = vmul.f32 %v1689, 0.6931472
        %v1691 = vlog2.pop %v1608
        %v1692 = vmul.f32 %v1691, 0.6931472
        %v1693 = vlog2.pop %v1611
        %v1694 = vmul.f32 %v1693, 0.6931472
        %v1695 = vlog2.pop %v1614
        %v1696 = vmul.f32 %v1695, 0.6931472
        %v1697 = vlog2.pop %v1617
        %v1698 = vmul.f32 %v1697, 0.6931472
        %v1699 = vlog2.pop %v1620
        %v1700 = vmul.f32 %v1699, 0.6931472
        %v1701 = vlog2.pop %v1623
        %v1702 = vmul.f32 %v1701, 0.6931472
        %v1703 = vlog2.pop %v1626
        %v1704 = vmul.f32 %v1703, 0.6931472
        %v1705 = vlog2.pop %v1629
        %v1706 = vmul.f32 %v1705, 0.6931472
        %v1707 = vlog2.pop %v1632
        %v1708 = vmul.f32 %v1707, 0.6931472
        %v1709 = vlog2.pop %v1635
        %v1710 = vmul.f32 %v1709, 0.6931472
        %v1711 = vlog2.pop %v1638
        %v1712 = vmul.f32 %v1711, 0.6931472
        %v1713 = vlog2.pop %v1641
        %v1714 = vmul.f32 %v1713, 0.6931472
        %v1715 = vlog2.pop %v1644
        %v1716 = vmul.f32 %v1715, 0.6931472
        %v1717 = vlog2.pop %v1647
        %v1718 = vmul.f32 %v1717, 0.6931472
        %v1719 = vlog2.pop %v1650
        %v1720 = vmul.f32 %v1719, 0.6931472
        %v1721 = vlog2.pop %v1653
        %v1722 = vmul.f32 %v1721, 0.6931472
        %v1723 = vlog2.pop %v1656
        %v1724 = vmul.f32 %v1723, 0.6931472
        %v1725 = vlog2.pop %v1659
        %v1726 = vmul.f32 %v1725, 0.6931472
        %v1727 = vlog2.pop %v1662
        %v1728 = vmul.f32 %v1727, 0.6931472
        %v1729 = vlog2.pop %v1665
        %v1730 = vmul.f32 %v1729, 0.6931472
        %v1731 = vlog2.pop %v1668
        %v1732 = vmul.f32 %v1731, 0.6931472
        %v1733 = vsub.f32 %v1477, %v1670
        %v1734 = vsub.f32 %v1478, %v1672
        %v1735 = vsub.f32 %v1479, %v1674
        %v1736 = vsub.f32 %v1480, %v1676
        %v1737 = vsub.f32 %v1481, %v1678
        %v1738 = vsub.f32 %v1482, %v1680
        %v1739 = vsub.f32 %v1483, %v1682
        %v1740 = vsub.f32 %v1484, %v1684
        %v1741 = vsub.f32 %v1485, %v1686
        %v1742 = vsub.f32 %v1486, %v1688
        %v1743 = vsub.f32 %v1487, %v1690
        %v1744 = vsub.f32 %v1488, %v1692
        %v1745 = vsub.f32 %v1489, %v1694
        %v1746 = vsub.f32 %v1490, %v1696
        %v1747 = vsub.f32 %v1491, %v1698
        %v1748 = vsub.f32 %v1492, %v1700
        %v1749 = vsub.f32 %v1493, %v1702
        %v1750 = vsub.f32 %v1494, %v1704
        %v1751 = vsub.f32 %v1495, %v1706
        %v1752 = vsub.f32 %v1496, %v1708
        %v1753 = vsub.f32 %v1497, %v1710
        %v1754 = vsub.f32 %v1498, %v1712
        %v1755 = vsub.f32 %v1499, %v1714
        %v1756 = vsub.f32 %v1500, %v1716
        %v1757 = vsub.f32 %v1501, %v1718
        %v1758 = vsub.f32 %v1502, %v1720
        %v1759 = vsub.f32 %v1503, %v1722
        %v1760 = vsub.f32 %v1504, %v1724
        %v1761 = vsub.f32 %v1505, %v1726
        %v1762 = vsub.f32 %v1506, %v1728
        %v1763 = vsub.f32 %v1507, %v1730
        %v1764 = vsub.f32 %v1508, %v1732
        %1765 = vst.msk [vmem:[%s203] sm:$0xff] %vm1274, %v1733
        %1766 = vst.msk [vmem:[%s203 + $0x8] sm:$0xff] %vm1274, %v1734
        %1767 = vst.msk [vmem:[%s203 + $0x10] sm:$0xff] %vm1274, %v1735
        %1768 = vst.msk [vmem:[%s203 + $0x18] sm:$0xff] %vm1274, %v1736
        %1769 = vst.msk [vmem:[%s203 + $0x20] sm:$0xff] %vm1274, %v1737
        %1770 = vst.msk [vmem:[%s203 + $0x28] sm:$0xff] %vm1274, %v1738
        %1771 = vst.msk [vmem:[%s203 + $0x30] sm:$0xff] %vm1274, %v1739
        %1772 = vst.msk [vmem:[%s203 + $0x38] sm:$0xff] %vm1274, %v1740
        %1773 = vst.msk [vmem:[%s203 + $0x40] sm:$0xff] %vm1274, %v1741
        %1774 = vst.msk [vmem:[%s203 + $0x48] sm:$0xff] %vm1274, %v1742
        %1775 = vst.msk [vmem:[%s203 + $0x50] sm:$0xff] %vm1274, %v1743
        %1776 = vst.msk [vmem:[%s203 + $0x58] sm:$0xff] %vm1274, %v1744
        %1777 = vst.msk [vmem:[%s203 + $0x60] sm:$0xff] %vm1274, %v1745
        %1778 = vst.msk [vmem:[%s203 + $0x68] sm:$0xff] %vm1274, %v1746
        %1779 = vst.msk [vmem:[%s203 + $0x70] sm:$0xff] %vm1274, %v1747
        %1780 = vst.msk [vmem:[%s203 + $0x78] sm:$0xff] %vm1274, %v1748
        %1781 = vst.msk [vmem:[%s203 + $0x80] sm:$0xff] %vm1274, %v1749
        %1782 = vst.msk [vmem:[%s203 + $0x88] sm:$0xff] %vm1274, %v1750
        %1783 = vst.msk [vmem:[%s203 + $0x90] sm:$0xff] %vm1274, %v1751
        %1784 = vst.msk [vmem:[%s203 + $0x98] sm:$0xff] %vm1274, %v1752
        %1785 = vst.msk [vmem:[%s203 + $0xa0] sm:$0xff] %vm1274, %v1753
        %1786 = vst.msk [vmem:[%s203 + $0xa8] sm:$0xff] %vm1274, %v1754
        %1787 = vst.msk [vmem:[%s203 + $0xb0] sm:$0xff] %vm1274, %v1755
        %1788 = vst.msk [vmem:[%s203 + $0xb8] sm:$0xff] %vm1274, %v1756
        %1789 = vst.msk [vmem:[%s203 + $0xc0] sm:$0xff] %vm1274, %v1757
        %1790 = vst.msk [vmem:[%s203 + $0xc8] sm:$0xff] %vm1274, %v1758
        %1791 = vst.msk [vmem:[%s203 + $0xd0] sm:$0xff] %vm1274, %v1759
        %1792 = vst.msk [vmem:[%s203 + $0xd8] sm:$0xff] %vm1274, %v1760
        %1793 = vst.msk [vmem:[%s203 + $0xe0] sm:$0xff] %vm1274, %v1761
        %1794 = vst.msk [vmem:[%s203 + $0xe8] sm:$0xff] %vm1274, %v1762
        %1795 = vst.msk [vmem:[%s203 + $0xf0] sm:$0xff] %vm1274, %v1763
        %1796 = vst.msk [vmem:[%s203 + $0xf8] sm:$0xff] %vm1274, %v1764
      $region40: #{_lambda_.3} parent=31 // pred_fallthru
        _
      %s1797 = smul.u32 32, %s18
      %p1798 = scmp.lt.s32.totalorder %s1797, 63
      %s1799 = scalar_select %p1798, %s1797, 63
      %s1800 = smul.addr %s1799, 8
      %s1801 = scalar_lea.vmem %s3, %s1800
      // Predicated region
      $region41: #{_lambda_.3} parent=31 // pred_check
        %p1802 = pneg %p114
      $region42: #{_lambda_.3} parent=31 // pred_check_branch
        %1804 = sbr.rel (%p1802) target = $region44
      $region43: #{_lambda_.3} parent=31 // pred_region
        %s1805 = smul.u32 32, %s18
      $region44: #{_lambda_.3} parent=31 // pred_fallthru
        _
    $region32: #{_lambda_.3} parent=5 // pred_fallthru
      _
    %p1806 = scmp.le.s32.totalorder 2, %s9
    // Predicated region
    $region45: #{_lambda_.3} parent=5 // pred_check
      %p1807 = pneg %p1806
    $region46: #{_lambda_.3} parent=5 // pred_check_branch
      %1809 = sbr.rel (%p1807) target = $region48
    $region47: #{_lambda_.3} parent=5 // pred_region
      %s1810 = ssub.s32 %s9, 2
      // Predicated region
      $region49: #{_lambda_.3} parent=47 // pred_check
        %p1811 = pneg %p120
      $region50: #{_lambda_.3} parent=47 // pred_check_branch
        %1813 = sbr.rel (%p1811) target = $region52
      $region51: #{_lambda_.3} parent=47 // pred_region
        %s1814 = smul.u32 32, %s20
        %p1815 = scmp.lt.s32.totalorder %s1814, 63
        %s1816 = scalar_select %p1815, %s1814, 63
        %s1817 = smul.addr %s1816, 8
        %s1818 = scalar_lea.vmem %s3, %s1817
      $region52: #{_lambda_.3} parent=47 // pred_fallthru
        _
    $region48: #{_lambda_.3} parent=5 // pred_fallthru
      _
  $region6: #{_lambda_.3} parent=0 // loop_footer
    %s13 = sadd.s32 1, %s9
  $region7: #{_lambda_.3} parent=0 // loop_footer_branch
    %8 = sbr.rel target = $region3
  $region8: #{_lambda_.3} parent=0 // loop_exit
    _

</llo_original>
